<compile_context>
chip_gen: v7x
topology: tpu7x:2x2x1
jax: 0.10.0
libtpu: 0.0.40
codegen_flags: <defaults>
</compile_context>

<pallas_src>
import functools

import numpy as np
import jax
import jax.numpy as jnp
from jax.experimental import pallas as pl
from jax.experimental.pallas import tpu as pltpu

SCALE = 4          # nn.Upsample(scale_factor=4, mode='bilinear', align_corners=False)
NEG_BIG = -1e30    # bias for padded class rows so the channel-max ignores them


# ----------------------------------------------------------------------------------------
# Host-side (NumPy) bilinear interpolation tables -- computed once per shape, never traced.
# Matches PyTorch align_corners=False (including the negative-source clamp).
# ----------------------------------------------------------------------------------------
def _bilinear_1d(n_in, scale):
    n_out = n_in * scale
    i = np.arange(n_out, dtype=np.float64)
    src = np.maximum((i + 0.5) / scale - 0.5, 0.0)
    lo = np.minimum(np.floor(src).astype(np.int64), n_in - 1)
    w1 = src - lo
    return lo.astype(np.int32), w1


def _bilinear_wmatrix_T(n_in, scale):
    """[n_in, n_out] matrix so that (channels x n_in) @ M == W-upsampled (channels x n_out)."""
    lo, w1 = _bilinear_1d(n_in, scale)
    hi = np.minimum(lo + 1, n_in - 1)
    n_out = n_in * scale
    a = np.zeros((n_out, n_in), np.float64)
    a[np.arange(n_out), lo] += (1.0 - w1)
    a[np.arange(n_out), hi] += w1
    return a.T.astype(np.float32)


# ----------------------------------------------------------------------------------------
# Kernel A (grid = (B, Hf//RH)): LayerNorm + density head + conv1, all at feature resolution.
# Everything channel-first: the block is (C, TN) with TN = RH*Wf lane positions.
# ----------------------------------------------------------------------------------------
def _feat_kernel(feat_ref, g_ref, beta_ref, w1_ref, b1_ref,
                 wr1_ref, br1_ref, wr2_ref, br2_ref,
                 den_ref, y1_ref, *, rh, wf):
    x = feat_ref[...].astype(jnp.float32)                      # (C, TN)

    # vmamba.classifier.norm: LayerNorm over channels, two-pass statistics (eps=1e-5).
    mu = jnp.mean(x, axis=0, keepdims=True)                    # (1, TN)
    xc = x - mu
    var = jnp.mean(xc * xc, axis=0, keepdims=True)
    xn = xc * jax.lax.rsqrt(var + 1e-5)
    xn = xn * g_ref[...] + beta_ref[...]                       # g/beta are (C, 1)
    xnb = xn.astype(jnp.bfloat16)

    # reg_head (CountingHead stub): 1x1 conv -> ReLU -> 1x1 conv -> ReLU, both layers on the MXU
    # (wr2 is zero-padded to 8 rows so the second layer is a matmul instead of a VPU reduce).
    # TODO(synk): CountingHead is defined outside this module; this is a 1x1-conv MLP stub.
    h = jnp.dot(wr1_ref[...], xnb, preferred_element_type=jnp.float32) + br1_ref[...]
    h = jnp.maximum(h, 0.0).astype(jnp.bfloat16)               # (CR, TN)
    d = jnp.dot(wr2_ref[...], h, preferred_element_type=jnp.float32)   # (8, TN); rows 1..7 zero
    den_ref[...] = jnp.maximum(d[0:1] + br2_ref[...], 0.0)     # (1, TN) -- lane-dense output

    # cls_head conv1 hoisted before the bilinear upsample (mathematically exact: the 1x1 conv
    # commutes with per-channel linear interpolation whose weights sum to 1, so the bias is
    # preserved).  Runs at feature resolution -> 16x fewer MXU FLOPs than after the upsample.
    y1 = jnp.dot(w1_ref[...], xnb, preferred_element_type=jnp.float32) + b1_ref[...]
    y1 = y1.astype(jnp.bfloat16)                               # (C1, TN)
    # Split into per-feature-row slabs (RH static slices) so kernel B can index rows directly.
    for i in range(rh):
        y1_ref[i] = y1[:, i * wf:(i + 1) * wf]


# ----------------------------------------------------------------------------------------
# Kernel B (grid = (B, Hu//TH), both parallel): separable x4 bilinear upsample of conv1 output
# (static 2-tap H blend at feature width, W direction as one matmul per group of 4 output rows),
# ReLU, conv2, channel-max subtraction.  Output is channel-first and lane-dense: (K, TH*Wu).
# ----------------------------------------------------------------------------------------
def _cls_kernel(y1_ref, awt_ref, w2_ref, b2_ref, cls_ref, *, rs, hf, c1, k):
    t = pl.program_id(1)
    r0 = t * rs                                                # first source row of this tile
    a = y1_ref[jnp.maximum(r0 - 1, 0)].astype(jnp.float32)     # (C1, Wf)
    b = y1_ref[r0].astype(jnp.float32)
    parts = []
    for g in range(rs):                                        # static (unrolled) groups of 4 rows
        r = r0 + g
        c = y1_ref[jnp.minimum(r + 1, hf - 1)].astype(jnp.float32)
        # x4 bilinear, align_corners=False: output rows 4r..4r+3 use fixed 2-tap k/8 weights.
        rows = [0.375 * a + 0.625 * b,
                0.125 * a + 0.875 * b,
                0.875 * b + 0.125 * c,
                0.625 * b + 0.375 * c]
        stack = jnp.concatenate(rows, axis=0).astype(jnp.bfloat16)          # (4*C1, Wf)
        up = jnp.dot(stack, awt_ref[...], preferred_element_type=jnp.float32)   # (4*C1, Wu)
        up = jnp.maximum(up, 0.0).astype(jnp.bfloat16)         # ReLU after upsample(conv1(x))
        up_cat = jnp.concatenate([up[j * c1:(j + 1) * c1] for j in range(4)],
                                 axis=1)                       # (C1, 4*Wu) lane-dense
        logits = jnp.dot(w2_ref[...], up_cat,
                         preferred_element_type=jnp.float32) + b2_ref[...]  # (KP, 4*Wu)
        m = jnp.max(logits, axis=0, keepdims=True)             # padded rows carry -1e30 bias
        parts.append(logits[:k] - m)                           # (K, 4*Wu)
        a, b = b, c                                            # carry: RS+2 row loads per tile
    cls_ref[...] = jnp.concatenate(parts, axis=1)              # (K, TH*Wu), single lane-dense store


# ----------------------------------------------------------------------------------------
# Tile pickers
# ----------------------------------------------------------------------------------------
def _pick_rows_a(hf, wf, cap=1024):
    """Feature rows per kernel-A step: TN = rh*wf should be a 256 (else 128) multiple, <= cap."""
    for align in (256, 128):
        best = None
        for rh in range(1, hf + 1):
            if hf % rh == 0 and (rh * wf) % align == 0 and rh * wf <= cap:
                best = rh
        if best is not None:
            return best
    return hf          # fall back to the full array (full-extent block is always legal)


def _pick_tile_h(hu, wu):
    """Output rows per kernel-B tile: multiple of 4, divides Hu, keeps TH*Wu a 128 multiple."""
    for cand in (32, 24, 16, 8, 4):
        if cand < hu and hu % cand == 0 and (cand * wu) % 128 == 0:
            return cand
    return hu


# ----------------------------------------------------------------------------------------
# Wrapper
# ----------------------------------------------------------------------------------------
def mamba4cc_heads(feat_nhwc, params, num_classes):
    assert SCALE == 4
    B, Hf, Wf, C = feat_nhwc.shape
    Hu, Wu = Hf * SCALE, Wf * SCALE
    N = Hf * Wf
    C1 = params["w1"].shape[0]          # 512
    CR = params["wr1"].shape[0]         # density-head hidden width
    K = num_classes
    KP = max(8, ((K + 7) // 8) * 8)     # pad classes for a sublane-aligned conv2 matmul

    # Constant W-direction interpolation matrix (weights are k/8: exact in bf16).
    awT = jnp.asarray(_bilinear_wmatrix_T(Wf, SCALE), jnp.bfloat16)   # (Wf, Wu)

    # Parameter packing (PyTorch [out,in] conv layout is already channel-first friendly).
    ln_g = params["ln_g"].reshape(C, 1).astype(jnp.float32)
    ln_b = params["ln_b"].reshape(C, 1).astype(jnp.float32)
    w1b = params["w1"].astype(jnp.bfloat16)                       # (C1, C)
    b1c = params["b1"].reshape(C1, 1).astype(jnp.float32)
    wr1b = params["wr1"].astype(jnp.bfloat16)                     # (CR, C)
    br1c = params["br1"].reshape(CR, 1).astype(jnp.float32)
    wr2p = jnp.zeros((8, CR), jnp.float32).at[0].set(
        params["wr2"].reshape(CR)).astype(jnp.bfloat16)           # (8, CR), rows 1..7 zero
    br2c = params["br2"].reshape(1, 1).astype(jnp.float32)
    w2p = jnp.zeros((KP, C1), jnp.float32).at[:K].set(params["w2"]).astype(jnp.bfloat16)
    b2p = jnp.full((KP, 1), NEG_BIG, jnp.float32).at[:K, 0].set(params["b2"])

    # bf16 channel-first features (halves the dominant HBM traffic of call A).
    feat_cf = feat_nhwc.astype(jnp.bfloat16).reshape(B, N, C).transpose(0, 2, 1)   # (B, C, N)

    RH = _pick_rows_a(Hf, Wf)
    TN = RH * Wf
    n_h = Hf // RH

    # ---------------- call A: feature-resolution work, tiled over (batch, row-blocks) ----------------
    den, y1 = pl.pallas_call(
        functools.partial(_feat_kernel, rh=RH, wf=Wf),
        grid=(B, n_h),
        in_specs=[
            pl.BlockSpec((None, C, TN), lambda b, h: (b, 0, h)),
            pl.BlockSpec((C, 1), lambda b, h: (0, 0)),
            pl.BlockSpec((C, 1), lambda b, h: (0, 0)),
            pl.BlockSpec((C1, C), lambda b, h: (0, 0)),
            pl.BlockSpec((C1, 1), lambda b, h: (0, 0)),
            pl.BlockSpec((CR, C), lambda b, h: (0, 0)),
            pl.BlockSpec((CR, 1), lambda b, h: (0, 0)),
            pl.BlockSpec((8, CR), lambda b, h: (0, 0)),
            pl.BlockSpec((1, 1), lambda b, h: (0, 0)),
        ],
        out_specs=(
            pl.BlockSpec((None, 1, TN), lambda b, h: (b, 0, h)),
            pl.BlockSpec((None, RH, C1, Wf), lambda b, h: (b, h, 0, 0)),
        ),
        out_shape=(
            jax.ShapeDtypeStruct((B, 1, N), jnp.float32),            # density (lane-dense)
            jax.ShapeDtypeStruct((B, Hf, C1, Wf), jnp.bfloat16),     # conv1 output at feature res
        ),
        compiler_params=pltpu.CompilerParams(
            dimension_semantics=("parallel", "parallel"),
            vmem_limit_bytes=40 * 1024 * 1024),
    )(feat_cf, ln_g, ln_b, w1b, b1c, wr1b, br1c, wr2p, br2c)

    TH = _pick_tile_h(Hu, Wu)
    RS = TH // 4
    n_t = Hu // TH

    # ---------------- call B: upsample + conv2 + channel-max, tiled over (batch, H-tiles) ----------------
    # TODO(synk): at very large Hf the per-batch y1 block could additionally be sliced per H-tile
    # (scalar-prefetched row offsets in the index_map); not needed at the target production shapes.
    cls_flat = pl.pallas_call(
        functools.partial(_cls_kernel, rs=RS, hf=Hf, c1=C1, k=K),
        grid=(B, n_t),
        in_specs=[
            pl.BlockSpec((None, Hf, C1, Wf), lambda b, t: (b, 0, 0, 0)),
            pl.BlockSpec((Wf, Wu), lambda b, t: (0, 0)),
            pl.BlockSpec((KP, C1), lambda b, t: (0, 0)),
            pl.BlockSpec((KP, 1), lambda b, t: (0, 0)),
        ],
        out_specs=pl.BlockSpec((None, K, TH * Wu), lambda b, t: (b, 0, t)),
        out_shape=jax.ShapeDtypeStruct((B, K, Hu * Wu), jnp.float32),
        compiler_params=pltpu.CompilerParams(
            dimension_semantics=("parallel", "parallel"),   # batch + spatial tiles (v7x 2 TCs)
            vmem_limit_bytes=40 * 1024 * 1024),
    )(y1, awT, w2p, b2p)

    # Outputs are already channel-first; only metadata reshapes remain.
    pred_den = den.reshape(B, 1, Hf, Wf)                    # NCHW
    cls_score = cls_flat.reshape(B, K, Hu, Wu)              # NCHW
    return pred_den, cls_score


# ----------------------------------------------------------------------------------------
# Pure-JAX reference (module order: upsample -> conv1 -> relu -> conv2; max-subtract), f32.
# ----------------------------------------------------------------------------------------
def _bilinear_upsample_ref(x, scale):
    B, C, H, W = x.shape
    hlo, hw = _bilinear_1d(H, scale)
    hhi = np.minimum(hlo + 1, H - 1)
    wlo, ww = _bilinear_1d(W, scale)
    whi = np.minimum(wlo + 1, W - 1)
    hw = jnp.asarray(hw, jnp.float32)[None, None, :, None]
    ww = jnp.asarray(ww, jnp.float32)[None, None, None, :]
    xh = x[:, :, hlo, :] * (1.0 - hw) + x[:, :, hhi, :] * hw
    return xh[:, :, :, wlo] * (1.0 - ww) + xh[:, :, :, whi] * ww


def _reference(feat_nhwc, params):
    x = feat_nhwc.astype(jnp.float32)
    mu = x.mean(-1, keepdims=True)
    var = ((x - mu) ** 2).mean(-1, keepdims=True)
    xn = (x - mu) / jnp.sqrt(var + 1e-5) * params["ln_g"] + params["ln_b"]
    xcf = xn.transpose(0, 3, 1, 2)                                    # (B, C, Hf, Wf)

    def conv1x1(w, b, v):
        return jnp.einsum('oc,bchw->bohw', w, v) + b[None, :, None, None]

    h = jnp.maximum(conv1x1(params["wr1"], params["br1"], xcf), 0.0)
    pred_den = jnp.maximum(conv1x1(params["wr2"], params["br2"], h), 0.0)

    up = _bilinear_upsample_ref(xcf, SCALE)
    y = jnp.maximum(conv1x1(params["w1"], params["b1"], up), 0.0)
    y = conv1x1(params["w2"], params["b2"], y)
    y = y - y.max(axis=1, keepdims=True)
    return pred_den, y


if __name__ == "__main__":
    key = jax.random.PRNGKey(0)
    B, Cin, H, W = 2, 3, 32, 128         # input image, NCHW (small synthetic shapes)
    C = 64                               # stand-in for vmamba.num_features (=1024 in the real model)
    num_classes = 4
    patch = 4
    Hf, Wf = H // patch, W // patch

    keys = jax.random.split(key, 12)
    x = jax.random.normal(keys[0], (B, Cin, H, W), jnp.float32)

    # TODO(synk): the VSSM (VMamba) backbone + torch checkpoint load is an external dependency
    # with no self-contained Pallas equivalent; replaced by a deterministic linear patch-embed
    # (plain-JAX glue) producing channels-last features.
    w_patch = jax.random.normal(keys[1], (Cin * patch * patch, C), jnp.float32) * 0.02
    xp = x.reshape(B, Cin, Hf, patch, Wf, patch)
    xp = xp.transpose(0, 2, 4, 1, 3, 5).reshape(B, Hf * Wf, Cin * patch * patch)
    feat = (xp @ w_patch).reshape(B, Hf, Wf, C)              # NHWC features

    params = dict(
        ln_g=1.0 + 0.1 * jax.random.normal(keys[2], (C,), jnp.float32),
        ln_b=0.1 * jax.random.normal(keys[3], (C,), jnp.float32),
        w1=jax.random.normal(keys[4], (512, C), jnp.float32) * 0.05,        # conv1 1x1, [out,in]
        b1=jax.random.normal(keys[5], (512,), jnp.float32) * 0.05,
        w2=jax.random.normal(keys[6], (num_classes, 512), jnp.float32) * 0.05,  # conv2 1x1
        b2=jax.random.normal(keys[7], (num_classes,), jnp.float32) * 0.05,
        # TODO(synk): CountingHead is defined outside this module; implemented here as a
        # 1x1-conv MLP density head (C->256->1 with ReLU) at feature resolution.
        wr1=jax.random.normal(keys[8], (256, C), jnp.float32) * 0.05,
        br1=jax.random.normal(keys[9], (256,), jnp.float32) * 0.05,
        wr2=jax.random.normal(keys[10], (1, 256), jnp.float32) * 0.05,
        br2=jax.random.normal(keys[11], (1,), jnp.float32) * 0.05,
    )

    pred_den, cls_score = mamba4cc_heads(feat, params, num_classes)
    jax.block_until_ready((pred_den, cls_score))
    assert pred_den.shape == (B, 1, Hf, Wf)
    assert cls_score.shape == (B, num_classes, H, W)
    assert bool(jnp.all(jnp.isfinite(pred_den))) and bool(jnp.all(jnp.isfinite(cls_score)))

    ref_den, ref_cls = _reference(feat, params)
    np.testing.assert_allclose(np.asarray(pred_den), np.asarray(ref_den), atol=5e-2, rtol=0.0)
    np.testing.assert_allclose(np.asarray(cls_score), np.asarray(ref_cls), atol=5e-2, rtol=0.0)
    print("KERNEL_OK")
</pallas_src>

<mosaic_0001>
module attributes {stable_mosaic.version = 11 : i64} {
  func.func @_feat_kernel(%arg0: i32, %arg1: i32, %arg2: memref<1x64x256xbf16, #tpu.memory_space<vmem>>, %arg3: memref<64x1xf32, #tpu.memory_space<vmem>>, %arg4: memref<64x1xf32, #tpu.memory_space<vmem>>, %arg5: memref<512x64xbf16, #tpu.memory_space<vmem>>, %arg6: memref<512x1xf32, #tpu.memory_space<vmem>>, %arg7: memref<256x64xbf16, #tpu.memory_space<vmem>>, %arg8: memref<256x1xf32, #tpu.memory_space<vmem>>, %arg9: memref<8x256xbf16, #tpu.memory_space<vmem>>, %arg10: memref<1x1xf32, #tpu.memory_space<vmem>>, %arg11: memref<1x1x256xf32, #tpu.memory_space<vmem>>, %arg12: memref<1x8x512x32xbf16, #tpu.memory_space<vmem>>) attributes {dimension_semantics = [#tpu.dimension_semantics<parallel>, #tpu.dimension_semantics<parallel>], iteration_bounds = array<i64: 2, 1>, scalar_prefetch = 0 : i64, scratch_operands = 0 : i64, tpu.core_type = #tpu.core_type<tc>, window_params = [{transform_indices = @transform_0, window_bounds = array<i64: 1, 64, 256>}, {pipeline_mode = #tpu.pipeline_mode<synchronous>, transform_indices = @transform_1, window_bounds = array<i64: 64, 1>}, {pipeline_mode = #tpu.pipeline_mode<synchronous>, transform_indices = @transform_2, window_bounds = array<i64: 64, 1>}, {pipeline_mode = #tpu.pipeline_mode<synchronous>, transform_indices = @transform_3, window_bounds = array<i64: 512, 64>}, {pipeline_mode = #tpu.pipeline_mode<synchronous>, transform_indices = @transform_4, window_bounds = array<i64: 512, 1>}, {pipeline_mode = #tpu.pipeline_mode<synchronous>, transform_indices = @transform_5, window_bounds = array<i64: 256, 64>}, {pipeline_mode = #tpu.pipeline_mode<synchronous>, transform_indices = @transform_6, window_bounds = array<i64: 256, 1>}, {pipeline_mode = #tpu.pipeline_mode<synchronous>, transform_indices = @transform_7, window_bounds = array<i64: 8, 256>}, {pipeline_mode = #tpu.pipeline_mode<synchronous>, transform_indices = @transform_8, window_bounds = array<i64: 1, 1>}, {transform_indices = @transform_9, window_bounds = array<i64: 1, 1, 256>}, {transform_indices = @transform_10, window_bounds = array<i64: 1, 8, 512, 32>}]} {
    %c0 = arith.constant 0 : index
    %c0_0 = arith.constant 0 : index
    %c0_1 = arith.constant 0 : index
    %0 = vector.load %arg2[%c0, %c0_0, %c0_1] : memref<1x64x256xbf16, #tpu.memory_space<vmem>>, vector<1x64x256xbf16>
    %1 = vector.shape_cast %0 : vector<1x64x256xbf16> to vector<64x256xbf16>
    %2 = arith.extf %1 : vector<64x256xbf16> to vector<64x256xf32>
    %cst = arith.constant dense<0.000000e+00> : vector<256xf32>
    %3 = vector.multi_reduction <add>, %2, %cst [0] : vector<64x256xf32> to vector<256xf32>
    %4 = vector.shape_cast %3 : vector<256xf32> to vector<1x256xf32>
    %cst_2 = arith.constant 6.400000e+01 : f32
    %5 = vector.broadcast %cst_2 : f32 to vector<1x256xf32>
    %6 = arith.divf %4, %5 : vector<1x256xf32>
    %7 = vector.broadcast %6 : vector<1x256xf32> to vector<64x256xf32>
    %8 = arith.subf %2, %7 : vector<64x256xf32>
    %9 = arith.mulf %8, %8 : vector<64x256xf32>
    %cst_3 = arith.constant dense<0.000000e+00> : vector<256xf32>
    %10 = vector.multi_reduction <add>, %9, %cst_3 [0] : vector<64x256xf32> to vector<256xf32>
    %11 = vector.shape_cast %10 : vector<256xf32> to vector<1x256xf32>
    %cst_4 = arith.constant 6.400000e+01 : f32
    %12 = vector.broadcast %cst_4 : f32 to vector<1x256xf32>
    %13 = arith.divf %11, %12 : vector<1x256xf32>
    %cst_5 = arith.constant 9.99999974E-6 : f32
    %14 = vector.broadcast %cst_5 : f32 to vector<1x256xf32>
    %15 = arith.addf %13, %14 : vector<1x256xf32>
    %16 = math.rsqrt %15 : vector<1x256xf32>
    %17 = vector.broadcast %16 : vector<1x256xf32> to vector<64x256xf32>
    %18 = arith.mulf %8, %17 : vector<64x256xf32>
    %c0_6 = arith.constant 0 : index
    %c0_7 = arith.constant 0 : index
    %19 = vector.load %arg3[%c0_6, %c0_7] : memref<64x1xf32, #tpu.memory_space<vmem>>, vector<64x1xf32>
    %20 = vector.broadcast %19 : vector<64x1xf32> to vector<64x256xf32>
    %21 = arith.mulf %18, %20 : vector<64x256xf32>
    %c0_8 = arith.constant 0 : index
    %c0_9 = arith.constant 0 : index
    %22 = vector.load %arg4[%c0_8, %c0_9] : memref<64x1xf32, #tpu.memory_space<vmem>>, vector<64x1xf32>
    %23 = vector.broadcast %22 : vector<64x1xf32> to vector<64x256xf32>
    %24 = arith.addf %21, %23 : vector<64x256xf32>
    %25 = arith.truncf %24 : vector<64x256xf32> to vector<64x256xbf16>
    %c0_10 = arith.constant 0 : index
    %c0_11 = arith.constant 0 : index
    %26 = vector.load %arg7[%c0_10, %c0_11] : memref<256x64xbf16, #tpu.memory_space<vmem>>, vector<256x64xbf16>
    %cst_12 = arith.constant dense<0.000000e+00> : vector<256x256xf32>
    %27 = tpu.matmul %26, %25, %cst_12 {dimension_numbers = #tpu.dot_dimension_numbers<[1], [0], [0], [1], [0, 0, 1, 1], [], []>} : vector<256x64xbf16>, vector<64x256xbf16>, vector<256x256xf32> -> vector<256x256xf32>
    %c0_13 = arith.constant 0 : index
    %c0_14 = arith.constant 0 : index
    %28 = vector.load %arg8[%c0_13, %c0_14] : memref<256x1xf32, #tpu.memory_space<vmem>>, vector<256x1xf32>
    %29 = vector.broadcast %28 : vector<256x1xf32> to vector<256x256xf32>
    %30 = arith.addf %27, %29 : vector<256x256xf32>
    %cst_15 = arith.constant 0.000000e+00 : f32
    %31 = vector.broadcast %cst_15 : f32 to vector<256x256xf32>
    %32 = arith.maximumf %30, %31 : vector<256x256xf32>
    %33 = arith.truncf %32 : vector<256x256xf32> to vector<256x256xbf16>
    %c0_16 = arith.constant 0 : index
    %c0_17 = arith.constant 0 : index
    %34 = vector.load %arg9[%c0_16, %c0_17] : memref<8x256xbf16, #tpu.memory_space<vmem>>, vector<8x256xbf16>
    %cst_18 = arith.constant dense<0.000000e+00> : vector<8x256xf32>
    %35 = tpu.matmul %34, %33, %cst_18 {dimension_numbers = #tpu.dot_dimension_numbers<[1], [0], [0], [1], [0, 0, 1, 1], [], []>} : vector<8x256xbf16>, vector<256x256xbf16>, vector<8x256xf32> -> vector<8x256xf32>
    %36 = vector.extract_strided_slice %35 {offsets = [0, 0], sizes = [1, 256], strides = [1, 1]} : vector<8x256xf32> to vector<1x256xf32>
    %c0_19 = arith.constant 0 : index
    %c0_20 = arith.constant 0 : index
    %37 = vector.load %arg10[%c0_19, %c0_20] : memref<1x1xf32, #tpu.memory_space<vmem>>, vector<1x1xf32>
    %38 = vector.broadcast %37 : vector<1x1xf32> to vector<1x256xf32>
    %39 = arith.addf %36, %38 : vector<1x256xf32>
    %cst_21 = arith.constant 0.000000e+00 : f32
    %40 = vector.broadcast %cst_21 : f32 to vector<1x256xf32>
    %41 = arith.maximumf %39, %40 : vector<1x256xf32>
    %c0_22 = arith.constant 0 : index
    %c0_23 = arith.constant 0 : index
    %c0_24 = arith.constant 0 : index
    %42 = vector.load %arg11[%c0_22, %c0_23, %c0_24] : memref<1x1x256xf32, #tpu.memory_space<vmem>>, vector<1x1x256xf32>
    %43 = vector.shape_cast %42 : vector<1x1x256xf32> to vector<1x256xf32>
    %44 = vector.shape_cast %41 : vector<1x256xf32> to vector<1x1x256xf32>
    tpu.vector_store %arg11[%c0_22, %c0_23, %c0_24], %44 {strides = array<i32>} : memref<1x1x256xf32, #tpu.memory_space<vmem>>, vector<1x1x256xf32>,
    %c0_25 = arith.constant 0 : index
    %c0_26 = arith.constant 0 : index
    %45 = vector.load %arg5[%c0_25, %c0_26] : memref<512x64xbf16, #tpu.memory_space<vmem>>, vector<512x64xbf16>
    %cst_27 = arith.constant dense<0.000000e+00> : vector<512x256xf32>
    %46 = tpu.matmul %45, %25, %cst_27 {dimension_numbers = #tpu.dot_dimension_numbers<[1], [0], [0], [1], [0, 0, 1, 1], [], []>} : vector<512x64xbf16>, vector<64x256xbf16>, vector<512x256xf32> -> vector<512x256xf32>
    %c0_28 = arith.constant 0 : index
    %c0_29 = arith.constant 0 : index
    %47 = vector.load %arg6[%c0_28, %c0_29] : memref<512x1xf32, #tpu.memory_space<vmem>>, vector<512x1xf32>
    %48 = vector.broadcast %47 : vector<512x1xf32> to vector<512x256xf32>
    %49 = arith.addf %46, %48 : vector<512x256xf32>
    %50 = arith.truncf %49 : vector<512x256xf32> to vector<512x256xbf16>
    %51 = vector.extract_strided_slice %50 {offsets = [0, 0], sizes = [512, 32], strides = [1, 1]} : vector<512x256xbf16> to vector<512x32xbf16>
    %c0_30 = arith.constant 0 : index
    %c0_31 = arith.constant 0 : index
    %c0_32 = arith.constant 0 : index
    %c0_33 = arith.constant 0 : index
    %52 = vector.load %arg12[%c0_30, %c0_31, %c0_32, %c0_33] : memref<1x8x512x32xbf16, #tpu.memory_space<vmem>>, vector<1x1x512x32xbf16>
    %53 = vector.shape_cast %52 : vector<1x1x512x32xbf16> to vector<512x32xbf16>
    %54 = vector.shape_cast %51 : vector<512x32xbf16> to vector<1x1x512x32xbf16>
    tpu.vector_store %arg12[%c0_30, %c0_31, %c0_32, %c0_33], %54 {strides = array<i32>} : memref<1x8x512x32xbf16, #tpu.memory_space<vmem>>, vector<1x1x512x32xbf16>,
    %55 = vector.extract_strided_slice %50 {offsets = [0, 32], sizes = [512, 32], strides = [1, 1]} : vector<512x256xbf16> to vector<512x32xbf16>
    %c0_34 = arith.constant 0 : index
    %c1 = arith.constant 1 : index
    %c0_35 = arith.constant 0 : index
    %c0_36 = arith.constant 0 : index
    %56 = vector.load %arg12[%c0_34, %c1, %c0_35, %c0_36] : memref<1x8x512x32xbf16, #tpu.memory_space<vmem>>, vector<1x1x512x32xbf16>
    %57 = vector.shape_cast %56 : vector<1x1x512x32xbf16> to vector<512x32xbf16>
    %58 = vector.shape_cast %55 : vector<512x32xbf16> to vector<1x1x512x32xbf16>
    tpu.vector_store %arg12[%c0_34, %c1, %c0_35, %c0_36], %58 {strides = array<i32>} : memref<1x8x512x32xbf16, #tpu.memory_space<vmem>>, vector<1x1x512x32xbf16>,
    %59 = vector.extract_strided_slice %50 {offsets = [0, 64], sizes = [512, 32], strides = [1, 1]} : vector<512x256xbf16> to vector<512x32xbf16>
    %c0_37 = arith.constant 0 : index
    %c2 = arith.constant 2 : index
    %c0_38 = arith.constant 0 : index
    %c0_39 = arith.constant 0 : index
    %60 = vector.load %arg12[%c0_37, %c2, %c0_38, %c0_39] : memref<1x8x512x32xbf16, #tpu.memory_space<vmem>>, vector<1x1x512x32xbf16>
    %61 = vector.shape_cast %60 : vector<1x1x512x32xbf16> to vector<512x32xbf16>
    %62 = vector.shape_cast %59 : vector<512x32xbf16> to vector<1x1x512x32xbf16>
    tpu.vector_store %arg12[%c0_37, %c2, %c0_38, %c0_39], %62 {strides = array<i32>} : memref<1x8x512x32xbf16, #tpu.memory_space<vmem>>, vector<1x1x512x32xbf16>,
    %63 = vector.extract_strided_slice %50 {offsets = [0, 96], sizes = [512, 32], strides = [1, 1]} : vector<512x256xbf16> to vector<512x32xbf16>
    %c0_40 = arith.constant 0 : index
    %c3 = arith.constant 3 : index
    %c0_41 = arith.constant 0 : index
    %c0_42 = arith.constant 0 : index
    %64 = vector.load %arg12[%c0_40, %c3, %c0_41, %c0_42] : memref<1x8x512x32xbf16, #tpu.memory_space<vmem>>, vector<1x1x512x32xbf16>
    %65 = vector.shape_cast %64 : vector<1x1x512x32xbf16> to vector<512x32xbf16>
    %66 = vector.shape_cast %63 : vector<512x32xbf16> to vector<1x1x512x32xbf16>
    tpu.vector_store %arg12[%c0_40, %c3, %c0_41, %c0_42], %66 {strides = array<i32>} : memref<1x8x512x32xbf16, #tpu.memory_space<vmem>>, vector<1x1x512x32xbf16>,
    %67 = vector.extract_strided_slice %50 {offsets = [0, 128], sizes = [512, 32], strides = [1, 1]} : vector<512x256xbf16> to vector<512x32xbf16>
    %c0_43 = arith.constant 0 : index
    %c4 = arith.constant 4 : index
    %c0_44 = arith.constant 0 : index
    %c0_45 = arith.constant 0 : index
    %68 = vector.load %arg12[%c0_43, %c4, %c0_44, %c0_45] : memref<1x8x512x32xbf16, #tpu.memory_space<vmem>>, vector<1x1x512x32xbf16>
    %69 = vector.shape_cast %68 : vector<1x1x512x32xbf16> to vector<512x32xbf16>
    %70 = vector.shape_cast %67 : vector<512x32xbf16> to vector<1x1x512x32xbf16>
    tpu.vector_store %arg12[%c0_43, %c4, %c0_44, %c0_45], %70 {strides = array<i32>} : memref<1x8x512x32xbf16, #tpu.memory_space<vmem>>, vector<1x1x512x32xbf16>,
    %71 = vector.extract_strided_slice %50 {offsets = [0, 160], sizes = [512, 32], strides = [1, 1]} : vector<512x256xbf16> to vector<512x32xbf16>
    %c0_46 = arith.constant 0 : index
    %c5 = arith.constant 5 : index
    %c0_47 = arith.constant 0 : index
    %c0_48 = arith.constant 0 : index
    %72 = vector.load %arg12[%c0_46, %c5, %c0_47, %c0_48] : memref<1x8x512x32xbf16, #tpu.memory_space<vmem>>, vector<1x1x512x32xbf16>
    %73 = vector.shape_cast %72 : vector<1x1x512x32xbf16> to vector<512x32xbf16>
    %74 = vector.shape_cast %71 : vector<512x32xbf16> to vector<1x1x512x32xbf16>
    tpu.vector_store %arg12[%c0_46, %c5, %c0_47, %c0_48], %74 {strides = array<i32>} : memref<1x8x512x32xbf16, #tpu.memory_space<vmem>>, vector<1x1x512x32xbf16>,
    %75 = vector.extract_strided_slice %50 {offsets = [0, 192], sizes = [512, 32], strides = [1, 1]} : vector<512x256xbf16> to vector<512x32xbf16>
    %c0_49 = arith.constant 0 : index
    %c6 = arith.constant 6 : index
    %c0_50 = arith.constant 0 : index
    %c0_51 = arith.constant 0 : index
    %76 = vector.load %arg12[%c0_49, %c6, %c0_50, %c0_51] : memref<1x8x512x32xbf16, #tpu.memory_space<vmem>>, vector<1x1x512x32xbf16>
    %77 = vector.shape_cast %76 : vector<1x1x512x32xbf16> to vector<512x32xbf16>
    %78 = vector.shape_cast %75 : vector<512x32xbf16> to vector<1x1x512x32xbf16>
    tpu.vector_store %arg12[%c0_49, %c6, %c0_50, %c0_51], %78 {strides = array<i32>} : memref<1x8x512x32xbf16, #tpu.memory_space<vmem>>, vector<1x1x512x32xbf16>,
    %79 = vector.extract_strided_slice %50 {offsets = [0, 224], sizes = [512, 32], strides = [1, 1]} : vector<512x256xbf16> to vector<512x32xbf16>
    %c0_52 = arith.constant 0 : index
    %c7 = arith.constant 7 : index
    %c0_53 = arith.constant 0 : index
    %c0_54 = arith.constant 0 : index
    %80 = vector.load %arg12[%c0_52, %c7, %c0_53, %c0_54] : memref<1x8x512x32xbf16, #tpu.memory_space<vmem>>, vector<1x1x512x32xbf16>
    %81 = vector.shape_cast %80 : vector<1x1x512x32xbf16> to vector<512x32xbf16>
    %82 = vector.shape_cast %79 : vector<512x32xbf16> to vector<1x1x512x32xbf16>
    tpu.vector_store %arg12[%c0_52, %c7, %c0_53, %c0_54], %82 {strides = array<i32>} : memref<1x8x512x32xbf16, #tpu.memory_space<vmem>>, vector<1x1x512x32xbf16>,
    return
  }
  func.func @transform_0(%arg0: i32, %arg1: i32) -> (i32, i32, i32) {
    %c0_i32 = arith.constant 0 : i32
    %c0_i32_0 = arith.constant 0 : i32
    return %arg0, %c0_i32, %arg1 : i32, i32, i32
  }
  func.func @transform_1(%arg0: i32, %arg1: i32) -> (i32, i32) {
    %c0_i32 = arith.constant 0 : i32
    %c0_i32_0 = arith.constant 0 : i32
    %c0_i32_1 = arith.constant 0 : i32
    return %c0_i32, %c0_i32_0 : i32, i32
  }
  func.func @transform_2(%arg0: i32, %arg1: i32) -> (i32, i32) {
    %c0_i32 = arith.constant 0 : i32
    %c0_i32_0 = arith.constant 0 : i32
    %c0_i32_1 = arith.constant 0 : i32
    return %c0_i32, %c0_i32_0 : i32, i32
  }
  func.func @transform_3(%arg0: i32, %arg1: i32) -> (i32, i32) {
    %c0_i32 = arith.constant 0 : i32
    %c0_i32_0 = arith.constant 0 : i32
    %c0_i32_1 = arith.constant 0 : i32
    return %c0_i32, %c0_i32_0 : i32, i32
  }
  func.func @transform_4(%arg0: i32, %arg1: i32) -> (i32, i32) {
    %c0_i32 = arith.constant 0 : i32
    %c0_i32_0 = arith.constant 0 : i32
    %c0_i32_1 = arith.constant 0 : i32
    return %c0_i32, %c0_i32_0 : i32, i32
  }
  func.func @transform_5(%arg0: i32, %arg1: i32) -> (i32, i32) {
    %c0_i32 = arith.constant 0 : i32
    %c0_i32_0 = arith.constant 0 : i32
    %c0_i32_1 = arith.constant 0 : i32
    return %c0_i32, %c0_i32_0 : i32, i32
  }
  func.func @transform_6(%arg0: i32, %arg1: i32) -> (i32, i32) {
    %c0_i32 = arith.constant 0 : i32
    %c0_i32_0 = arith.constant 0 : i32
    %c0_i32_1 = arith.constant 0 : i32
    return %c0_i32, %c0_i32_0 : i32, i32
  }
  func.func @transform_7(%arg0: i32, %arg1: i32) -> (i32, i32) {
    %c0_i32 = arith.constant 0 : i32
    %c0_i32_0 = arith.constant 0 : i32
    %c0_i32_1 = arith.constant 0 : i32
    return %c0_i32, %c0_i32_0 : i32, i32
  }
  func.func @transform_8(%arg0: i32, %arg1: i32) -> (i32, i32) {
    %c0_i32 = arith.constant 0 : i32
    %c0_i32_0 = arith.constant 0 : i32
    %c0_i32_1 = arith.constant 0 : i32
    return %c0_i32, %c0_i32_0 : i32, i32
  }
  func.func @transform_9(%arg0: i32, %arg1: i32) -> (i32, i32, i32) {
    %c0_i32 = arith.constant 0 : i32
    %c0_i32_0 = arith.constant 0 : i32
    return %arg0, %c0_i32, %arg1 : i32, i32, i32
  }
  func.func @transform_10(%arg0: i32, %arg1: i32) -> (i32, i32, i32, i32) {
    %c0_i32 = arith.constant 0 : i32
    %c0_i32_0 = arith.constant 0 : i32
    %c0_i32_1 = arith.constant 0 : i32
    return %arg0, %arg1, %c0_i32, %c0_i32_0 : i32, i32, i32, i32
  }
}

</mosaic_0001>

<llo_original>
// kernel: tpu_custom_call.1
$region0: #{tpu_custom_call.1}
  #allocation0 [shape = 'u32[]', space=smem, size = 0x4, offset = 0x4, fixed_abs, tag = 'smem constant byte address 0x4 - core index']
  #allocation1 [shape = 'u32[144,128]{1,0:T(1,128)}', space=vmem, size = 0x12000, scoped, tag = 'internal scratch']
  #allocation2 [shape = 'f32[1,1]{1,0:T(1,128)S(1)}', space=vmem, size = 0x200, scoped, tag = 'scoped memory for tpu_custom_call.1']
  %s0 = inlined_call_operand.hbm [shape: bf16[2,64,256], index: 0, kind: input, shape index: {}]
  %s1 = inlined_call_operand.vmem [shape: f32[64,1], index: 1, kind: input, shape index: {}]
  %s2 = inlined_call_operand.vmem [shape: f32[64,1], index: 2, kind: input, shape index: {}]
  %s3 = inlined_call_operand.vmem [shape: bf16[512,64], index: 3, kind: input, shape index: {}]
  %s4 = inlined_call_operand.vmem [shape: f32[512,1], index: 4, kind: input, shape index: {}]
  %s5 = inlined_call_operand.vmem [shape: bf16[256,64], index: 5, kind: input, shape index: {}]
  %s6 = inlined_call_operand.vmem [shape: f32[256,1], index: 6, kind: input, shape index: {}]
  %s7 = inlined_call_operand.hbm [shape: bf16[8,256], index: 7, kind: input, shape index: {}]
  %s8 = inlined_call_operand.<no memory space> [shape: f32[1,1], index: 8, kind: input, shape index: {}]
  %s9 = inlined_call_operand.hbm [shape: f32[2,1,256], index: 9, kind: output, shape index: {0}]
  %s10 = inlined_call_operand.vmem [shape: bf16[2,8,512,32], index: 10, kind: output, shape index: {1}]
  %11 = xla_tuple %s9, %s10
  %s12 = sld [smem:[#allocation0]]
  $region85: #{tpu_custom_call.1} parent=0
    _
  %s14 = ssub.s32 1, %s12
  %s15 = scalar_select 0, %s14, %s12
  %v16 = vstv %s8
  %17 = vst [vmem:[#allocation2] sm:$0x1] %v16
  $region1: #{tpu_custom_call.1} parent=0
    #allocation3 [shape = 'u8[65536]{0}', space=vmem, size = 0x10000, scoped, tag = 'input window, operand 0']
    #allocation4 [shape = 's32[2]{0}', space=sflag, size = 0x8, scoped, tag = 'scoped memory for tpu_custom_call.1']
    #allocation5 [shape = 's32[2]{0}', space=sflag, size = 0x8, scoped, tag = 'scoped memory for tpu_custom_call.1']
    #allocation6 [shape = 'u8[4096]{0}', space=vmem, size = 0x1000, scoped, tag = 'input window, operand 7, single buffered']
    #allocation7 [shape = 's32[1]{0}', space=sflag, size = 0x4, scoped, tag = 'scoped memory for tpu_custom_call.1']
    #allocation8 [shape = 'u8[2048]{0}', space=vmem, size = 0x800, scoped, tag = 'output window, operand 0']
    %18 = vsyncpa [#allocation4], 0
    %s19 = scalar_lea.sflag [#allocation4], 1
    %20 = vsyncpa %s19, 0
    %21 = vsyncpa [#allocation7], 0
    %22 = vsyncpa [#allocation5], 0
    %s23 = scalar_lea.sflag [#allocation5], 1
    %24 = vsyncpa %s23, 0
    loop: start=0, step=1, limit=4
    $region2: #{tpu_custom_call.1} parent=1 // loop_pre_header
      _
    $region3: #{tpu_custom_call.1} parent=1 // loop_header
      %s26 = sphi 0, %s30
      %p27 = scmp.ge.s32.totalorder %s26, 4
      %s33 = sphi 0, %s45
      %s34 = sphi 0, %s41
      %s35 = sphi 0, %s33
      %s36 = sphi 0, %s34
      %s37 = sphi 0, %s35
      %s38 = sphi 0, %s36
      %s50 = sphi 0, %s52
      %s53 = sphi 0, %s50
      %s54 = sphi 0, %s53
      %s70 = sphi 0, %s54
      %s74 = sphi 0, %s74
      %s76 = sphi 0, %s74
      %s77 = sphi 0, %s76
      %s91 = sphi 0, %s77
      %s95 = sphi 0, %s95
      %s97 = sphi 0, %s95
      %s98 = sphi 0, %s97
      %s112 = sphi 0, %s98
      %s116 = sphi 0, %s116
      %s118 = sphi 0, %s116
      %s119 = sphi 0, %s118
      %s133 = sphi 0, %s119
      %s137 = sphi 0, %s137
      %s139 = sphi 0, %s137
      %s140 = sphi 0, %s139
      %s154 = sphi 0, %s140
      %s158 = sphi 0, %s158
      %s160 = sphi 0, %s158
      %s161 = sphi 0, %s160
      %s175 = sphi 0, %s161
      %s179 = sphi 0, %s179
      %s181 = sphi 0, %s179
      %s182 = sphi 0, %s181
      %s196 = sphi 0, %s182
      %s200 = sphi 0, %s200
      %s202 = sphi 0, %s200
      %s203 = sphi 0, %s202
      %s217 = sphi 0, %s203
      %s221 = sphi 0, %s221
      %s223 = sphi 0, %s221
      %s224 = sphi 0, %s223
      %s238 = sphi 0, %s224
      %s246 = sphi 0, %s248
      %s249 = sphi 0, %s246
      %s250 = sphi 0, %s249
      %s266 = sphi 0, %s250
      %s274 = sphi 0, %s276
      %s277 = sphi 0, %s274
      %s278 = sphi 0, %s277
      %s294 = sphi 0, %s278
    $region4: #{tpu_custom_call.1} parent=1 // loop_header_branch
      %29 = sbr.rel (%p27) target = $region8
    $region5: #{tpu_custom_call.1} parent=1 // loop_body
      %s31 = ssub.s32 %s26, 1
      %s32 = ssub.s32 %s26, 2
      %s39 = sadd.s32 1, %s34
      %p40 = scmp.ge.s32.totalorder %s39, 1
      %s41 = scalar_select %p40, 0, %s39
      %s42 = sadd.s32 1, %s33
      %s43 = scalar_select %p40, %s42, %s33
      %p44 = scmp.ge.s32.totalorder %s43, 2
      %s45 = scalar_select %p44, 0, %s43
      %s46 = ssub.s32 %s33, %s45
      %s47 = ssub.s32 %s34, %s41
      %s48 = sor.u32 %s46, %s47
      %p49 = scmp.eq.s32.totalorder %s48, 0
      %s51 = sadd.s32 %s50, 1
      %s52 = scalar_select %p49, %s50, %s51
      %p55 = pneg %p49
      %p56 = scmp.eq.s32.totalorder %s26, 1
      %p57 = por %p55, %p56
      %p58 = scmp.ne.s32.totalorder %s50, %s53
      %p59 = scmp.eq.s32.totalorder %s26, 0
      %p60 = por %p58, %p59
      %p61 = scmp.ne.s32.totalorder %s50, %s53
      %p62 = scmp.eq.s32.totalorder %s31, 1
      %p63 = por %p61, %p62
      %p64 = scmp.ne.s32.totalorder %s53, %s54
      %p65 = scmp.eq.s32.totalorder %s31, 0
      %p66 = por %p64, %p65
      %p67 = scmp.ne.s32.totalorder %s53, %s54
      %p68 = scmp.eq.s32.totalorder %s32, 1
      %p69 = por %p67, %p68
      %p71 = scmp.ne.s32.totalorder %s54, %s70
      %p72 = scmp.eq.s32.totalorder %s32, 0
      %p73 = por %p71, %p72
      %s75 = sadd.s32 %s74, 1
      %p78 = scmp.eq.s32.totalorder %s26, 1
      %p79 = scmp.ne.s32.totalorder %s74, %s76
      %p80 = scmp.eq.s32.totalorder %s26, 0
      %p81 = por %p79, %p80
      %p82 = scmp.ne.s32.totalorder %s74, %s76
      %p83 = scmp.eq.s32.totalorder %s31, 1
      %p84 = por %p82, %p83
      %p85 = scmp.ne.s32.totalorder %s76, %s77
      %p86 = scmp.eq.s32.totalorder %s31, 0
      %p87 = por %p85, %p86
      %p88 = scmp.ne.s32.totalorder %s76, %s77
      %p89 = scmp.eq.s32.totalorder %s32, 1
      %p90 = por %p88, %p89
      %p92 = scmp.ne.s32.totalorder %s77, %s91
      %p93 = scmp.eq.s32.totalorder %s32, 0
      %p94 = por %p92, %p93
      %s96 = sadd.s32 %s95, 1
      %p99 = scmp.eq.s32.totalorder %s26, 1
      %p100 = scmp.ne.s32.totalorder %s95, %s97
      %p101 = scmp.eq.s32.totalorder %s26, 0
      %p102 = por %p100, %p101
      %p103 = scmp.ne.s32.totalorder %s95, %s97
      %p104 = scmp.eq.s32.totalorder %s31, 1
      %p105 = por %p103, %p104
      %p106 = scmp.ne.s32.totalorder %s97, %s98
      %p107 = scmp.eq.s32.totalorder %s31, 0
      %p108 = por %p106, %p107
      %p109 = scmp.ne.s32.totalorder %s97, %s98
      %p110 = scmp.eq.s32.totalorder %s32, 1
      %p111 = por %p109, %p110
      %p113 = scmp.ne.s32.totalorder %s98, %s112
      %p114 = scmp.eq.s32.totalorder %s32, 0
      %p115 = por %p113, %p114
      %s117 = sadd.s32 %s116, 1
      %p120 = scmp.eq.s32.totalorder %s26, 1
      %p121 = scmp.ne.s32.totalorder %s116, %s118
      %p122 = scmp.eq.s32.totalorder %s26, 0
      %p123 = por %p121, %p122
      %p124 = scmp.ne.s32.totalorder %s116, %s118
      %p125 = scmp.eq.s32.totalorder %s31, 1
      %p126 = por %p124, %p125
      %p127 = scmp.ne.s32.totalorder %s118, %s119
      %p128 = scmp.eq.s32.totalorder %s31, 0
      %p129 = por %p127, %p128
      %p130 = scmp.ne.s32.totalorder %s118, %s119
      %p131 = scmp.eq.s32.totalorder %s32, 1
      %p132 = por %p130, %p131
      %p134 = scmp.ne.s32.totalorder %s119, %s133
      %p135 = scmp.eq.s32.totalorder %s32, 0
      %p136 = por %p134, %p135
      %s138 = sadd.s32 %s137, 1
      %p141 = scmp.eq.s32.totalorder %s26, 1
      %p142 = scmp.ne.s32.totalorder %s137, %s139
      %p143 = scmp.eq.s32.totalorder %s26, 0
      %p144 = por %p142, %p143
      %p145 = scmp.ne.s32.totalorder %s137, %s139
      %p146 = scmp.eq.s32.totalorder %s31, 1
      %p147 = por %p145, %p146
      %p148 = scmp.ne.s32.totalorder %s139, %s140
      %p149 = scmp.eq.s32.totalorder %s31, 0
      %p150 = por %p148, %p149
      %p151 = scmp.ne.s32.totalorder %s139, %s140
      %p152 = scmp.eq.s32.totalorder %s32, 1
      %p153 = por %p151, %p152
      %p155 = scmp.ne.s32.totalorder %s140, %s154
      %p156 = scmp.eq.s32.totalorder %s32, 0
      %p157 = por %p155, %p156
      %s159 = sadd.s32 %s158, 1
      %p162 = scmp.eq.s32.totalorder %s26, 1
      %p163 = scmp.ne.s32.totalorder %s158, %s160
      %p164 = scmp.eq.s32.totalorder %s26, 0
      %p165 = por %p163, %p164
      %p166 = scmp.ne.s32.totalorder %s158, %s160
      %p167 = scmp.eq.s32.totalorder %s31, 1
      %p168 = por %p166, %p167
      %p169 = scmp.ne.s32.totalorder %s160, %s161
      %p170 = scmp.eq.s32.totalorder %s31, 0
      %p171 = por %p169, %p170
      %p172 = scmp.ne.s32.totalorder %s160, %s161
      %p173 = scmp.eq.s32.totalorder %s32, 1
      %p174 = por %p172, %p173
      %p176 = scmp.ne.s32.totalorder %s161, %s175
      %p177 = scmp.eq.s32.totalorder %s32, 0
      %p178 = por %p176, %p177
      %s180 = sadd.s32 %s179, 1
      %p183 = scmp.eq.s32.totalorder %s26, 1
      %p184 = scmp.ne.s32.totalorder %s179, %s181
      %p185 = scmp.eq.s32.totalorder %s26, 0
      %p186 = por %p184, %p185
      %p187 = scmp.ne.s32.totalorder %s179, %s181
      %p188 = scmp.eq.s32.totalorder %s31, 1
      %p189 = por %p187, %p188
      %p190 = scmp.ne.s32.totalorder %s181, %s182
      %p191 = scmp.eq.s32.totalorder %s31, 0
      %p192 = por %p190, %p191
      %p193 = scmp.ne.s32.totalorder %s181, %s182
      %p194 = scmp.eq.s32.totalorder %s32, 1
      %p195 = por %p193, %p194
      %p197 = scmp.ne.s32.totalorder %s182, %s196
      %p198 = scmp.eq.s32.totalorder %s32, 0
      %p199 = por %p197, %p198
      %s201 = sadd.s32 %s200, 1
      %p204 = scmp.eq.s32.totalorder %s26, 1
      %p205 = scmp.ne.s32.totalorder %s200, %s202
      %p206 = scmp.eq.s32.totalorder %s26, 0
      %p207 = por %p205, %p206
      %p208 = scmp.ne.s32.totalorder %s200, %s202
      %p209 = scmp.eq.s32.totalorder %s31, 1
      %p210 = por %p208, %p209
      %p211 = scmp.ne.s32.totalorder %s202, %s203
      %p212 = scmp.eq.s32.totalorder %s31, 0
      %p213 = por %p211, %p212
      %p214 = scmp.ne.s32.totalorder %s202, %s203
      %p215 = scmp.eq.s32.totalorder %s32, 1
      %p216 = por %p214, %p215
      %p218 = scmp.ne.s32.totalorder %s203, %s217
      %p219 = scmp.eq.s32.totalorder %s32, 0
      %p220 = por %p218, %p219
      %s222 = sadd.s32 %s221, 1
      %p225 = scmp.eq.s32.totalorder %s26, 1
      %p226 = scmp.ne.s32.totalorder %s221, %s223
      %p227 = scmp.eq.s32.totalorder %s26, 0
      %p228 = por %p226, %p227
      %p229 = scmp.ne.s32.totalorder %s221, %s223
      %p230 = scmp.eq.s32.totalorder %s31, 1
      %p231 = por %p229, %p230
      %p232 = scmp.ne.s32.totalorder %s223, %s224
      %p233 = scmp.eq.s32.totalorder %s31, 0
      %p234 = por %p232, %p233
      %p235 = scmp.ne.s32.totalorder %s223, %s224
      %p236 = scmp.eq.s32.totalorder %s32, 1
      %p237 = por %p235, %p236
      %p239 = scmp.ne.s32.totalorder %s224, %s238
      %p240 = scmp.eq.s32.totalorder %s32, 0
      %p241 = por %p239, %p240
      %s242 = ssub.s32 %s33, %s45
      %s243 = ssub.s32 %s34, %s41
      %s244 = sor.u32 %s242, %s243
      %p245 = scmp.eq.s32.totalorder %s244, 0
      %s247 = sadd.s32 %s246, 1
      %s248 = scalar_select %p245, %s246, %s247
      %p251 = pneg %p245
      %p252 = scmp.eq.s32.totalorder %s26, 1
      %p253 = por %p251, %p252
      %p254 = scmp.ne.s32.totalorder %s246, %s249
      %p255 = scmp.eq.s32.totalorder %s26, 0
      %p256 = por %p254, %p255
      %p257 = scmp.ne.s32.totalorder %s246, %s249
      %p258 = scmp.eq.s32.totalorder %s31, 1
      %p259 = por %p257, %p258
      %p260 = scmp.ne.s32.totalorder %s249, %s250
      %p261 = scmp.eq.s32.totalorder %s31, 0
      %p262 = por %p260, %p261
      %p263 = scmp.ne.s32.totalorder %s249, %s250
      %p264 = scmp.eq.s32.totalorder %s32, 1
      %p265 = por %p263, %p264
      %p267 = scmp.ne.s32.totalorder %s250, %s266
      %p268 = scmp.eq.s32.totalorder %s32, 0
      %p269 = por %p267, %p268
      %s270 = ssub.s32 %s33, %s45
      %s271 = ssub.s32 %s34, %s41
      %s272 = sor.u32 %s270, %s271
      %p273 = scmp.eq.s32.totalorder %s272, 0
      %s275 = sadd.s32 %s274, 1
      %s276 = scalar_select %p273, %s274, %s275
      %p279 = pneg %p273
      %p280 = scmp.eq.s32.totalorder %s26, 1
      %p281 = por %p279, %p280
      %p282 = scmp.ne.s32.totalorder %s274, %s277
      %p283 = scmp.eq.s32.totalorder %s26, 0
      %p284 = por %p282, %p283
      %p285 = scmp.ne.s32.totalorder %s274, %s277
      %p286 = scmp.eq.s32.totalorder %s31, 1
      %p287 = por %p285, %p286
      %p288 = scmp.ne.s32.totalorder %s277, %s278
      %p289 = scmp.eq.s32.totalorder %s31, 0
      %p290 = por %p288, %p289
      %p291 = scmp.ne.s32.totalorder %s277, %s278
      %p292 = scmp.eq.s32.totalorder %s32, 1
      %p293 = por %p291, %p292
      %p295 = scmp.ne.s32.totalorder %s278, %s294
      %p296 = scmp.eq.s32.totalorder %s32, 0
      %p297 = por %p295, %p296
      %p298 = scmp.le.s32.totalorder 1, %s26
      %p299 = scmp.lt.s32.totalorder %s26, 3
      %p300 = pnand %p298, %p299
      %p301 = pneg %p300
      // Predicated region
      $region9: #{tpu_custom_call.1} parent=5 // pred_check
        _
      $region10: #{tpu_custom_call.1} parent=5 // pred_check_branch
        %303 = sbr.rel (%p300) target = $region12
      $region11: #{tpu_custom_call.1} parent=5 // pred_region
        %s304 = ssub.s32 %s26, 1
        // Predicated region
        $region13: #{tpu_custom_call.1} parent=11 // pred_check
          %p305 = pneg %p87
        $region14: #{tpu_custom_call.1} parent=11 // pred_check_branch
          %307 = sbr.rel (%p305) target = $region16
        $region15: #{tpu_custom_call.1} parent=11 // pred_region
          _
        $region16: #{tpu_custom_call.1} parent=11 // pred_fallthru
          _
        // Predicated region
        $region17: #{tpu_custom_call.1} parent=11 // pred_check
          %p308 = pneg %p108
        $region18: #{tpu_custom_call.1} parent=11 // pred_check_branch
          %310 = sbr.rel (%p308) target = $region20
        $region19: #{tpu_custom_call.1} parent=11 // pred_region
          _
        $region20: #{tpu_custom_call.1} parent=11 // pred_fallthru
          _
        // Predicated region
        $region21: #{tpu_custom_call.1} parent=11 // pred_check
          %p311 = pneg %p129
        $region22: #{tpu_custom_call.1} parent=11 // pred_check_branch
          %313 = sbr.rel (%p311) target = $region24
        $region23: #{tpu_custom_call.1} parent=11 // pred_region
          _
        $region24: #{tpu_custom_call.1} parent=11 // pred_fallthru
          _
        // Predicated region
        $region25: #{tpu_custom_call.1} parent=11 // pred_check
          %p314 = pneg %p150
        $region26: #{tpu_custom_call.1} parent=11 // pred_check_branch
          %316 = sbr.rel (%p314) target = $region28
        $region27: #{tpu_custom_call.1} parent=11 // pred_region
          _
        $region28: #{tpu_custom_call.1} parent=11 // pred_fallthru
          _
        // Predicated region
        $region29: #{tpu_custom_call.1} parent=11 // pred_check
          %p317 = pneg %p171
        $region30: #{tpu_custom_call.1} parent=11 // pred_check_branch
          %319 = sbr.rel (%p317) target = $region32
        $region31: #{tpu_custom_call.1} parent=11 // pred_region
          _
        $region32: #{tpu_custom_call.1} parent=11 // pred_fallthru
          _
        // Predicated region
        $region33: #{tpu_custom_call.1} parent=11 // pred_check
          %p320 = pneg %p192
        $region34: #{tpu_custom_call.1} parent=11 // pred_check_branch
          %322 = sbr.rel (%p320) target = $region36
        $region35: #{tpu_custom_call.1} parent=11 // pred_region
          _
        $region36: #{tpu_custom_call.1} parent=11 // pred_fallthru
          _
        // Predicated region
        $region37: #{tpu_custom_call.1} parent=11 // pred_check
          %p323 = pneg %p213
        $region38: #{tpu_custom_call.1} parent=11 // pred_check_branch
          %325 = sbr.rel (%p323) target = $region40
        $region39: #{tpu_custom_call.1} parent=11 // pred_region
          %s327 = ssub.s32 128, 128
          %328 = vsyncadd [#allocation7], %s327
          %s330 = sshll.u32 [#allocation6], 4
          %s331 = int_to_ptr.vmem [resolvable:$true] %s330
          %333 = dma.hbm_to_vmem [thread:$0]  %s7, 128, %s331, [#allocation7]
        $region40: #{tpu_custom_call.1} parent=11 // pred_fallthru
          _
        // Predicated region
        $region41: #{tpu_custom_call.1} parent=11 // pred_check
          %p334 = pneg %p234
        $region42: #{tpu_custom_call.1} parent=11 // pred_check_branch
          %336 = sbr.rel (%p334) target = $region44
        $region43: #{tpu_custom_call.1} parent=11 // pred_region
          _
        $region44: #{tpu_custom_call.1} parent=11 // pred_fallthru
          _
      $region12: #{tpu_custom_call.1} parent=5 // pred_fallthru
        _
      %p337 = scmp.lt.s32.totalorder %s26, 2
      // Predicated region
      $region45: #{tpu_custom_call.1} parent=5 // pred_check
        %p338 = pneg %p337
      $region46: #{tpu_custom_call.1} parent=5 // pred_check_branch
        %340 = sbr.rel (%p338) target = $region48
      $region47: #{tpu_custom_call.1} parent=5 // pred_region
        // Predicated region
        $region49: #{tpu_custom_call.1} parent=47 // pred_check
          %p341 = pneg %p60
        $region50: #{tpu_custom_call.1} parent=47 // pred_check_branch
          %343 = sbr.rel (%p341) target = $region52
        $region51: #{tpu_custom_call.1} parent=47 // pred_region
          %s344 = sand.u32 %s50, 1
          %s345 = scalar_lea.sflag [#allocation4], %s344
          %s346 = sand.u32 %s50, 1
          %s347 = smul.addr %s346, 64
          %s348 = scalar_lea.vmem [#allocation3], %s347
          %s349 = smul.u32 2, %s34
          %s351 = ssub.s32 1024, 1024
          %352 = vsyncadd %s345, %s351
          %s353 = smul.addr %s33, 16
          %s354 = sadd.s32 %s349, %s353
          %s355 = smul.addr %s354, 64
          %s356 = scalar_lea.hbm %s0, %s355
          %s357 = sshll.u32 %s348, 4
          %s358 = int_to_ptr.vmem [resolvable:$true] %s357
          %363 = dma.hbm_to_vmem [thread:$0]  %s356, 1024, %s358, %s345, 128, 128, 8
        $region52: #{tpu_custom_call.1} parent=47 // pred_fallthru
          _
      $region48: #{tpu_custom_call.1} parent=5 // pred_fallthru
        _
      %p364 = scmp.le.s32.totalorder 1, %s26
      %p365 = scmp.lt.s32.totalorder %s26, 3
      %p366 = pnand %p364, %p365
      %p367 = pneg %p366
      // Predicated region
      $region53: #{tpu_custom_call.1} parent=5 // pred_check
        _
      $region54: #{tpu_custom_call.1} parent=5 // pred_check_branch
        %369 = sbr.rel (%p366) target = $region56
      $region55: #{tpu_custom_call.1} parent=5 // pred_region
        %s370 = ssub.s32 %s26, 1
        %s371 = sand.u32 %s53, 1
        %s372 = scalar_lea.sflag [#allocation4], %s371
        %s373 = sand.u32 %s53, 1
        %s374 = smul.addr %s373, 64
        %s375 = scalar_lea.vmem [#allocation3], %s374
        // Predicated region
        $region57: #{tpu_custom_call.1} parent=55 // pred_check
          %p376 = pneg %p66
        $region58: #{tpu_custom_call.1} parent=55 // pred_check_branch
          %378 = sbr.rel (%p376) target = $region60
        $region59: #{tpu_custom_call.1} parent=55 // pred_region
          %379 = dma.done %s372, 1024
        $region60: #{tpu_custom_call.1} parent=55 // pred_fallthru
          _
        // Predicated region
        $region61: #{tpu_custom_call.1} parent=55 // pred_check
          %p380 = pneg %p213
        $region62: #{tpu_custom_call.1} parent=55 // pred_check_branch
          %382 = sbr.rel (%p380) target = $region64
        $region63: #{tpu_custom_call.1} parent=55 // pred_region
          %383 = dma.done [#allocation7], 128
        $region64: #{tpu_custom_call.1} parent=55 // pred_fallthru
          _
        %s384 = sand.u32 %s53, 1
        %s385 = scalar_lea.sflag [#allocation4], %s384
        %s386 = sand.u32 %s53, 1
        %s387 = smul.addr %s386, 64
        %s388 = scalar_lea.vmem [#allocation3], %s387
        %p389 = pneg %p66
        %p390 = pneg %p63
        %p391 = pneg %p87
        %p392 = pneg %p84
        %p393 = pneg %p108
        %p394 = pneg %p105
        %p395 = pneg %p129
        %p396 = pneg %p126
        %p397 = pneg %p150
        %p398 = pneg %p147
        %p399 = pneg %p171
        %p400 = pneg %p168
        %p401 = pneg %p192
        %p402 = pneg %p189
        %p403 = pneg %p213
        %p404 = pneg %p210
        %p405 = pneg %p234
        %p406 = pneg %p231
        %p407 = pneg %p262
        %p408 = pneg %p259
        %s409 = sand.u32 %s249, 1
        %s410 = scalar_lea.sflag [#allocation5], %s409
        %s411 = sand.u32 %s249, 1
        %s412 = smul.addr %s411, 2
        %s413 = scalar_lea.vmem [#allocation8], %s412
        %p414 = pneg %p290
        %p415 = pneg %p287
        %s416 = smul.u32 8, %s36
        %p417 = scmp.lt.s32.totalorder %s35, 1
        %s418 = scalar_select %p417, %s35, 1
        %p419 = scmp.lt.s32.totalorder %s416, 7
        %s420 = scalar_select %p419, %s416, 7
        %s421 = smul.addr %s420, 64
        %s422 = smul.addr %s418, 512
        %s423 = sadd.s32 %s421, %s422
        %s424 = smul.addr %s423, 4
        %s425 = scalar_lea.vmem %s10, %s424
        %s426 = smul.u32 2, %s36
        %s427 = smul.u32 2, %s36
        %s428 = smul.u32 8, %s36
        %p429 = scmp.lt.s32.totalorder %s35, 1
        %s430 = scalar_select %p429, %s35, 1
        %p431 = scmp.lt.s32.totalorder %s428, 7
        %s432 = scalar_select %p431, %s428, 7
        %s433 = smul.addr %s432, 64
        %s434 = smul.addr %s430, 512
        %s435 = sadd.s32 %s433, %s434
        %s436 = smul.addr %s435, 4
        %s437 = scalar_lea.vmem %s10, %s436
        %s438 = smul.u32 8, %s36
        %v440 = vld [vmem:[%s375] sm:$0xff]
        %v441 = vld [vmem:[%s375 + $0x8] sm:$0xff]
        %v442 = vld [vmem:[%s375 + $0x10] sm:$0xff]
        %v443 = vld [vmem:[%s375 + $0x18] sm:$0xff]
        %v444 = vld [vmem:[%s375 + $0x20] sm:$0xff]
        %v445 = vld [vmem:[%s375 + $0x28] sm:$0xff]
        %v446 = vld [vmem:[%s375 + $0x30] sm:$0xff]
        %v447 = vld [vmem:[%s375 + $0x38] sm:$0xff]
        %v448 = vunpack.c.l.bf16 %v440
        %v449 = vunpack.c.h.bf16 %v440
        %v450 = vunpack.c.l.bf16 %v441
        %v451 = vunpack.c.h.bf16 %v441
        %v452 = vunpack.c.l.bf16 %v442
        %v453 = vunpack.c.h.bf16 %v442
        %v454 = vunpack.c.l.bf16 %v443
        %v455 = vunpack.c.h.bf16 %v443
        %v456 = vunpack.c.l.bf16 %v444
        %v457 = vunpack.c.h.bf16 %v444
        %v458 = vunpack.c.l.bf16 %v445
        %v459 = vunpack.c.h.bf16 %v445
        %v460 = vunpack.c.l.bf16 %v446
        %v461 = vunpack.c.h.bf16 %v446
        %v462 = vunpack.c.l.bf16 %v447
        %v463 = vunpack.c.h.bf16 %v447
        %v464 = vadd.f32 %v448, %v450
        %v465 = vadd.f32 %v464, %v452
        %v466 = vadd.f32 %v465, %v454
        %v467 = vadd.f32 %v466, %v456
        %v468 = vadd.f32 %v467, %v458
        %v469 = vadd.f32 %v468, %v460
        %v470 = vadd.f32 %v469, %v462
        %v471 = vrot.slane %v470, 4
        %v472 = vadd.f32 %v470, %v471
        %v473 = vrot.slane %v472, 2
        %v474 = vadd.f32 %v472, %v473
        %v475 = vrot.slane %v474, 1
        %v476 = vadd.f32 %v474, %v475
        %v477 = vadd.f32 %v449, %v451
        %v478 = vadd.f32 %v477, %v453
        %v479 = vadd.f32 %v478, %v455
        %v480 = vadd.f32 %v479, %v457
        %v481 = vadd.f32 %v480, %v459
        %v482 = vadd.f32 %v481, %v461
        %v483 = vadd.f32 %v482, %v463
        %v484 = vrot.slane %v483, 4
        %v485 = vadd.f32 %v483, %v484
        %v486 = vrot.slane %v485, 2
        %v487 = vadd.f32 %v485, %v486
        %v488 = vrot.slane %v487, 1
        %v489 = vadd.f32 %v487, %v488
        %v490 = vrcp.pop 64.0
        %v491 = vmul.f32 %v476, %v490
        %v492 = vmul.f32 %v489, %v490
        %v493 = vsub.f32 %v448, %v491
        %v494 = vsub.f32 %v449, %v492
        %v495 = vsub.f32 %v450, %v491
        %v496 = vsub.f32 %v451, %v492
        %v497 = vsub.f32 %v452, %v491
        %v498 = vsub.f32 %v453, %v492
        %v499 = vsub.f32 %v454, %v491
        %v500 = vsub.f32 %v455, %v492
        %v501 = vsub.f32 %v456, %v491
        %v502 = vsub.f32 %v457, %v492
        %v503 = vsub.f32 %v458, %v491
        %v504 = vsub.f32 %v459, %v492
        %v505 = vsub.f32 %v460, %v491
        %v506 = vsub.f32 %v461, %v492
        %v507 = vsub.f32 %v462, %v491
        %v508 = vsub.f32 %v463, %v492
        %v509 = vmul.f32 %v493, %v493
        %v510 = vmul.f32 %v494, %v494
        %v511 = vmul.f32 %v495, %v495
        %v512 = vmul.f32 %v496, %v496
        %v513 = vmul.f32 %v497, %v497
        %v514 = vmul.f32 %v498, %v498
        %v515 = vmul.f32 %v499, %v499
        %v516 = vmul.f32 %v500, %v500
        %v517 = vmul.f32 %v501, %v501
        %v518 = vmul.f32 %v502, %v502
        %v519 = vmul.f32 %v503, %v503
        %v520 = vmul.f32 %v504, %v504
        %v521 = vmul.f32 %v505, %v505
        %v522 = vmul.f32 %v506, %v506
        %v523 = vmul.f32 %v507, %v507
        %v524 = vmul.f32 %v508, %v508
        %v525 = vadd.f32 %v509, %v511
        %v526 = vadd.f32 %v525, %v513
        %v527 = vadd.f32 %v526, %v515
        %v528 = vadd.f32 %v527, %v517
        %v529 = vadd.f32 %v528, %v519
        %v530 = vadd.f32 %v529, %v521
        %v531 = vadd.f32 %v530, %v523
        %v532 = vrot.slane %v531, 4
        %v533 = vadd.f32 %v531, %v532
        %v534 = vrot.slane %v533, 2
        %v535 = vadd.f32 %v533, %v534
        %v536 = vrot.slane %v535, 1
        %v537 = vadd.f32 %v535, %v536
        %v538 = vadd.f32 %v510, %v512
        %v539 = vadd.f32 %v538, %v514
        %v540 = vadd.f32 %v539, %v516
        %v541 = vadd.f32 %v540, %v518
        %v542 = vadd.f32 %v541, %v520
        %v543 = vadd.f32 %v542, %v522
        %v544 = vadd.f32 %v543, %v524
        %v545 = vrot.slane %v544, 4
        %v546 = vadd.f32 %v544, %v545
        %v547 = vrot.slane %v546, 2
        %v548 = vadd.f32 %v546, %v547
        %v549 = vrot.slane %v548, 1
        %v550 = vadd.f32 %v548, %v549
        %v551 = vmul.f32 %v537, %v490
        %v552 = vmul.f32 %v550, %v490
        %v553 = vadd.f32 %v551, 1e-05
        %v554 = vadd.f32 %v552, 1e-05
        %v555 = vrsqrt.pop %v553
        %v556 = vrsqrt.pop %v554
        %v557 = vmul.f32 %v493, %v555
        %v558 = vmul.f32 %v494, %v556
        %v559 = vmul.f32 %v495, %v555
        %v560 = vmul.f32 %v496, %v556
        %v561 = vmul.f32 %v497, %v555
        %v562 = vmul.f32 %v498, %v556
        %v563 = vmul.f32 %v499, %v555
        %v564 = vmul.f32 %v500, %v556
        %v565 = vmul.f32 %v501, %v555
        %v566 = vmul.f32 %v502, %v556
        %v567 = vmul.f32 %v503, %v555
        %v568 = vmul.f32 %v504, %v556
        %v569 = vmul.f32 %v505, %v555
        %v570 = vmul.f32 %v506, %v556
        %v571 = vmul.f32 %v507, %v555
        %v572 = vmul.f32 %v508, %v556
        %v573 = vld [vmem:[%s1] sm:$0xff]
        %v574 = vld [vmem:[%s1 + $0x8] sm:$0xff]
        %v575 = vld [vmem:[%s1 + $0x10] sm:$0xff]
        %v576 = vld [vmem:[%s1 + $0x18] sm:$0xff]
        %v577 = vld [vmem:[%s1 + $0x20] sm:$0xff]
        %v578 = vld [vmem:[%s1 + $0x28] sm:$0xff]
        %v579 = vld [vmem:[%s1 + $0x30] sm:$0xff]
        %v580 = vld [vmem:[%s1 + $0x38] sm:$0xff]
        %582 = vset.pattern.permute.xlu0 0
        %583 = vperm.xlu0 %582, %v573
        %v584 = vpop.permute.xlu0 %583
        %587 = vset.pattern.permute.xlu0 0
        %588 = vperm.xlu0 %587, %v574
        %v589 = vpop.permute.xlu0 %588
        %592 = vset.pattern.permute.xlu0 0
        %593 = vperm.xlu0 %592, %v575
        %v594 = vpop.permute.xlu0 %593
        %597 = vset.pattern.permute.xlu0 0
        %598 = vperm.xlu0 %597, %v576
        %v599 = vpop.permute.xlu0 %598
        %602 = vset.pattern.permute.xlu0 0
        %603 = vperm.xlu0 %602, %v577
        %v604 = vpop.permute.xlu0 %603
        %607 = vset.pattern.permute.xlu0 0
        %608 = vperm.xlu0 %607, %v578
        %v609 = vpop.permute.xlu0 %608
        %612 = vset.pattern.permute.xlu0 0
        %613 = vperm.xlu0 %612, %v579
        %v614 = vpop.permute.xlu0 %613
        %617 = vset.pattern.permute.xlu0 0
        %618 = vperm.xlu0 %617, %v580
        %v619 = vpop.permute.xlu0 %618
        %v621 = vmul.f32 %v557, %v584
        %v622 = vmul.f32 %v558, %v584
        %v623 = vmul.f32 %v559, %v589
        %v624 = vmul.f32 %v560, %v589
        %v625 = vmul.f32 %v561, %v594
        %v626 = vmul.f32 %v562, %v594
        %v627 = vmul.f32 %v563, %v599
        %v628 = vmul.f32 %v564, %v599
        %v629 = vmul.f32 %v565, %v604
        %v630 = vmul.f32 %v566, %v604
        %v631 = vmul.f32 %v567, %v609
        %v632 = vmul.f32 %v568, %v609
        %v633 = vmul.f32 %v569, %v614
        %v634 = vmul.f32 %v570, %v614
        %v635 = vmul.f32 %v571, %v619
        %v636 = vmul.f32 %v572, %v619
        %v637 = vld [vmem:[%s2] sm:$0xff]
        %v638 = vld [vmem:[%s2 + $0x8] sm:$0xff]
        %v639 = vld [vmem:[%s2 + $0x10] sm:$0xff]
        %v640 = vld [vmem:[%s2 + $0x18] sm:$0xff]
        %v641 = vld [vmem:[%s2 + $0x20] sm:$0xff]
        %v642 = vld [vmem:[%s2 + $0x28] sm:$0xff]
        %v643 = vld [vmem:[%s2 + $0x30] sm:$0xff]
        %v644 = vld [vmem:[%s2 + $0x38] sm:$0xff]
        %646 = vset.pattern.permute.xlu0 0
        %647 = vperm.xlu0 %646, %v637
        %v648 = vpop.permute.xlu0 %647
        %651 = vset.pattern.permute.xlu0 0
        %652 = vperm.xlu0 %651, %v638
        %v653 = vpop.permute.xlu0 %652
        %656 = vset.pattern.permute.xlu0 0
        %657 = vperm.xlu0 %656, %v639
        %v658 = vpop.permute.xlu0 %657
        %661 = vset.pattern.permute.xlu0 0
        %662 = vperm.xlu0 %661, %v640
        %v663 = vpop.permute.xlu0 %662
        %666 = vset.pattern.permute.xlu0 0
        %667 = vperm.xlu0 %666, %v641
        %v668 = vpop.permute.xlu0 %667
        %671 = vset.pattern.permute.xlu0 0
        %672 = vperm.xlu0 %671, %v642
        %v673 = vpop.permute.xlu0 %672
        %676 = vset.pattern.permute.xlu0 0
        %677 = vperm.xlu0 %676, %v643
        %v678 = vpop.permute.xlu0 %677
        %681 = vset.pattern.permute.xlu0 0
        %682 = vperm.xlu0 %681, %v644
        %v683 = vpop.permute.xlu0 %682
        %v685 = vadd.f32 %v621, %v648
        %v686 = vadd.f32 %v622, %v648
        %v687 = vadd.f32 %v623, %v653
        %v688 = vadd.f32 %v624, %v653
        %v689 = vadd.f32 %v625, %v658
        %v690 = vadd.f32 %v626, %v658
        %v691 = vadd.f32 %v627, %v663
        %v692 = vadd.f32 %v628, %v663
        %v693 = vadd.f32 %v629, %v668
        %v694 = vadd.f32 %v630, %v668
        %v695 = vadd.f32 %v631, %v673
        %v696 = vadd.f32 %v632, %v673
        %v697 = vadd.f32 %v633, %v678
        %v698 = vadd.f32 %v634, %v678
        %v699 = vadd.f32 %v635, %v683
        %v700 = vadd.f32 %v636, %v683
        %v701 = vpack.c.bf16 %v687, %v685
        %v702 = vpack.c.bf16 %v688, %v686
        %v703 = vpack.c.bf16 %v691, %v689
        %v704 = vpack.c.bf16 %v692, %v690
        %v705 = vpack.c.bf16 %v695, %v693
        %v706 = vpack.c.bf16 %v696, %v694
        %v707 = vpack.c.bf16 %v699, %v697
        %v708 = vpack.c.bf16 %v700, %v698
        %v709 = vld [vmem:[%s5] sm:$0xf]
        %v710 = vld [vmem:[%s5 + $0x4] sm:$0xf]
        %v711 = vld [vmem:[%s5 + $0x8] sm:$0xf]
        %v712 = vld [vmem:[%s5 + $0xc] sm:$0xf]
        %v713 = vld [vmem:[%s5 + $0x10] sm:$0xf]
        %v714 = vld [vmem:[%s5 + $0x14] sm:$0xf]
        %v715 = vld [vmem:[%s5 + $0x18] sm:$0xf]
        %v716 = vld [vmem:[%s5 + $0x1c] sm:$0xf]
        %v717 = vld [vmem:[%s5 + $0x20] sm:$0xf]
        %v718 = vld [vmem:[%s5 + $0x24] sm:$0xf]
        %v719 = vld [vmem:[%s5 + $0x28] sm:$0xf]
        %v720 = vld [vmem:[%s5 + $0x2c] sm:$0xf]
        %v721 = vld [vmem:[%s5 + $0x30] sm:$0xf]
        %v722 = vld [vmem:[%s5 + $0x34] sm:$0xf]
        %v723 = vld [vmem:[%s5 + $0x38] sm:$0xf]
        %v724 = vld [vmem:[%s5 + $0x3c] sm:$0xf]
        %v725 = vld [vmem:[%s5 + $0x40] sm:$0xf]
        %v726 = vld [vmem:[%s5 + $0x44] sm:$0xf]
        %v727 = vld [vmem:[%s5 + $0x48] sm:$0xf]
        %v728 = vld [vmem:[%s5 + $0x4c] sm:$0xf]
        %v729 = vld [vmem:[%s5 + $0x50] sm:$0xf]
        %v730 = vld [vmem:[%s5 + $0x54] sm:$0xf]
        %v731 = vld [vmem:[%s5 + $0x58] sm:$0xf]
        %v732 = vld [vmem:[%s5 + $0x5c] sm:$0xf]
        %v733 = vld [vmem:[%s5 + $0x60] sm:$0xf]
        %v734 = vld [vmem:[%s5 + $0x64] sm:$0xf]
        %v735 = vld [vmem:[%s5 + $0x68] sm:$0xf]
        %v736 = vld [vmem:[%s5 + $0x6c] sm:$0xf]
        %v737 = vld [vmem:[%s5 + $0x70] sm:$0xf]
        %v738 = vld [vmem:[%s5 + $0x74] sm:$0xf]
        %v739 = vld [vmem:[%s5 + $0x78] sm:$0xf]
        %v740 = vld [vmem:[%s5 + $0x7c] sm:$0xf]
        %v741 = vld [vmem:[%s6] sm:$0xff]
        %v742 = vld [vmem:[%s6 + $0x8] sm:$0xff]
        %v743 = vld [vmem:[%s6 + $0x10] sm:$0xff]
        %v744 = vld [vmem:[%s6 + $0x18] sm:$0xff]
        %v745 = vld [vmem:[%s6 + $0x20] sm:$0xff]
        %v746 = vld [vmem:[%s6 + $0x28] sm:$0xff]
        %v747 = vld [vmem:[%s6 + $0x30] sm:$0xff]
        %v748 = vld [vmem:[%s6 + $0x38] sm:$0xff]
        %v749 = vld [vmem:[%s6 + $0x40] sm:$0xff]
        %v750 = vld [vmem:[%s6 + $0x48] sm:$0xff]
        %v751 = vld [vmem:[%s6 + $0x50] sm:$0xff]
        %v752 = vld [vmem:[%s6 + $0x58] sm:$0xff]
        %v753 = vld [vmem:[%s6 + $0x60] sm:$0xff]
        %v754 = vld [vmem:[%s6 + $0x68] sm:$0xff]
        %v755 = vld [vmem:[%s6 + $0x70] sm:$0xff]
        %v756 = vld [vmem:[%s6 + $0x78] sm:$0xff]
        %v757 = vld [vmem:[%s6 + $0x80] sm:$0xff]
        %v758 = vld [vmem:[%s6 + $0x88] sm:$0xff]
        %v759 = vld [vmem:[%s6 + $0x90] sm:$0xff]
        %v760 = vld [vmem:[%s6 + $0x98] sm:$0xff]
        %v761 = vld [vmem:[%s6 + $0xa0] sm:$0xff]
        %v762 = vld [vmem:[%s6 + $0xa8] sm:$0xff]
        %v763 = vld [vmem:[%s6 + $0xb0] sm:$0xff]
        %v764 = vld [vmem:[%s6 + $0xb8] sm:$0xff]
        %v765 = vld [vmem:[%s6 + $0xc0] sm:$0xff]
        %v766 = vld [vmem:[%s6 + $0xc8] sm:$0xff]
        %v767 = vld [vmem:[%s6 + $0xd0] sm:$0xff]
        %v768 = vld [vmem:[%s6 + $0xd8] sm:$0xff]
        %v769 = vld [vmem:[%s6 + $0xe0] sm:$0xff]
        %v770 = vld [vmem:[%s6 + $0xe8] sm:$0xff]
        %v771 = vld [vmem:[%s6 + $0xf0] sm:$0xff]
        %v772 = vld [vmem:[%s6 + $0xf8] sm:$0xff]
        %774 = vset.pattern.permute.xlu0 0
        %775 = vperm.xlu0 %774, %v741
        %v776 = vpop.permute.xlu0 %775
        %779 = vset.pattern.permute.xlu0 0
        %780 = vperm.xlu0 %779, %v742
        %v781 = vpop.permute.xlu0 %780
        %784 = vset.pattern.permute.xlu0 0
        %785 = vperm.xlu0 %784, %v743
        %v786 = vpop.permute.xlu0 %785
        %789 = vset.pattern.permute.xlu0 0
        %790 = vperm.xlu0 %789, %v744
        %v791 = vpop.permute.xlu0 %790
        %794 = vset.pattern.permute.xlu0 0
        %795 = vperm.xlu0 %794, %v745
        %v796 = vpop.permute.xlu0 %795
        %799 = vset.pattern.permute.xlu0 0
        %800 = vperm.xlu0 %799, %v746
        %v801 = vpop.permute.xlu0 %800
        %804 = vset.pattern.permute.xlu0 0
        %805 = vperm.xlu0 %804, %v747
        %v806 = vpop.permute.xlu0 %805
        %809 = vset.pattern.permute.xlu0 0
        %810 = vperm.xlu0 %809, %v748
        %v811 = vpop.permute.xlu0 %810
        %814 = vset.pattern.permute.xlu0 0
        %815 = vperm.xlu0 %814, %v749
        %v816 = vpop.permute.xlu0 %815
        %819 = vset.pattern.permute.xlu0 0
        %820 = vperm.xlu0 %819, %v750
        %v821 = vpop.permute.xlu0 %820
        %824 = vset.pattern.permute.xlu0 0
        %825 = vperm.xlu0 %824, %v751
        %v826 = vpop.permute.xlu0 %825
        %829 = vset.pattern.permute.xlu0 0
        %830 = vperm.xlu0 %829, %v752
        %v831 = vpop.permute.xlu0 %830
        %834 = vset.pattern.permute.xlu0 0
        %835 = vperm.xlu0 %834, %v753
        %v836 = vpop.permute.xlu0 %835
        %839 = vset.pattern.permute.xlu0 0
        %840 = vperm.xlu0 %839, %v754
        %v841 = vpop.permute.xlu0 %840
        %844 = vset.pattern.permute.xlu0 0
        %845 = vperm.xlu0 %844, %v755
        %v846 = vpop.permute.xlu0 %845
        %849 = vset.pattern.permute.xlu0 0
        %850 = vperm.xlu0 %849, %v756
        %v851 = vpop.permute.xlu0 %850
        %854 = vset.pattern.permute.xlu0 0
        %855 = vperm.xlu0 %854, %v757
        %v856 = vpop.permute.xlu0 %855
        %859 = vset.pattern.permute.xlu0 0
        %860 = vperm.xlu0 %859, %v758
        %v861 = vpop.permute.xlu0 %860
        %864 = vset.pattern.permute.xlu0 0
        %865 = vperm.xlu0 %864, %v759
        %v866 = vpop.permute.xlu0 %865
        %869 = vset.pattern.permute.xlu0 0
        %870 = vperm.xlu0 %869, %v760
        %v871 = vpop.permute.xlu0 %870
        %874 = vset.pattern.permute.xlu0 0
        %875 = vperm.xlu0 %874, %v761
        %v876 = vpop.permute.xlu0 %875
        %879 = vset.pattern.permute.xlu0 0
        %880 = vperm.xlu0 %879, %v762
        %v881 = vpop.permute.xlu0 %880
        %884 = vset.pattern.permute.xlu0 0
        %885 = vperm.xlu0 %884, %v763
        %v886 = vpop.permute.xlu0 %885
        %889 = vset.pattern.permute.xlu0 0
        %890 = vperm.xlu0 %889, %v764
        %v891 = vpop.permute.xlu0 %890
        %894 = vset.pattern.permute.xlu0 0
        %895 = vperm.xlu0 %894, %v765
        %v896 = vpop.permute.xlu0 %895
        %899 = vset.pattern.permute.xlu0 0
        %900 = vperm.xlu0 %899, %v766
        %v901 = vpop.permute.xlu0 %900
        %904 = vset.pattern.permute.xlu0 0
        %905 = vperm.xlu0 %904, %v767
        %v906 = vpop.permute.xlu0 %905
        %909 = vset.pattern.permute.xlu0 0
        %910 = vperm.xlu0 %909, %v768
        %v911 = vpop.permute.xlu0 %910
        %914 = vset.pattern.permute.xlu0 0
        %915 = vperm.xlu0 %914, %v769
        %v916 = vpop.permute.xlu0 %915
        %919 = vset.pattern.permute.xlu0 0
        %920 = vperm.xlu0 %919, %v770
        %v921 = vpop.permute.xlu0 %920
        %924 = vset.pattern.permute.xlu0 0
        %925 = vperm.xlu0 %924, %v771
        %v926 = vpop.permute.xlu0 %925
        %929 = vset.pattern.permute.xlu0 0
        %930 = vperm.xlu0 %929, %v772
        %v931 = vpop.permute.xlu0 %930
        %v965 = vunpack.c.l.b16 %v709
        %v966 = vunpack.c.l.b16 %v710
        %v967 = vunpack.c.l.b16 %v711
        %v968 = vunpack.c.l.b16 %v712
        %v969 = vunpack.c.l.b16 %v713
        %v970 = vunpack.c.l.b16 %v714
        %v971 = vunpack.c.l.b16 %v715
        %v972 = vunpack.c.l.b16 %v716
        %v973 = vunpack.c.l.b16 %v717
        %v974 = vunpack.c.l.b16 %v718
        %v975 = vunpack.c.l.b16 %v719
        %v976 = vunpack.c.l.b16 %v720
        %v977 = vunpack.c.l.b16 %v721
        %v978 = vunpack.c.l.b16 %v722
        %v979 = vunpack.c.l.b16 %v723
        %v980 = vunpack.c.l.b16 %v724
        %v981 = vunpack.c.l.b16 %v725
        %v982 = vunpack.c.l.b16 %v726
        %v983 = vunpack.c.l.b16 %v727
        %v984 = vunpack.c.l.b16 %v728
        %v985 = vunpack.c.l.b16 %v729
        %v986 = vunpack.c.l.b16 %v730
        %v987 = vunpack.c.l.b16 %v731
        %v988 = vunpack.c.l.b16 %v732
        %v989 = vunpack.c.l.b16 %v733
        %v990 = vunpack.c.l.b16 %v734
        %v991 = vunpack.c.l.b16 %v735
        %v992 = vunpack.c.l.b16 %v736
        %v993 = vunpack.c.l.b16 %v737
        %v994 = vunpack.c.l.b16 %v738
        %v995 = vunpack.c.l.b16 %v739
        %v996 = vunpack.c.l.b16 %v740
        %v997 = vpack.c.b16 %v966, %v965
        %v998 = vpack.c.b16 %v968, %v967
        %v999 = vpack.c.b16 %v970, %v969
        %v1000 = vpack.c.b16 %v972, %v971
        %v1001 = vpack.c.b16 %v974, %v973
        %v1002 = vpack.c.b16 %v976, %v975
        %v1003 = vpack.c.b16 %v978, %v977
        %v1004 = vpack.c.b16 %v980, %v979
        %v1005 = vpack.c.b16 %v982, %v981
        %v1006 = vpack.c.b16 %v984, %v983
        %v1007 = vpack.c.b16 %v986, %v985
        %v1008 = vpack.c.b16 %v988, %v987
        %v1009 = vpack.c.b16 %v990, %v989
        %v1010 = vpack.c.b16 %v992, %v991
        %v1011 = vpack.c.b16 %v994, %v993
        %v1012 = vpack.c.b16 %v996, %v995
        %vm1013 = vcmask 523264
        %v1015 = vsel %vm1013, %v997, 0
        %v1018 = vsel %vm1013, %v998, 0
        %v1021 = vsel %vm1013, %v999, 0
        %v1024 = vsel %vm1013, %v1000, 0
        %v1027 = vsel %vm1013, %v1001, 0
        %v1030 = vsel %vm1013, %v1002, 0
        %v1033 = vsel %vm1013, %v1003, 0
        %v1036 = vsel %vm1013, %v1004, 0
        %v1039 = vsel %vm1013, %v1005, 0
        %v1042 = vsel %vm1013, %v1006, 0
        %v1045 = vsel %vm1013, %v1007, 0
        %v1048 = vsel %vm1013, %v1008, 0
        %v1051 = vsel %vm1013, %v1009, 0
        %v1054 = vsel %vm1013, %v1010, 0
        %v1057 = vsel %vm1013, %v1011, 0
        %v1060 = vsel %vm1013, %v1012, 0
        %1062 = vmatprep.subr.bf16.mxu0 %v702
        %1063 = vmatpush1.bf16.msra.mxu0 %v701
        %1064 = vmatprep.subr.bf16.mxu0 %v704
        %1065 = vmatpush1.bf16.msra.mxu0 %v703
        %1066 = vmatprep.subr.bf16.mxu0 %v706
        %1067 = vmatpush1.bf16.msra.mxu0 %v705
        %1068 = vmatprep.subr.bf16.mxu0 %v708
        %1069 = vmatpush1.bf16.msra.mxu0 %v707
        %1070 = vmatprep.subr.bf16.mxu0 0
        %1071 = vmatpush1.bf16.msra.mxu0 0
        %1072 = vmatprep.subr.bf16.mxu0 0
        %1073 = vmatpush1.bf16.msra.mxu0 0
        %1074 = vmatprep.subr.bf16.mxu0 0
        %1075 = vmatpush1.bf16.msra.mxu0 0
        %1076 = vmatprep.subr.bf16.mxu0 0
        %1077 = vmatpush1.bf16.msra.mxu0 0
        %1078 = vmatprep.subr.bf16.mxu0 0
        %1079 = vmatpush1.bf16.msra.mxu0 0
        %1080 = vmatprep.subr.bf16.mxu0 0
        %1081 = vmatpush1.bf16.msra.mxu0 0
        %1082 = vmatprep.subr.bf16.mxu0 0
        %1083 = vmatpush1.bf16.msra.mxu0 0
        %1084 = vmatprep.subr.bf16.mxu0 0
        %1085 = vmatpush1.bf16.msra.mxu0 0
        %1086 = vmatprep.subr.bf16.mxu0 0
        %1087 = vmatpush1.bf16.msra.mxu0 0
        %1088 = vmatprep.subr.bf16.mxu0 0
        %1089 = vmatpush1.bf16.msra.mxu0 0
        %1090 = vmatprep.subr.bf16.mxu0 0
        %1091 = vmatpush1.bf16.msra.mxu0 0
        %1092 = vmatprep.subr.bf16.mxu0 0
        %1093 = vmatpush1.bf16.msra.mxu0 0
        %1094 = vmatprep.mubr.bf16.mxu0 0
        %1095 = vmatmul.mubr.bf16.gmra.mrb[0].mxu0 %v1015
        %v1096 = vpop.f32.mrb[0].mxu0
        %v1097 = vadd.f32 %v776, %v1096
        %v1098 = vpop.f32.mrb[0].mxu0
        %v1099 = vadd.f32 %v776, %v1098
        %v1100 = vpop.f32.mrb[0].mxu0
        %v1101 = vadd.f32 %v781, %v1100
        %v1102 = vpop.f32.mrb[0].mxu0
        %v1103 = vadd.f32 %v781, %v1102
        %1104 = vmatprep.mubr.bf16.mxu0 0
        %1105 = vmatmul.mubr.bf16.gmra.mrb[0].mxu0 %v1018
        %v1106 = vpop.f32.mrb[0].mxu0
        %v1107 = vadd.f32 %v786, %v1106
        %v1108 = vpop.f32.mrb[0].mxu0
        %v1109 = vadd.f32 %v786, %v1108
        %v1110 = vpop.f32.mrb[0].mxu0
        %v1111 = vadd.f32 %v791, %v1110
        %v1112 = vpop.f32.mrb[0].mxu0
        %v1113 = vadd.f32 %v791, %v1112
        %1114 = vmatprep.mubr.bf16.mxu0 0
        %1115 = vmatmul.mubr.bf16.gmra.mrb[0].mxu0 %v1021
        %v1116 = vpop.f32.mrb[0].mxu0
        %v1117 = vadd.f32 %v796, %v1116
        %v1118 = vpop.f32.mrb[0].mxu0
        %v1119 = vadd.f32 %v796, %v1118
        %v1120 = vpop.f32.mrb[0].mxu0
        %v1121 = vadd.f32 %v801, %v1120
        %v1122 = vpop.f32.mrb[0].mxu0
        %v1123 = vadd.f32 %v801, %v1122
        %1124 = vmatprep.mubr.bf16.mxu0 0
        %1125 = vmatmul.mubr.bf16.gmra.mrb[0].mxu0 %v1024
        %v1126 = vpop.f32.mrb[0].mxu0
        %v1127 = vadd.f32 %v806, %v1126
        %v1128 = vpop.f32.mrb[0].mxu0
        %v1129 = vadd.f32 %v806, %v1128
        %v1130 = vpop.f32.mrb[0].mxu0
        %v1131 = vadd.f32 %v811, %v1130
        %v1132 = vpop.f32.mrb[0].mxu0
        %v1133 = vadd.f32 %v811, %v1132
        %1134 = vmatprep.mubr.bf16.mxu0 0
        %1135 = vmatmul.mubr.bf16.gmra.mrb[0].mxu0 %v1027
        %v1136 = vpop.f32.mrb[0].mxu0
        %v1137 = vadd.f32 %v816, %v1136
        %v1138 = vpop.f32.mrb[0].mxu0
        %v1139 = vadd.f32 %v816, %v1138
        %v1140 = vpop.f32.mrb[0].mxu0
        %v1141 = vadd.f32 %v821, %v1140
        %v1142 = vpop.f32.mrb[0].mxu0
        %v1143 = vadd.f32 %v821, %v1142
        %1144 = vmatprep.mubr.bf16.mxu0 0
        %1145 = vmatmul.mubr.bf16.gmra.mrb[0].mxu0 %v1030
        %v1146 = vpop.f32.mrb[0].mxu0
        %v1147 = vadd.f32 %v826, %v1146
        %v1148 = vpop.f32.mrb[0].mxu0
        %v1149 = vadd.f32 %v826, %v1148
        %v1150 = vpop.f32.mrb[0].mxu0
        %v1151 = vadd.f32 %v831, %v1150
        %v1152 = vpop.f32.mrb[0].mxu0
        %v1153 = vadd.f32 %v831, %v1152
        %1154 = vmatprep.mubr.bf16.mxu0 0
        %1155 = vmatmul.mubr.bf16.gmra.mrb[0].mxu0 %v1033
        %v1156 = vpop.f32.mrb[0].mxu0
        %v1157 = vadd.f32 %v836, %v1156
        %v1158 = vpop.f32.mrb[0].mxu0
        %v1159 = vadd.f32 %v836, %v1158
        %v1160 = vpop.f32.mrb[0].mxu0
        %v1161 = vadd.f32 %v841, %v1160
        %v1162 = vpop.f32.mrb[0].mxu0
        %v1163 = vadd.f32 %v841, %v1162
        %1164 = vmatprep.mubr.bf16.mxu0 0
        %1165 = vmatmul.mubr.bf16.gmra.mrb[0].mxu0 %v1036
        %v1166 = vpop.f32.mrb[0].mxu0
        %v1167 = vadd.f32 %v846, %v1166
        %v1168 = vpop.f32.mrb[0].mxu0
        %v1169 = vadd.f32 %v846, %v1168
        %v1170 = vpop.f32.mrb[0].mxu0
        %v1171 = vadd.f32 %v851, %v1170
        %v1172 = vpop.f32.mrb[0].mxu0
        %v1173 = vadd.f32 %v851, %v1172
        %1174 = vmatprep.mubr.bf16.mxu0 0
        %1175 = vmatmul.mubr.bf16.gmra.mrb[0].mxu0 %v1039
        %v1176 = vpop.f32.mrb[0].mxu0
        %v1177 = vadd.f32 %v856, %v1176
        %v1178 = vpop.f32.mrb[0].mxu0
        %v1179 = vadd.f32 %v856, %v1178
        %v1180 = vpop.f32.mrb[0].mxu0
        %v1181 = vadd.f32 %v861, %v1180
        %v1182 = vpop.f32.mrb[0].mxu0
        %v1183 = vadd.f32 %v861, %v1182
        %1184 = vmatprep.mubr.bf16.mxu0 0
        %1185 = vmatmul.mubr.bf16.gmra.mrb[0].mxu0 %v1042
        %v1186 = vpop.f32.mrb[0].mxu0
        %v1187 = vadd.f32 %v866, %v1186
        %v1188 = vpop.f32.mrb[0].mxu0
        %v1189 = vadd.f32 %v866, %v1188
        %v1190 = vpop.f32.mrb[0].mxu0
        %v1191 = vadd.f32 %v871, %v1190
        %v1192 = vpop.f32.mrb[0].mxu0
        %v1193 = vadd.f32 %v871, %v1192
        %1194 = vmatprep.mubr.bf16.mxu0 0
        %1195 = vmatmul.mubr.bf16.gmra.mrb[0].mxu0 %v1045
        %v1196 = vpop.f32.mrb[0].mxu0
        %v1197 = vadd.f32 %v876, %v1196
        %v1198 = vpop.f32.mrb[0].mxu0
        %v1199 = vadd.f32 %v876, %v1198
        %v1200 = vpop.f32.mrb[0].mxu0
        %v1201 = vadd.f32 %v881, %v1200
        %v1202 = vpop.f32.mrb[0].mxu0
        %v1203 = vadd.f32 %v881, %v1202
        %1204 = vmatprep.mubr.bf16.mxu0 0
        %1205 = vmatmul.mubr.bf16.gmra.mrb[0].mxu0 %v1048
        %v1206 = vpop.f32.mrb[0].mxu0
        %v1207 = vadd.f32 %v886, %v1206
        %v1208 = vpop.f32.mrb[0].mxu0
        %v1209 = vadd.f32 %v886, %v1208
        %v1210 = vpop.f32.mrb[0].mxu0
        %v1211 = vadd.f32 %v891, %v1210
        %v1212 = vpop.f32.mrb[0].mxu0
        %v1213 = vadd.f32 %v891, %v1212
        %1214 = vmatprep.mubr.bf16.mxu0 0
        %1215 = vmatmul.mubr.bf16.gmra.mrb[0].mxu0 %v1051
        %v1216 = vpop.f32.mrb[0].mxu0
        %v1217 = vadd.f32 %v896, %v1216
        %v1218 = vpop.f32.mrb[0].mxu0
        %v1219 = vadd.f32 %v896, %v1218
        %v1220 = vpop.f32.mrb[0].mxu0
        %v1221 = vadd.f32 %v901, %v1220
        %v1222 = vpop.f32.mrb[0].mxu0
        %v1223 = vadd.f32 %v901, %v1222
        %1224 = vmatprep.mubr.bf16.mxu0 0
        %1225 = vmatmul.mubr.bf16.gmra.mrb[0].mxu0 %v1054
        %v1226 = vpop.f32.mrb[0].mxu0
        %v1227 = vadd.f32 %v906, %v1226
        %v1228 = vpop.f32.mrb[0].mxu0
        %v1229 = vadd.f32 %v906, %v1228
        %v1230 = vpop.f32.mrb[0].mxu0
        %v1231 = vadd.f32 %v911, %v1230
        %v1232 = vpop.f32.mrb[0].mxu0
        %v1233 = vadd.f32 %v911, %v1232
        %1234 = vmatprep.mubr.bf16.mxu0 0
        %1235 = vmatmul.mubr.bf16.gmra.mrb[0].mxu0 %v1057
        %v1236 = vpop.f32.mrb[0].mxu0
        %v1237 = vadd.f32 %v916, %v1236
        %v1238 = vpop.f32.mrb[0].mxu0
        %v1239 = vadd.f32 %v916, %v1238
        %v1240 = vpop.f32.mrb[0].mxu0
        %v1241 = vadd.f32 %v921, %v1240
        %v1242 = vpop.f32.mrb[0].mxu0
        %v1243 = vadd.f32 %v921, %v1242
        %1244 = vmatprep.mubr.bf16.mxu0 0
        %1245 = vmatmul.mubr.bf16.gmra.mrb[0].mxu0 %v1060
        %v1246 = vpop.f32.mrb[0].mxu0
        %v1247 = vadd.f32 %v926, %v1246
        %v1248 = vpop.f32.mrb[0].mxu0
        %v1249 = vadd.f32 %v926, %v1248
        %v1250 = vpop.f32.mrb[0].mxu0
        %v1251 = vadd.f32 %v931, %v1250
        %v1252 = vpop.f32.mrb[0].mxu0
        %v1253 = vadd.f32 %v931, %v1252
        %1254 = vdwg.mxu0
        %v1255 = vmax.f32 %v1097, 0.0
        %v1256 = vmax.f32 %v1099, 0.0
        %v1257 = vmax.f32 %v1101, 0.0
        %v1258 = vmax.f32 %v1103, 0.0
        %v1259 = vmax.f32 %v1107, 0.0
        %v1260 = vmax.f32 %v1109, 0.0
        %v1261 = vmax.f32 %v1111, 0.0
        %v1262 = vmax.f32 %v1113, 0.0
        %v1263 = vmax.f32 %v1117, 0.0
        %v1264 = vmax.f32 %v1119, 0.0
        %v1265 = vmax.f32 %v1121, 0.0
        %v1266 = vmax.f32 %v1123, 0.0
        %v1267 = vmax.f32 %v1127, 0.0
        %v1268 = vmax.f32 %v1129, 0.0
        %v1269 = vmax.f32 %v1131, 0.0
        %v1270 = vmax.f32 %v1133, 0.0
        %v1271 = vmax.f32 %v1137, 0.0
        %v1272 = vmax.f32 %v1139, 0.0
        %v1273 = vmax.f32 %v1141, 0.0
        %v1274 = vmax.f32 %v1143, 0.0
        %v1275 = vmax.f32 %v1147, 0.0
        %v1276 = vmax.f32 %v1149, 0.0
        %v1277 = vmax.f32 %v1151, 0.0
        %v1278 = vmax.f32 %v1153, 0.0
        %v1279 = vmax.f32 %v1157, 0.0
        %v1280 = vmax.f32 %v1159, 0.0
        %v1281 = vmax.f32 %v1161, 0.0
        %v1282 = vmax.f32 %v1163, 0.0
        %v1283 = vmax.f32 %v1167, 0.0
        %v1284 = vmax.f32 %v1169, 0.0
        %v1285 = vmax.f32 %v1171, 0.0
        %v1286 = vmax.f32 %v1173, 0.0
        %v1287 = vmax.f32 %v1177, 0.0
        %v1288 = vmax.f32 %v1179, 0.0
        %v1289 = vmax.f32 %v1181, 0.0
        %v1290 = vmax.f32 %v1183, 0.0
        %v1291 = vmax.f32 %v1187, 0.0
        %v1292 = vmax.f32 %v1189, 0.0
        %v1293 = vmax.f32 %v1191, 0.0
        %v1294 = vmax.f32 %v1193, 0.0
        %v1295 = vmax.f32 %v1197, 0.0
        %v1296 = vmax.f32 %v1199, 0.0
        %v1297 = vmax.f32 %v1201, 0.0
        %v1298 = vmax.f32 %v1203, 0.0
        %v1299 = vmax.f32 %v1207, 0.0
        %v1300 = vmax.f32 %v1209, 0.0
        %v1301 = vmax.f32 %v1211, 0.0
        %v1302 = vmax.f32 %v1213, 0.0
        %v1303 = vmax.f32 %v1217, 0.0
        %v1304 = vmax.f32 %v1219, 0.0
        %v1305 = vmax.f32 %v1221, 0.0
        %v1306 = vmax.f32 %v1223, 0.0
        %v1307 = vmax.f32 %v1227, 0.0
        %v1308 = vmax.f32 %v1229, 0.0
        %v1309 = vmax.f32 %v1231, 0.0
        %v1310 = vmax.f32 %v1233, 0.0
        %v1311 = vmax.f32 %v1237, 0.0
        %v1312 = vmax.f32 %v1239, 0.0
        %v1313 = vmax.f32 %v1241, 0.0
        %v1314 = vmax.f32 %v1243, 0.0
        %v1315 = vmax.f32 %v1247, 0.0
        %v1316 = vmax.f32 %v1249, 0.0
        %v1317 = vmax.f32 %v1251, 0.0
        %v1318 = vmax.f32 %v1253, 0.0
        %v1319 = vpack.c.bf16 %v1257, %v1255
        %v1320 = vpack.c.bf16 %v1258, %v1256
        %v1321 = vpack.c.bf16 %v1261, %v1259
        %v1322 = vpack.c.bf16 %v1262, %v1260
        %v1323 = vpack.c.bf16 %v1265, %v1263
        %v1324 = vpack.c.bf16 %v1266, %v1264
        %v1325 = vpack.c.bf16 %v1269, %v1267
        %v1326 = vpack.c.bf16 %v1270, %v1268
        %v1327 = vpack.c.bf16 %v1273, %v1271
        %v1328 = vpack.c.bf16 %v1274, %v1272
        %v1329 = vpack.c.bf16 %v1277, %v1275
        %v1330 = vpack.c.bf16 %v1278, %v1276
        %v1331 = vpack.c.bf16 %v1281, %v1279
        %v1332 = vpack.c.bf16 %v1282, %v1280
        %v1333 = vpack.c.bf16 %v1285, %v1283
        %v1334 = vpack.c.bf16 %v1286, %v1284
        %v1335 = vpack.c.bf16 %v1289, %v1287
        %v1336 = vpack.c.bf16 %v1290, %v1288
        %v1337 = vpack.c.bf16 %v1293, %v1291
        %v1338 = vpack.c.bf16 %v1294, %v1292
        %v1339 = vpack.c.bf16 %v1297, %v1295
        %v1340 = vpack.c.bf16 %v1298, %v1296
        %v1341 = vpack.c.bf16 %v1301, %v1299
        %v1342 = vpack.c.bf16 %v1302, %v1300
        %v1343 = vpack.c.bf16 %v1305, %v1303
        %v1344 = vpack.c.bf16 %v1306, %v1304
        %v1345 = vpack.c.bf16 %v1309, %v1307
        %v1346 = vpack.c.bf16 %v1310, %v1308
        %v1347 = vpack.c.bf16 %v1313, %v1311
        %v1348 = vpack.c.bf16 %v1314, %v1312
        %v1349 = vpack.c.bf16 %v1317, %v1315
        %v1350 = vpack.c.bf16 %v1318, %v1316
        %v1351 = vld [vmem:[#allocation6] sm:$0xff]
        %v1353 = vunpack.c.l.b16 %v1351
        %v1354 = vunpack.c.h.b16 %v1351
        %v1355 = vpack.c.b16 %v1353, %v1353
        %v1356 = vpack.c.b16 %v1354, %v1354
        %1359 = vmatprep.subr.bf16.mxu0 %v1320
        %1360 = vmatpush1.bf16.msra.mxu0 %v1319
        %1361 = vmatprep.subr.bf16.mxu0 %v1322
        %1362 = vmatpush1.bf16.msra.mxu0 %v1321
        %1363 = vmatprep.subr.bf16.mxu0 %v1324
        %1364 = vmatpush1.bf16.msra.mxu0 %v1323
        %1365 = vmatprep.subr.bf16.mxu0 %v1326
        %1366 = vmatpush1.bf16.msra.mxu0 %v1325
        %1367 = vmatprep.subr.bf16.mxu0 %v1328
        %1368 = vmatpush1.bf16.msra.mxu0 %v1327
        %1369 = vmatprep.subr.bf16.mxu0 %v1330
        %1370 = vmatpush1.bf16.msra.mxu0 %v1329
        %1371 = vmatprep.subr.bf16.mxu0 %v1332
        %1372 = vmatpush1.bf16.msra.mxu0 %v1331
        %1373 = vmatprep.subr.bf16.mxu0 %v1334
        %1374 = vmatpush1.bf16.msra.mxu0 %v1333
        %1375 = vmatprep.subr.bf16.mxu0 %v1336
        %1376 = vmatpush1.bf16.msra.mxu0 %v1335
        %1377 = vmatprep.subr.bf16.mxu0 %v1338
        %1378 = vmatpush1.bf16.msra.mxu0 %v1337
        %1379 = vmatprep.subr.bf16.mxu0 %v1340
        %1380 = vmatpush1.bf16.msra.mxu0 %v1339
        %1381 = vmatprep.subr.bf16.mxu0 %v1342
        %1382 = vmatpush1.bf16.msra.mxu0 %v1341
        %1383 = vmatprep.subr.bf16.mxu0 %v1344
        %1384 = vmatpush1.bf16.msra.mxu0 %v1343
        %1385 = vmatprep.subr.bf16.mxu0 %v1346
        %1386 = vmatpush1.bf16.msra.mxu0 %v1345
        %1387 = vmatprep.subr.bf16.mxu0 %v1348
        %1388 = vmatpush1.bf16.msra.mxu0 %v1347
        %1389 = vmatprep.subr.bf16.mxu0 %v1350
        %1390 = vmatpush1.bf16.msra.mxu0 %v1349
        %1391 = vmatprep.mubr.bf16.mxu0 %v1356
        %1392 = vmatmul.mubr.bf16.gmra.mrb[0].mxu0 %v1355
        %v1393 = vpop.f32.mrb[0].mxu0
        %v1394 = vadd.f32 0.0, %v1393
        %v1395 = vpop.f32.mrb[0].mxu0
        %v1396 = vadd.f32 0.0, %v1395
        %v1397 = vpop.f32.mrb[0].mxu0
        %v1398 = vpop.f32.mrb[0].mxu0
        %1399 = vdwg.mxu0
        %v1400 = vld [vmem:[#allocation2] sm:$0x1]
        %1402 = vset.pattern.permute.xlu0 0
        %1403 = vperm.xlu0 %1402, %v1400
        %v1404 = vpop.permute.xlu0 %1403
        %v1406 = vlaneseq
        %v1407 = vshrl.u32 %v1406, 7
        %v1408 = vsub.s32 0, %v1407
        %v1409 = vrot.slane %v1404, %v1408
        %v1410 = vadd.f32 %v1394, %v1409
        %v1411 = vadd.f32 %v1396, %v1409
        %v1412 = vmax.f32 %v1410, 0.0
        %v1413 = vmax.f32 %v1411, 0.0
        %v1416 = vcombine.low %v1412, %v1413
        %v1418 = vunpack.c.l.s4 1966171168
        %v1419 = vunpack.c.0.s8 %v1418
        %v1420 = vlaneseq
        %v1421 = vshrl.u32 %v1420, 7
        %v1422 = vsub.s32 %v1419, %v1421
        %v1423 = vrot.slane %v1416, %v1422
        %v1425 = vunpack.c.l.s4 1966171168
        %v1426 = vunpack.c.0.s8 %v1425
        %v1427 = vlaneseq
        %v1428 = vshrl.u32 %v1427, 7
        %v1429 = vsub.s32 %v1426, %v1428
        %v1430 = vrot.slane %v1423, %v1429
        %v1432 = vlaneseq
        %vm1433 = vcmp.ge.s32.totalorder %v1432, 0
        %vm1434 = vcmp.lt.s32.totalorder %v1432, 256
        %vm1435 = vmand %vm1433, %vm1434
        %1436 = vst.msk [vmem:[%s413] sm:$0x3] %vm1435, %v1430
        %v1437 = vld [vmem:[%s3] sm:$0xf]
        %v1438 = vld [vmem:[%s3 + $0x4] sm:$0xf]
        %v1439 = vld [vmem:[%s3 + $0x8] sm:$0xf]
        %v1440 = vld [vmem:[%s3 + $0xc] sm:$0xf]
        %v1441 = vld [vmem:[%s3 + $0x10] sm:$0xf]
        %v1442 = vld [vmem:[%s3 + $0x14] sm:$0xf]
        %v1443 = vld [vmem:[%s3 + $0x18] sm:$0xf]
        %v1444 = vld [vmem:[%s3 + $0x1c] sm:$0xf]
        %v1445 = vld [vmem:[%s3 + $0x20] sm:$0xf]
        %v1446 = vld [vmem:[%s3 + $0x24] sm:$0xf]
        %v1447 = vld [vmem:[%s3 + $0x28] sm:$0xf]
        %v1448 = vld [vmem:[%s3 + $0x2c] sm:$0xf]
        %v1449 = vld [vmem:[%s3 + $0x30] sm:$0xf]
        %v1450 = vld [vmem:[%s3 + $0x34] sm:$0xf]
        %v1451 = vld [vmem:[%s3 + $0x38] sm:$0xf]
        %v1452 = vld [vmem:[%s3 + $0x3c] sm:$0xf]
        %v1453 = vld [vmem:[%s3 + $0x40] sm:$0xf]
        %v1454 = vld [vmem:[%s3 + $0x44] sm:$0xf]
        %v1455 = vld [vmem:[%s3 + $0x48] sm:$0xf]
        %v1456 = vld [vmem:[%s3 + $0x4c] sm:$0xf]
        %v1457 = vld [vmem:[%s3 + $0x50] sm:$0xf]
        %v1458 = vld [vmem:[%s3 + $0x54] sm:$0xf]
        %v1459 = vld [vmem:[%s3 + $0x58] sm:$0xf]
        %v1460 = vld [vmem:[%s3 + $0x5c] sm:$0xf]
        %v1461 = vld [vmem:[%s3 + $0x60] sm:$0xf]
        %v1462 = vld [vmem:[%s3 + $0x64] sm:$0xf]
        %v1463 = vld [vmem:[%s3 + $0x68] sm:$0xf]
        %v1464 = vld [vmem:[%s3 + $0x6c] sm:$0xf]
        %v1465 = vld [vmem:[%s3 + $0x70] sm:$0xf]
        %v1466 = vld [vmem:[%s3 + $0x74] sm:$0xf]
        %v1467 = vld [vmem:[%s3 + $0x78] sm:$0xf]
        %v1468 = vld [vmem:[%s3 + $0x7c] sm:$0xf]
        %v1469 = vld [vmem:[%s3 + $0x80] sm:$0xf]
        %v1470 = vld [vmem:[%s3 + $0x84] sm:$0xf]
        %v1471 = vld [vmem:[%s3 + $0x88] sm:$0xf]
        %v1472 = vld [vmem:[%s3 + $0x8c] sm:$0xf]
        %v1473 = vld [vmem:[%s3 + $0x90] sm:$0xf]
        %v1474 = vld [vmem:[%s3 + $0x94] sm:$0xf]
        %v1475 = vld [vmem:[%s3 + $0x98] sm:$0xf]
        %v1476 = vld [vmem:[%s3 + $0x9c] sm:$0xf]
        %v1477 = vld [vmem:[%s3 + $0xa0] sm:$0xf]
        %v1478 = vld [vmem:[%s3 + $0xa4] sm:$0xf]
        %v1479 = vld [vmem:[%s3 + $0xa8] sm:$0xf]
        %v1480 = vld [vmem:[%s3 + $0xac] sm:$0xf]
        %v1481 = vld [vmem:[%s3 + $0xb0] sm:$0xf]
        %v1482 = vld [vmem:[%s3 + $0xb4] sm:$0xf]
        %v1483 = vld [vmem:[%s3 + $0xb8] sm:$0xf]
        %v1484 = vld [vmem:[%s3 + $0xbc] sm:$0xf]
        %v1485 = vld [vmem:[%s3 + $0xc0] sm:$0xf]
        %v1486 = vld [vmem:[%s3 + $0xc4] sm:$0xf]
        %v1487 = vld [vmem:[%s3 + $0xc8] sm:$0xf]
        %v1488 = vld [vmem:[%s3 + $0xcc] sm:$0xf]
        %v1489 = vld [vmem:[%s3 + $0xd0] sm:$0xf]
        %v1490 = vld [vmem:[%s3 + $0xd4] sm:$0xf]
        %v1491 = vld [vmem:[%s3 + $0xd8] sm:$0xf]
        %v1492 = vld [vmem:[%s3 + $0xdc] sm:$0xf]
        %v1493 = vld [vmem:[%s3 + $0xe0] sm:$0xf]
        %v1494 = vld [vmem:[%s3 + $0xe4] sm:$0xf]
        %v1495 = vld [vmem:[%s3 + $0xe8] sm:$0xf]
        %v1496 = vld [vmem:[%s3 + $0xec] sm:$0xf]
        %v1497 = vld [vmem:[%s3 + $0xf0] sm:$0xf]
        %v1498 = vld [vmem:[%s3 + $0xf4] sm:$0xf]
        %v1499 = vld [vmem:[%s3 + $0xf8] sm:$0xf]
        %v1500 = vld [vmem:[%s3 + $0xfc] sm:$0xf]
        %v1501 = vld [vmem:[%s4] sm:$0xff]
        %v1502 = vld [vmem:[%s4 + $0x8] sm:$0xff]
        %v1503 = vld [vmem:[%s4 + $0x10] sm:$0xff]
        %v1504 = vld [vmem:[%s4 + $0x18] sm:$0xff]
        %v1505 = vld [vmem:[%s4 + $0x20] sm:$0xff]
        %v1506 = vld [vmem:[%s4 + $0x28] sm:$0xff]
        %v1507 = vld [vmem:[%s4 + $0x30] sm:$0xff]
        %v1508 = vld [vmem:[%s4 + $0x38] sm:$0xff]
        %v1509 = vld [vmem:[%s4 + $0x40] sm:$0xff]
        %v1510 = vld [vmem:[%s4 + $0x48] sm:$0xff]
        %v1511 = vld [vmem:[%s4 + $0x50] sm:$0xff]
        %v1512 = vld [vmem:[%s4 + $0x58] sm:$0xff]
        %v1513 = vld [vmem:[%s4 + $0x60] sm:$0xff]
        %v1514 = vld [vmem:[%s4 + $0x68] sm:$0xff]
        %v1515 = vld [vmem:[%s4 + $0x70] sm:$0xff]
        %v1516 = vld [vmem:[%s4 + $0x78] sm:$0xff]
        %v1517 = vld [vmem:[%s4 + $0x80] sm:$0xff]
        %v1518 = vld [vmem:[%s4 + $0x88] sm:$0xff]
        %v1519 = vld [vmem:[%s4 + $0x90] sm:$0xff]
        %v1520 = vld [vmem:[%s4 + $0x98] sm:$0xff]
        %v1521 = vld [vmem:[%s4 + $0xa0] sm:$0xff]
        %v1522 = vld [vmem:[%s4 + $0xa8] sm:$0xff]
        %v1523 = vld [vmem:[%s4 + $0xb0] sm:$0xff]
        %v1524 = vld [vmem:[%s4 + $0xb8] sm:$0xff]
        %v1525 = vld [vmem:[%s4 + $0xc0] sm:$0xff]
        %v1526 = vld [vmem:[%s4 + $0xc8] sm:$0xff]
        %v1527 = vld [vmem:[%s4 + $0xd0] sm:$0xff]
        %v1528 = vld [vmem:[%s4 + $0xd8] sm:$0xff]
        %v1529 = vld [vmem:[%s4 + $0xe0] sm:$0xff]
        %v1530 = vld [vmem:[%s4 + $0xe8] sm:$0xff]
        %v1531 = vld [vmem:[%s4 + $0xf0] sm:$0xff]
        %v1532 = vld [vmem:[%s4 + $0xf8] sm:$0xff]
        %v1533 = vld [vmem:[%s4 + $0x100] sm:$0xff]
        %v1534 = vld [vmem:[%s4 + $0x108] sm:$0xff]
        %v1535 = vld [vmem:[%s4 + $0x110] sm:$0xff]
        %v1536 = vld [vmem:[%s4 + $0x118] sm:$0xff]
        %v1537 = vld [vmem:[%s4 + $0x120] sm:$0xff]
        %v1538 = vld [vmem:[%s4 + $0x128] sm:$0xff]
        %v1539 = vld [vmem:[%s4 + $0x130] sm:$0xff]
        %v1540 = vld [vmem:[%s4 + $0x138] sm:$0xff]
        %v1541 = vld [vmem:[%s4 + $0x140] sm:$0xff]
        %v1542 = vld [vmem:[%s4 + $0x148] sm:$0xff]
        %v1543 = vld [vmem:[%s4 + $0x150] sm:$0xff]
        %v1544 = vld [vmem:[%s4 + $0x158] sm:$0xff]
        %v1545 = vld [vmem:[%s4 + $0x160] sm:$0xff]
        %v1546 = vld [vmem:[%s4 + $0x168] sm:$0xff]
        %v1547 = vld [vmem:[%s4 + $0x170] sm:$0xff]
        %v1548 = vld [vmem:[%s4 + $0x178] sm:$0xff]
        %v1549 = vld [vmem:[%s4 + $0x180] sm:$0xff]
        %v1550 = vld [vmem:[%s4 + $0x188] sm:$0xff]
        %v1551 = vld [vmem:[%s4 + $0x190] sm:$0xff]
        %v1552 = vld [vmem:[%s4 + $0x198] sm:$0xff]
        %v1553 = vld [vmem:[%s4 + $0x1a0] sm:$0xff]
        %v1554 = vld [vmem:[%s4 + $0x1a8] sm:$0xff]
        %v1555 = vld [vmem:[%s4 + $0x1b0] sm:$0xff]
        %v1556 = vld [vmem:[%s4 + $0x1b8] sm:$0xff]
        %v1557 = vld [vmem:[%s4 + $0x1c0] sm:$0xff]
        %v1558 = vld [vmem:[%s4 + $0x1c8] sm:$0xff]
        %v1559 = vld [vmem:[%s4 + $0x1d0] sm:$0xff]
        %v1560 = vld [vmem:[%s4 + $0x1d8] sm:$0xff]
        %v1561 = vld [vmem:[%s4 + $0x1e0] sm:$0xff]
        %v1562 = vld [vmem:[%s4 + $0x1e8] sm:$0xff]
        %v1563 = vld [vmem:[%s4 + $0x1f0] sm:$0xff]
        %v1564 = vld [vmem:[%s4 + $0x1f8] sm:$0xff]
        %1566 = vset.pattern.permute.xlu0 0
        %1567 = vperm.xlu0 %1566, %v1501
        %v1568 = vpop.permute.xlu0 %1567
        %1571 = vset.pattern.permute.xlu0 0
        %1572 = vperm.xlu0 %1571, %v1502
        %v1573 = vpop.permute.xlu0 %1572
        %1576 = vset.pattern.permute.xlu0 0
        %1577 = vperm.xlu0 %1576, %v1503
        %v1578 = vpop.permute.xlu0 %1577
        %1581 = vset.pattern.permute.xlu0 0
        %1582 = vperm.xlu0 %1581, %v1504
        %v1583 = vpop.permute.xlu0 %1582
        %1586 = vset.pattern.permute.xlu0 0
        %1587 = vperm.xlu0 %1586, %v1505
        %v1588 = vpop.permute.xlu0 %1587
        %1591 = vset.pattern.permute.xlu0 0
        %1592 = vperm.xlu0 %1591, %v1506
        %v1593 = vpop.permute.xlu0 %1592
        %1596 = vset.pattern.permute.xlu0 0
        %1597 = vperm.xlu0 %1596, %v1507
        %v1598 = vpop.permute.xlu0 %1597
        %1601 = vset.pattern.permute.xlu0 0
        %1602 = vperm.xlu0 %1601, %v1508
        %v1603 = vpop.permute.xlu0 %1602
        %1606 = vset.pattern.permute.xlu0 0
        %1607 = vperm.xlu0 %1606, %v1509
        %v1608 = vpop.permute.xlu0 %1607
        %1611 = vset.pattern.permute.xlu0 0
        %1612 = vperm.xlu0 %1611, %v1510
        %v1613 = vpop.permute.xlu0 %1612
        %1616 = vset.pattern.permute.xlu0 0
        %1617 = vperm.xlu0 %1616, %v1511
        %v1618 = vpop.permute.xlu0 %1617
        %1621 = vset.pattern.permute.xlu0 0
        %1622 = vperm.xlu0 %1621, %v1512
        %v1623 = vpop.permute.xlu0 %1622
        %1626 = vset.pattern.permute.xlu0 0
        %1627 = vperm.xlu0 %1626, %v1513
        %v1628 = vpop.permute.xlu0 %1627
        %1631 = vset.pattern.permute.xlu0 0
        %1632 = vperm.xlu0 %1631, %v1514
        %v1633 = vpop.permute.xlu0 %1632
        %1636 = vset.pattern.permute.xlu0 0
        %1637 = vperm.xlu0 %1636, %v1515
        %v1638 = vpop.permute.xlu0 %1637
        %1641 = vset.pattern.permute.xlu0 0
        %1642 = vperm.xlu0 %1641, %v1516
        %v1643 = vpop.permute.xlu0 %1642
        %1646 = vset.pattern.permute.xlu0 0
        %1647 = vperm.xlu0 %1646, %v1517
        %v1648 = vpop.permute.xlu0 %1647
        %1651 = vset.pattern.permute.xlu0 0
        %1652 = vperm.xlu0 %1651, %v1518
        %v1653 = vpop.permute.xlu0 %1652
        %1656 = vset.pattern.permute.xlu0 0
        %1657 = vperm.xlu0 %1656, %v1519
        %v1658 = vpop.permute.xlu0 %1657
        %1661 = vset.pattern.permute.xlu0 0
        %1662 = vperm.xlu0 %1661, %v1520
        %v1663 = vpop.permute.xlu0 %1662
        %1666 = vset.pattern.permute.xlu0 0
        %1667 = vperm.xlu0 %1666, %v1521
        %v1668 = vpop.permute.xlu0 %1667
        %1671 = vset.pattern.permute.xlu0 0
        %1672 = vperm.xlu0 %1671, %v1522
        %v1673 = vpop.permute.xlu0 %1672
        %1676 = vset.pattern.permute.xlu0 0
        %1677 = vperm.xlu0 %1676, %v1523
        %v1678 = vpop.permute.xlu0 %1677
        %1681 = vset.pattern.permute.xlu0 0
        %1682 = vperm.xlu0 %1681, %v1524
        %v1683 = vpop.permute.xlu0 %1682
        %1686 = vset.pattern.permute.xlu0 0
        %1687 = vperm.xlu0 %1686, %v1525
        %v1688 = vpop.permute.xlu0 %1687
        %1691 = vset.pattern.permute.xlu0 0
        %1692 = vperm.xlu0 %1691, %v1526
        %v1693 = vpop.permute.xlu0 %1692
        %1696 = vset.pattern.permute.xlu0 0
        %1697 = vperm.xlu0 %1696, %v1527
        %v1698 = vpop.permute.xlu0 %1697
        %1701 = vset.pattern.permute.xlu0 0
        %1702 = vperm.xlu0 %1701, %v1528
        %v1703 = vpop.permute.xlu0 %1702
        %1706 = vset.pattern.permute.xlu0 0
        %1707 = vperm.xlu0 %1706, %v1529
        %v1708 = vpop.permute.xlu0 %1707
        %1711 = vset.pattern.permute.xlu0 0
        %1712 = vperm.xlu0 %1711, %v1530
        %v1713 = vpop.permute.xlu0 %1712
        %1716 = vset.pattern.permute.xlu0 0
        %1717 = vperm.xlu0 %1716, %v1531
        %v1718 = vpop.permute.xlu0 %1717
        %1721 = vset.pattern.permute.xlu0 0
        %1722 = vperm.xlu0 %1721, %v1532
        %v1723 = vpop.permute.xlu0 %1722
        %1726 = vset.pattern.permute.xlu0 0
        %1727 = vperm.xlu0 %1726, %v1533
        %v1728 = vpop.permute.xlu0 %1727
        %1731 = vset.pattern.permute.xlu0 0
        %1732 = vperm.xlu0 %1731, %v1534
        %v1733 = vpop.permute.xlu0 %1732
        %1736 = vset.pattern.permute.xlu0 0
        %1737 = vperm.xlu0 %1736, %v1535
        %v1738 = vpop.permute.xlu0 %1737
        %1741 = vset.pattern.permute.xlu0 0
        %1742 = vperm.xlu0 %1741, %v1536
        %v1743 = vpop.permute.xlu0 %1742
        %1746 = vset.pattern.permute.xlu0 0
        %1747 = vperm.xlu0 %1746, %v1537
        %v1748 = vpop.permute.xlu0 %1747
        %1751 = vset.pattern.permute.xlu0 0
        %1752 = vperm.xlu0 %1751, %v1538
        %v1753 = vpop.permute.xlu0 %1752
        %1756 = vset.pattern.permute.xlu0 0
        %1757 = vperm.xlu0 %1756, %v1539
        %v1758 = vpop.permute.xlu0 %1757
        %1761 = vset.pattern.permute.xlu0 0
        %1762 = vperm.xlu0 %1761, %v1540
        %v1763 = vpop.permute.xlu0 %1762
        %1766 = vset.pattern.permute.xlu0 0
        %1767 = vperm.xlu0 %1766, %v1541
        %v1768 = vpop.permute.xlu0 %1767
        %1771 = vset.pattern.permute.xlu0 0
        %1772 = vperm.xlu0 %1771, %v1542
        %v1773 = vpop.permute.xlu0 %1772
        %1776 = vset.pattern.permute.xlu0 0
        %1777 = vperm.xlu0 %1776, %v1543
        %v1778 = vpop.permute.xlu0 %1777
        %1781 = vset.pattern.permute.xlu0 0
        %1782 = vperm.xlu0 %1781, %v1544
        %v1783 = vpop.permute.xlu0 %1782
        %1786 = vset.pattern.permute.xlu0 0
        %1787 = vperm.xlu0 %1786, %v1545
        %v1788 = vpop.permute.xlu0 %1787
        %1791 = vset.pattern.permute.xlu0 0
        %1792 = vperm.xlu0 %1791, %v1546
        %v1793 = vpop.permute.xlu0 %1792
        %1796 = vset.pattern.permute.xlu0 0
        %1797 = vperm.xlu0 %1796, %v1547
        %v1798 = vpop.permute.xlu0 %1797
        %1801 = vset.pattern.permute.xlu0 0
        %1802 = vperm.xlu0 %1801, %v1548
        %v1803 = vpop.permute.xlu0 %1802
        %1806 = vset.pattern.permute.xlu0 0
        %1807 = vperm.xlu0 %1806, %v1549
        %v1808 = vpop.permute.xlu0 %1807
        %1811 = vset.pattern.permute.xlu0 0
        %1812 = vperm.xlu0 %1811, %v1550
        %v1813 = vpop.permute.xlu0 %1812
        %1816 = vset.pattern.permute.xlu0 0
        %1817 = vperm.xlu0 %1816, %v1551
        %v1818 = vpop.permute.xlu0 %1817
        %1821 = vset.pattern.permute.xlu0 0
        %1822 = vperm.xlu0 %1821, %v1552
        %v1823 = vpop.permute.xlu0 %1822
        %1826 = vset.pattern.permute.xlu0 0
        %1827 = vperm.xlu0 %1826, %v1553
        %v1828 = vpop.permute.xlu0 %1827
        %1831 = vset.pattern.permute.xlu0 0
        %1832 = vperm.xlu0 %1831, %v1554
        %v1833 = vpop.permute.xlu0 %1832
        %1836 = vset.pattern.permute.xlu0 0
        %1837 = vperm.xlu0 %1836, %v1555
        %v1838 = vpop.permute.xlu0 %1837
        %1841 = vset.pattern.permute.xlu0 0
        %1842 = vperm.xlu0 %1841, %v1556
        %v1843 = vpop.permute.xlu0 %1842
        %1846 = vset.pattern.permute.xlu0 0
        %1847 = vperm.xlu0 %1846, %v1557
        %v1848 = vpop.permute.xlu0 %1847
        %1851 = vset.pattern.permute.xlu0 0
        %1852 = vperm.xlu0 %1851, %v1558
        %v1853 = vpop.permute.xlu0 %1852
        %1856 = vset.pattern.permute.xlu0 0
        %1857 = vperm.xlu0 %1856, %v1559
        %v1858 = vpop.permute.xlu0 %1857
        %1861 = vset.pattern.permute.xlu0 0
        %1862 = vperm.xlu0 %1861, %v1560
        %v1863 = vpop.permute.xlu0 %1862
        %1866 = vset.pattern.permute.xlu0 0
        %1867 = vperm.xlu0 %1866, %v1561
        %v1868 = vpop.permute.xlu0 %1867
        %1871 = vset.pattern.permute.xlu0 0
        %1872 = vperm.xlu0 %1871, %v1562
        %v1873 = vpop.permute.xlu0 %1872
        %1876 = vset.pattern.permute.xlu0 0
        %1877 = vperm.xlu0 %1876, %v1563
        %v1878 = vpop.permute.xlu0 %1877
        %1881 = vset.pattern.permute.xlu0 0
        %1882 = vperm.xlu0 %1881, %v1564
        %v1883 = vpop.permute.xlu0 %1882
        %v1949 = vunpack.c.l.b16 %v1437
        %v1950 = vunpack.c.l.b16 %v1438
        %v1951 = vunpack.c.l.b16 %v1439
        %v1952 = vunpack.c.l.b16 %v1440
        %v1953 = vunpack.c.l.b16 %v1441
        %v1954 = vunpack.c.l.b16 %v1442
        %v1955 = vunpack.c.l.b16 %v1443
        %v1956 = vunpack.c.l.b16 %v1444
        %v1957 = vunpack.c.l.b16 %v1445
        %v1958 = vunpack.c.l.b16 %v1446
        %v1959 = vunpack.c.l.b16 %v1447
        %v1960 = vunpack.c.l.b16 %v1448
        %v1961 = vunpack.c.l.b16 %v1449
        %v1962 = vunpack.c.l.b16 %v1450
        %v1963 = vunpack.c.l.b16 %v1451
        %v1964 = vunpack.c.l.b16 %v1452
        %v1965 = vunpack.c.l.b16 %v1453
        %v1966 = vunpack.c.l.b16 %v1454
        %v1967 = vunpack.c.l.b16 %v1455
        %v1968 = vunpack.c.l.b16 %v1456
        %v1969 = vunpack.c.l.b16 %v1457
        %v1970 = vunpack.c.l.b16 %v1458
        %v1971 = vunpack.c.l.b16 %v1459
        %v1972 = vunpack.c.l.b16 %v1460
        %v1973 = vunpack.c.l.b16 %v1461
        %v1974 = vunpack.c.l.b16 %v1462
        %v1975 = vunpack.c.l.b16 %v1463
        %v1976 = vunpack.c.l.b16 %v1464
        %v1977 = vunpack.c.l.b16 %v1465
        %v1978 = vunpack.c.l.b16 %v1466
        %v1979 = vunpack.c.l.b16 %v1467
        %v1980 = vunpack.c.l.b16 %v1468
        %v1981 = vunpack.c.l.b16 %v1469
        %v1982 = vunpack.c.l.b16 %v1470
        %v1983 = vunpack.c.l.b16 %v1471
        %v1984 = vunpack.c.l.b16 %v1472
        %v1985 = vunpack.c.l.b16 %v1473
        %v1986 = vunpack.c.l.b16 %v1474
        %v1987 = vunpack.c.l.b16 %v1475
        %v1988 = vunpack.c.l.b16 %v1476
        %v1989 = vunpack.c.l.b16 %v1477
        %v1990 = vunpack.c.l.b16 %v1478
        %v1991 = vunpack.c.l.b16 %v1479
        %v1992 = vunpack.c.l.b16 %v1480
        %v1993 = vunpack.c.l.b16 %v1481
        %v1994 = vunpack.c.l.b16 %v1482
        %v1995 = vunpack.c.l.b16 %v1483
        %v1996 = vunpack.c.l.b16 %v1484
        %v1997 = vunpack.c.l.b16 %v1485
        %v1998 = vunpack.c.l.b16 %v1486
        %v1999 = vunpack.c.l.b16 %v1487
        %v2000 = vunpack.c.l.b16 %v1488
        %v2001 = vunpack.c.l.b16 %v1489
        %v2002 = vunpack.c.l.b16 %v1490
        %v2003 = vunpack.c.l.b16 %v1491
        %v2004 = vunpack.c.l.b16 %v1492
        %v2005 = vunpack.c.l.b16 %v1493
        %v2006 = vunpack.c.l.b16 %v1494
        %v2007 = vunpack.c.l.b16 %v1495
        %v2008 = vunpack.c.l.b16 %v1496
        %v2009 = vunpack.c.l.b16 %v1497
        %v2010 = vunpack.c.l.b16 %v1498
        %v2011 = vunpack.c.l.b16 %v1499
        %v2012 = vunpack.c.l.b16 %v1500
        %v2013 = vpack.c.b16 %v1950, %v1949
        %v2014 = vpack.c.b16 %v1952, %v1951
        %v2015 = vpack.c.b16 %v1954, %v1953
        %v2016 = vpack.c.b16 %v1956, %v1955
        %v2017 = vpack.c.b16 %v1958, %v1957
        %v2018 = vpack.c.b16 %v1960, %v1959
        %v2019 = vpack.c.b16 %v1962, %v1961
        %v2020 = vpack.c.b16 %v1964, %v1963
        %v2021 = vpack.c.b16 %v1966, %v1965
        %v2022 = vpack.c.b16 %v1968, %v1967
        %v2023 = vpack.c.b16 %v1970, %v1969
        %v2024 = vpack.c.b16 %v1972, %v1971
        %v2025 = vpack.c.b16 %v1974, %v1973
        %v2026 = vpack.c.b16 %v1976, %v1975
        %v2027 = vpack.c.b16 %v1978, %v1977
        %v2028 = vpack.c.b16 %v1980, %v1979
        %v2029 = vpack.c.b16 %v1982, %v1981
        %v2030 = vpack.c.b16 %v1984, %v1983
        %v2031 = vpack.c.b16 %v1986, %v1985
        %v2032 = vpack.c.b16 %v1988, %v1987
        %v2033 = vpack.c.b16 %v1990, %v1989
        %v2034 = vpack.c.b16 %v1992, %v1991
        %v2035 = vpack.c.b16 %v1994, %v1993
        %v2036 = vpack.c.b16 %v1996, %v1995
        %v2037 = vpack.c.b16 %v1998, %v1997
        %v2038 = vpack.c.b16 %v2000, %v1999
        %v2039 = vpack.c.b16 %v2002, %v2001
        %v2040 = vpack.c.b16 %v2004, %v2003
        %v2041 = vpack.c.b16 %v2006, %v2005
        %v2042 = vpack.c.b16 %v2008, %v2007
        %v2043 = vpack.c.b16 %v2010, %v2009
        %v2044 = vpack.c.b16 %v2012, %v2011
        %v2046 = vsel %vm1013, %v2013, 0
        %v2049 = vsel %vm1013, %v2014, 0
        %v2052 = vsel %vm1013, %v2015, 0
        %v2055 = vsel %vm1013, %v2016, 0
        %v2058 = vsel %vm1013, %v2017, 0
        %v2061 = vsel %vm1013, %v2018, 0
        %v2064 = vsel %vm1013, %v2019, 0
        %v2067 = vsel %vm1013, %v2020, 0
        %v2070 = vsel %vm1013, %v2021, 0
        %v2073 = vsel %vm1013, %v2022, 0
        %v2076 = vsel %vm1013, %v2023, 0
        %v2079 = vsel %vm1013, %v2024, 0
        %v2082 = vsel %vm1013, %v2025, 0
        %v2085 = vsel %vm1013, %v2026, 0
        %v2088 = vsel %vm1013, %v2027, 0
        %v2091 = vsel %vm1013, %v2028, 0
        %v2094 = vsel %vm1013, %v2029, 0
        %v2097 = vsel %vm1013, %v2030, 0
        %v2100 = vsel %vm1013, %v2031, 0
        %v2103 = vsel %vm1013, %v2032, 0
        %v2106 = vsel %vm1013, %v2033, 0
        %v2109 = vsel %vm1013, %v2034, 0
        %v2112 = vsel %vm1013, %v2035, 0
        %v2115 = vsel %vm1013, %v2036, 0
        %v2118 = vsel %vm1013, %v2037, 0
        %v2121 = vsel %vm1013, %v2038, 0
        %v2124 = vsel %vm1013, %v2039, 0
        %v2127 = vsel %vm1013, %v2040, 0
        %v2130 = vsel %vm1013, %v2041, 0
        %v2133 = vsel %vm1013, %v2042, 0
        %v2136 = vsel %vm1013, %v2043, 0
        %v2139 = vsel %vm1013, %v2044, 0
        %2141 = vmatprep.subr.bf16.mxu0 %v702
        %2142 = vmatpush1.bf16.msra.mxu0 %v701
        %2143 = vmatprep.subr.bf16.mxu0 %v704
        %2144 = vmatpush1.bf16.msra.mxu0 %v703
        %2145 = vmatprep.subr.bf16.mxu0 %v706
        %2146 = vmatpush1.bf16.msra.mxu0 %v705
        %2147 = vmatprep.subr.bf16.mxu0 %v708
        %2148 = vmatpush1.bf16.msra.mxu0 %v707
        %2149 = vmatprep.subr.bf16.mxu0 0
        %2150 = vmatpush1.bf16.msra.mxu0 0
        %2151 = vmatprep.subr.bf16.mxu0 0
        %2152 = vmatpush1.bf16.msra.mxu0 0
        %2153 = vmatprep.subr.bf16.mxu0 0
        %2154 = vmatpush1.bf16.msra.mxu0 0
        %2155 = vmatprep.subr.bf16.mxu0 0
        %2156 = vmatpush1.bf16.msra.mxu0 0
        %2157 = vmatprep.subr.bf16.mxu0 0
        %2158 = vmatpush1.bf16.msra.mxu0 0
        %2159 = vmatprep.subr.bf16.mxu0 0
        %2160 = vmatpush1.bf16.msra.mxu0 0
        %2161 = vmatprep.subr.bf16.mxu0 0
        %2162 = vmatpush1.bf16.msra.mxu0 0
        %2163 = vmatprep.subr.bf16.mxu0 0
        %2164 = vmatpush1.bf16.msra.mxu0 0
        %2165 = vmatprep.subr.bf16.mxu0 0
        %2166 = vmatpush1.bf16.msra.mxu0 0
        %2167 = vmatprep.subr.bf16.mxu0 0
        %2168 = vmatpush1.bf16.msra.mxu0 0
        %2169 = vmatprep.subr.bf16.mxu0 0
        %2170 = vmatpush1.bf16.msra.mxu0 0
        %2171 = vmatprep.subr.bf16.mxu0 0
        %2172 = vmatpush1.bf16.msra.mxu0 0
        %2173 = vmatprep.mubr.bf16.mxu0 0
        %2174 = vmatmul.mubr.bf16.gmra.mrb[0].mxu0 %v2046
        %v2175 = vpop.f32.mrb[0].mxu0
        %v2176 = vadd.f32 %v1568, %v2175
        %v2177 = vpop.f32.mrb[0].mxu0
        %v2178 = vadd.f32 %v1568, %v2177
        %v2179 = vpop.f32.mrb[0].mxu0
        %v2180 = vadd.f32 %v1573, %v2179
        %v2181 = vpop.f32.mrb[0].mxu0
        %v2182 = vadd.f32 %v1573, %v2181
        %2183 = vmatprep.mubr.bf16.mxu0 0
        %2184 = vmatmul.mubr.bf16.gmra.mrb[0].mxu0 %v2049
        %v2185 = vpop.f32.mrb[0].mxu0
        %v2186 = vadd.f32 %v1578, %v2185
        %v2187 = vpop.f32.mrb[0].mxu0
        %v2188 = vadd.f32 %v1578, %v2187
        %v2189 = vpop.f32.mrb[0].mxu0
        %v2190 = vadd.f32 %v1583, %v2189
        %v2191 = vpop.f32.mrb[0].mxu0
        %v2192 = vadd.f32 %v1583, %v2191
        %2193 = vmatprep.mubr.bf16.mxu0 0
        %2194 = vmatmul.mubr.bf16.gmra.mrb[0].mxu0 %v2052
        %v2195 = vpop.f32.mrb[0].mxu0
        %v2196 = vadd.f32 %v1588, %v2195
        %v2197 = vpop.f32.mrb[0].mxu0
        %v2198 = vadd.f32 %v1588, %v2197
        %v2199 = vpop.f32.mrb[0].mxu0
        %v2200 = vadd.f32 %v1593, %v2199
        %v2201 = vpop.f32.mrb[0].mxu0
        %v2202 = vadd.f32 %v1593, %v2201
        %2203 = vmatprep.mubr.bf16.mxu0 0
        %2204 = vmatmul.mubr.bf16.gmra.mrb[0].mxu0 %v2055
        %v2205 = vpop.f32.mrb[0].mxu0
        %v2206 = vadd.f32 %v1598, %v2205
        %v2207 = vpop.f32.mrb[0].mxu0
        %v2208 = vadd.f32 %v1598, %v2207
        %v2209 = vpop.f32.mrb[0].mxu0
        %v2210 = vadd.f32 %v1603, %v2209
        %v2211 = vpop.f32.mrb[0].mxu0
        %v2212 = vadd.f32 %v1603, %v2211
        %2213 = vmatprep.mubr.bf16.mxu0 0
        %2214 = vmatmul.mubr.bf16.gmra.mrb[0].mxu0 %v2058
        %v2215 = vpop.f32.mrb[0].mxu0
        %v2216 = vadd.f32 %v1608, %v2215
        %v2217 = vpop.f32.mrb[0].mxu0
        %v2218 = vadd.f32 %v1608, %v2217
        %v2219 = vpop.f32.mrb[0].mxu0
        %v2220 = vadd.f32 %v1613, %v2219
        %v2221 = vpop.f32.mrb[0].mxu0
        %v2222 = vadd.f32 %v1613, %v2221
        %2223 = vmatprep.mubr.bf16.mxu0 0
        %2224 = vmatmul.mubr.bf16.gmra.mrb[0].mxu0 %v2061
        %v2225 = vpop.f32.mrb[0].mxu0
        %v2226 = vadd.f32 %v1618, %v2225
        %v2227 = vpop.f32.mrb[0].mxu0
        %v2228 = vadd.f32 %v1618, %v2227
        %v2229 = vpop.f32.mrb[0].mxu0
        %v2230 = vadd.f32 %v1623, %v2229
        %v2231 = vpop.f32.mrb[0].mxu0
        %v2232 = vadd.f32 %v1623, %v2231
        %2233 = vmatprep.mubr.bf16.mxu0 0
        %2234 = vmatmul.mubr.bf16.gmra.mrb[0].mxu0 %v2064
        %v2235 = vpop.f32.mrb[0].mxu0
        %v2236 = vadd.f32 %v1628, %v2235
        %v2237 = vpop.f32.mrb[0].mxu0
        %v2238 = vadd.f32 %v1628, %v2237
        %v2239 = vpop.f32.mrb[0].mxu0
        %v2240 = vadd.f32 %v1633, %v2239
        %v2241 = vpop.f32.mrb[0].mxu0
        %v2242 = vadd.f32 %v1633, %v2241
        %2243 = vmatprep.mubr.bf16.mxu0 0
        %2244 = vmatmul.mubr.bf16.gmra.mrb[0].mxu0 %v2067
        %v2245 = vpop.f32.mrb[0].mxu0
        %v2246 = vadd.f32 %v1638, %v2245
        %v2247 = vpop.f32.mrb[0].mxu0
        %v2248 = vadd.f32 %v1638, %v2247
        %v2249 = vpop.f32.mrb[0].mxu0
        %v2250 = vadd.f32 %v1643, %v2249
        %v2251 = vpop.f32.mrb[0].mxu0
        %v2252 = vadd.f32 %v1643, %v2251
        %2253 = vmatprep.mubr.bf16.mxu0 0
        %2254 = vmatmul.mubr.bf16.gmra.mrb[0].mxu0 %v2070
        %v2255 = vpop.f32.mrb[0].mxu0
        %v2256 = vadd.f32 %v1648, %v2255
        %v2257 = vpop.f32.mrb[0].mxu0
        %v2258 = vadd.f32 %v1648, %v2257
        %v2259 = vpop.f32.mrb[0].mxu0
        %v2260 = vadd.f32 %v1653, %v2259
        %v2261 = vpop.f32.mrb[0].mxu0
        %v2262 = vadd.f32 %v1653, %v2261
        %2263 = vmatprep.mubr.bf16.mxu0 0
        %2264 = vmatmul.mubr.bf16.gmra.mrb[0].mxu0 %v2073
        %v2265 = vpop.f32.mrb[0].mxu0
        %v2266 = vadd.f32 %v1658, %v2265
        %v2267 = vpop.f32.mrb[0].mxu0
        %v2268 = vadd.f32 %v1658, %v2267
        %v2269 = vpop.f32.mrb[0].mxu0
        %v2270 = vadd.f32 %v1663, %v2269
        %v2271 = vpop.f32.mrb[0].mxu0
        %v2272 = vadd.f32 %v1663, %v2271
        %2273 = vmatprep.mubr.bf16.mxu0 0
        %2274 = vmatmul.mubr.bf16.gmra.mrb[0].mxu0 %v2076
        %v2275 = vpop.f32.mrb[0].mxu0
        %v2276 = vadd.f32 %v1668, %v2275
        %v2277 = vpop.f32.mrb[0].mxu0
        %v2278 = vadd.f32 %v1668, %v2277
        %v2279 = vpop.f32.mrb[0].mxu0
        %v2280 = vadd.f32 %v1673, %v2279
        %v2281 = vpop.f32.mrb[0].mxu0
        %v2282 = vadd.f32 %v1673, %v2281
        %2283 = vmatprep.mubr.bf16.mxu0 0
        %2284 = vmatmul.mubr.bf16.gmra.mrb[0].mxu0 %v2079
        %v2285 = vpop.f32.mrb[0].mxu0
        %v2286 = vadd.f32 %v1678, %v2285
        %v2287 = vpop.f32.mrb[0].mxu0
        %v2288 = vadd.f32 %v1678, %v2287
        %v2289 = vpop.f32.mrb[0].mxu0
        %v2290 = vadd.f32 %v1683, %v2289
        %v2291 = vpop.f32.mrb[0].mxu0
        %v2292 = vadd.f32 %v1683, %v2291
        %2293 = vmatprep.mubr.bf16.mxu0 0
        %2294 = vmatmul.mubr.bf16.gmra.mrb[0].mxu0 %v2082
        %v2295 = vpop.f32.mrb[0].mxu0
        %v2296 = vadd.f32 %v1688, %v2295
        %v2297 = vpop.f32.mrb[0].mxu0
        %v2298 = vadd.f32 %v1688, %v2297
        %v2299 = vpop.f32.mrb[0].mxu0
        %v2300 = vadd.f32 %v1693, %v2299
        %v2301 = vpop.f32.mrb[0].mxu0
        %v2302 = vadd.f32 %v1693, %v2301
        %2303 = vmatprep.mubr.bf16.mxu0 0
        %2304 = vmatmul.mubr.bf16.gmra.mrb[0].mxu0 %v2085
        %v2305 = vpop.f32.mrb[0].mxu0
        %v2306 = vadd.f32 %v1698, %v2305
        %v2307 = vpop.f32.mrb[0].mxu0
        %v2308 = vadd.f32 %v1698, %v2307
        %v2309 = vpop.f32.mrb[0].mxu0
        %v2310 = vadd.f32 %v1703, %v2309
        %v2311 = vpop.f32.mrb[0].mxu0
        %v2312 = vadd.f32 %v1703, %v2311
        %2313 = vmatprep.mubr.bf16.mxu0 0
        %2314 = vmatmul.mubr.bf16.gmra.mrb[0].mxu0 %v2088
        %v2315 = vpop.f32.mrb[0].mxu0
        %v2316 = vadd.f32 %v1708, %v2315
        %v2317 = vpop.f32.mrb[0].mxu0
        %v2318 = vadd.f32 %v1708, %v2317
        %v2319 = vpop.f32.mrb[0].mxu0
        %v2320 = vadd.f32 %v1713, %v2319
        %v2321 = vpop.f32.mrb[0].mxu0
        %v2322 = vadd.f32 %v1713, %v2321
        %2323 = vmatprep.mubr.bf16.mxu0 0
        %2324 = vmatmul.mubr.bf16.gmra.mrb[0].mxu0 %v2091
        %v2325 = vpop.f32.mrb[0].mxu0
        %v2326 = vadd.f32 %v1718, %v2325
        %v2327 = vpop.f32.mrb[0].mxu0
        %v2328 = vadd.f32 %v1718, %v2327
        %v2329 = vpop.f32.mrb[0].mxu0
        %v2330 = vadd.f32 %v1723, %v2329
        %v2331 = vpop.f32.mrb[0].mxu0
        %v2332 = vadd.f32 %v1723, %v2331
        %2333 = vmatprep.mubr.bf16.mxu0 0
        %2334 = vmatmul.mubr.bf16.gmra.mrb[0].mxu0 %v2094
        %v2335 = vpop.f32.mrb[0].mxu0
        %v2336 = vadd.f32 %v1728, %v2335
        %v2337 = vpop.f32.mrb[0].mxu0
        %v2338 = vadd.f32 %v1728, %v2337
        %v2339 = vpop.f32.mrb[0].mxu0
        %v2340 = vadd.f32 %v1733, %v2339
        %v2341 = vpop.f32.mrb[0].mxu0
        %v2342 = vadd.f32 %v1733, %v2341
        %2343 = vmatprep.mubr.bf16.mxu0 0
        %2344 = vmatmul.mubr.bf16.gmra.mrb[0].mxu0 %v2097
        %v2345 = vpop.f32.mrb[0].mxu0
        %v2346 = vadd.f32 %v1738, %v2345
        %v2347 = vpop.f32.mrb[0].mxu0
        %v2348 = vadd.f32 %v1738, %v2347
        %v2349 = vpop.f32.mrb[0].mxu0
        %v2350 = vadd.f32 %v1743, %v2349
        %v2351 = vpop.f32.mrb[0].mxu0
        %v2352 = vadd.f32 %v1743, %v2351
        %2353 = vmatprep.mubr.bf16.mxu0 0
        %2354 = vmatmul.mubr.bf16.gmra.mrb[0].mxu0 %v2100
        %v2355 = vpop.f32.mrb[0].mxu0
        %v2356 = vadd.f32 %v1748, %v2355
        %v2357 = vpop.f32.mrb[0].mxu0
        %v2358 = vadd.f32 %v1748, %v2357
        %v2359 = vpop.f32.mrb[0].mxu0
        %v2360 = vadd.f32 %v1753, %v2359
        %v2361 = vpop.f32.mrb[0].mxu0
        %v2362 = vadd.f32 %v1753, %v2361
        %2363 = vmatprep.mubr.bf16.mxu0 0
        %2364 = vmatmul.mubr.bf16.gmra.mrb[0].mxu0 %v2103
        %v2365 = vpop.f32.mrb[0].mxu0
        %v2366 = vadd.f32 %v1758, %v2365
        %v2367 = vpop.f32.mrb[0].mxu0
        %v2368 = vadd.f32 %v1758, %v2367
        %v2369 = vpop.f32.mrb[0].mxu0
        %v2370 = vadd.f32 %v1763, %v2369
        %v2371 = vpop.f32.mrb[0].mxu0
        %v2372 = vadd.f32 %v1763, %v2371
        %2373 = vmatprep.mubr.bf16.mxu0 0
        %2374 = vmatmul.mubr.bf16.gmra.mrb[0].mxu0 %v2106
        %v2375 = vpop.f32.mrb[0].mxu0
        %v2376 = vadd.f32 %v1768, %v2375
        %v2377 = vpop.f32.mrb[0].mxu0
        %v2378 = vadd.f32 %v1768, %v2377
        %v2379 = vpop.f32.mrb[0].mxu0
        %v2380 = vadd.f32 %v1773, %v2379
        %v2381 = vpop.f32.mrb[0].mxu0
        %v2382 = vadd.f32 %v1773, %v2381
        %2383 = vmatprep.mubr.bf16.mxu0 0
        %2384 = vmatmul.mubr.bf16.gmra.mrb[0].mxu0 %v2109
        %v2385 = vpop.f32.mrb[0].mxu0
        %v2386 = vadd.f32 %v1778, %v2385
        %v2387 = vpop.f32.mrb[0].mxu0
        %v2388 = vadd.f32 %v1778, %v2387
        %v2389 = vpop.f32.mrb[0].mxu0
        %v2390 = vadd.f32 %v1783, %v2389
        %v2391 = vpop.f32.mrb[0].mxu0
        %v2392 = vadd.f32 %v1783, %v2391
        %2393 = vmatprep.mubr.bf16.mxu0 0
        %2394 = vmatmul.mubr.bf16.gmra.mrb[0].mxu0 %v2112
        %v2395 = vpop.f32.mrb[0].mxu0
        %v2396 = vadd.f32 %v1788, %v2395
        %v2397 = vpop.f32.mrb[0].mxu0
        %v2398 = vadd.f32 %v1788, %v2397
        %v2399 = vpop.f32.mrb[0].mxu0
        %v2400 = vadd.f32 %v1793, %v2399
        %v2401 = vpop.f32.mrb[0].mxu0
        %v2402 = vadd.f32 %v1793, %v2401
        %2403 = vmatprep.mubr.bf16.mxu0 0
        %2404 = vmatmul.mubr.bf16.gmra.mrb[0].mxu0 %v2115
        %v2405 = vpop.f32.mrb[0].mxu0
        %v2406 = vadd.f32 %v1798, %v2405
        %v2407 = vpop.f32.mrb[0].mxu0
        %v2408 = vadd.f32 %v1798, %v2407
        %v2409 = vpop.f32.mrb[0].mxu0
        %v2410 = vadd.f32 %v1803, %v2409
        %v2411 = vpop.f32.mrb[0].mxu0
        %v2412 = vadd.f32 %v1803, %v2411
        %2413 = vmatprep.mubr.bf16.mxu0 0
        %2414 = vmatmul.mubr.bf16.gmra.mrb[0].mxu0 %v2118
        %v2415 = vpop.f32.mrb[0].mxu0
        %v2416 = vadd.f32 %v1808, %v2415
        %v2417 = vpop.f32.mrb[0].mxu0
        %v2418 = vadd.f32 %v1808, %v2417
        %v2419 = vpop.f32.mrb[0].mxu0
        %v2420 = vadd.f32 %v1813, %v2419
        %v2421 = vpop.f32.mrb[0].mxu0
        %v2422 = vadd.f32 %v1813, %v2421
        %2423 = vmatprep.mubr.bf16.mxu0 0
        %2424 = vmatmul.mubr.bf16.gmra.mrb[0].mxu0 %v2121
        %v2425 = vpop.f32.mrb[0].mxu0
        %v2426 = vadd.f32 %v1818, %v2425
        %v2427 = vpop.f32.mrb[0].mxu0
        %v2428 = vadd.f32 %v1818, %v2427
        %v2429 = vpop.f32.mrb[0].mxu0
        %v2430 = vadd.f32 %v1823, %v2429
        %v2431 = vpop.f32.mrb[0].mxu0
        %v2432 = vadd.f32 %v1823, %v2431
        %2433 = vmatprep.mubr.bf16.mxu0 0
        %2434 = vmatmul.mubr.bf16.gmra.mrb[0].mxu0 %v2124
        %v2435 = vpop.f32.mrb[0].mxu0
        %v2436 = vadd.f32 %v1828, %v2435
        %v2437 = vpop.f32.mrb[0].mxu0
        %v2438 = vadd.f32 %v1828, %v2437
        %v2439 = vpop.f32.mrb[0].mxu0
        %v2440 = vadd.f32 %v1833, %v2439
        %v2441 = vpop.f32.mrb[0].mxu0
        %v2442 = vadd.f32 %v1833, %v2441
        %2443 = vmatprep.mubr.bf16.mxu0 0
        %2444 = vmatmul.mubr.bf16.gmra.mrb[0].mxu0 %v2127
        %v2445 = vpop.f32.mrb[0].mxu0
        %v2446 = vadd.f32 %v1838, %v2445
        %v2447 = vpop.f32.mrb[0].mxu0
        %v2448 = vadd.f32 %v1838, %v2447
        %v2449 = vpop.f32.mrb[0].mxu0
        %v2450 = vadd.f32 %v1843, %v2449
        %v2451 = vpop.f32.mrb[0].mxu0
        %v2452 = vadd.f32 %v1843, %v2451
        %2453 = vmatprep.mubr.bf16.mxu0 0
        %2454 = vmatmul.mubr.bf16.gmra.mrb[0].mxu0 %v2130
        %v2455 = vpop.f32.mrb[0].mxu0
        %v2456 = vadd.f32 %v1848, %v2455
        %v2457 = vpop.f32.mrb[0].mxu0
        %v2458 = vadd.f32 %v1848, %v2457
        %v2459 = vpop.f32.mrb[0].mxu0
        %v2460 = vadd.f32 %v1853, %v2459
        %v2461 = vpop.f32.mrb[0].mxu0
        %v2462 = vadd.f32 %v1853, %v2461
        %2463 = vmatprep.mubr.bf16.mxu0 0
        %2464 = vmatmul.mubr.bf16.gmra.mrb[0].mxu0 %v2133
        %v2465 = vpop.f32.mrb[0].mxu0
        %v2466 = vadd.f32 %v1858, %v2465
        %v2467 = vpop.f32.mrb[0].mxu0
        %v2468 = vadd.f32 %v1858, %v2467
        %v2469 = vpop.f32.mrb[0].mxu0
        %v2470 = vadd.f32 %v1863, %v2469
        %v2471 = vpop.f32.mrb[0].mxu0
        %v2472 = vadd.f32 %v1863, %v2471
        %2473 = vmatprep.mubr.bf16.mxu0 0
        %2474 = vmatmul.mubr.bf16.gmra.mrb[0].mxu0 %v2136
        %v2475 = vpop.f32.mrb[0].mxu0
        %v2476 = vadd.f32 %v1868, %v2475
        %v2477 = vpop.f32.mrb[0].mxu0
        %v2478 = vadd.f32 %v1868, %v2477
        %v2479 = vpop.f32.mrb[0].mxu0
        %v2480 = vadd.f32 %v1873, %v2479
        %v2481 = vpop.f32.mrb[0].mxu0
        %v2482 = vadd.f32 %v1873, %v2481
        %2483 = vmatprep.mubr.bf16.mxu0 0
        %2484 = vmatmul.mubr.bf16.gmra.mrb[0].mxu0 %v2139
        %v2485 = vpop.f32.mrb[0].mxu0
        %v2486 = vadd.f32 %v1878, %v2485
        %v2487 = vpop.f32.mrb[0].mxu0
        %v2488 = vadd.f32 %v1878, %v2487
        %v2489 = vpop.f32.mrb[0].mxu0
        %v2490 = vadd.f32 %v1883, %v2489
        %v2491 = vpop.f32.mrb[0].mxu0
        %v2492 = vadd.f32 %v1883, %v2491
        %2493 = vdwg.mxu0
        %v2494 = vpack.c.bf16 %v2180, %v2176
        %v2495 = vpack.c.bf16 %v2182, %v2178
        %v2496 = vpack.c.bf16 %v2190, %v2186
        %v2497 = vpack.c.bf16 %v2192, %v2188
        %v2498 = vpack.c.bf16 %v2200, %v2196
        %v2499 = vpack.c.bf16 %v2202, %v2198
        %v2500 = vpack.c.bf16 %v2210, %v2206
        %v2501 = vpack.c.bf16 %v2212, %v2208
        %v2502 = vpack.c.bf16 %v2220, %v2216
        %v2503 = vpack.c.bf16 %v2222, %v2218
        %v2504 = vpack.c.bf16 %v2230, %v2226
        %v2505 = vpack.c.bf16 %v2232, %v2228
        %v2506 = vpack.c.bf16 %v2240, %v2236
        %v2507 = vpack.c.bf16 %v2242, %v2238
        %v2508 = vpack.c.bf16 %v2250, %v2246
        %v2509 = vpack.c.bf16 %v2252, %v2248
        %v2510 = vpack.c.bf16 %v2260, %v2256
        %v2511 = vpack.c.bf16 %v2262, %v2258
        %v2512 = vpack.c.bf16 %v2270, %v2266
        %v2513 = vpack.c.bf16 %v2272, %v2268
        %v2514 = vpack.c.bf16 %v2280, %v2276
        %v2515 = vpack.c.bf16 %v2282, %v2278
        %v2516 = vpack.c.bf16 %v2290, %v2286
        %v2517 = vpack.c.bf16 %v2292, %v2288
        %v2518 = vpack.c.bf16 %v2300, %v2296
        %v2519 = vpack.c.bf16 %v2302, %v2298
        %v2520 = vpack.c.bf16 %v2310, %v2306
        %v2521 = vpack.c.bf16 %v2312, %v2308
        %v2522 = vpack.c.bf16 %v2320, %v2316
        %v2523 = vpack.c.bf16 %v2322, %v2318
        %v2524 = vpack.c.bf16 %v2330, %v2326
        %v2525 = vpack.c.bf16 %v2332, %v2328
        %v2526 = vpack.c.bf16 %v2340, %v2336
        %v2527 = vpack.c.bf16 %v2342, %v2338
        %v2528 = vpack.c.bf16 %v2350, %v2346
        %v2529 = vpack.c.bf16 %v2352, %v2348
        %v2530 = vpack.c.bf16 %v2360, %v2356
        %v2531 = vpack.c.bf16 %v2362, %v2358
        %v2532 = vpack.c.bf16 %v2370, %v2366
        %v2533 = vpack.c.bf16 %v2372, %v2368
        %v2534 = vpack.c.bf16 %v2380, %v2376
        %v2535 = vpack.c.bf16 %v2382, %v2378
        %v2536 = vpack.c.bf16 %v2390, %v2386
        %v2537 = vpack.c.bf16 %v2392, %v2388
        %v2538 = vpack.c.bf16 %v2400, %v2396
        %v2539 = vpack.c.bf16 %v2402, %v2398
        %v2540 = vpack.c.bf16 %v2410, %v2406
        %v2541 = vpack.c.bf16 %v2412, %v2408
        %v2542 = vpack.c.bf16 %v2420, %v2416
        %v2543 = vpack.c.bf16 %v2422, %v2418
        %v2544 = vpack.c.bf16 %v2430, %v2426
        %v2545 = vpack.c.bf16 %v2432, %v2428
        %v2546 = vpack.c.bf16 %v2440, %v2436
        %v2547 = vpack.c.bf16 %v2442, %v2438
        %v2548 = vpack.c.bf16 %v2450, %v2446
        %v2549 = vpack.c.bf16 %v2452, %v2448
        %v2550 = vpack.c.bf16 %v2460, %v2456
        %v2551 = vpack.c.bf16 %v2462, %v2458
        %v2552 = vpack.c.bf16 %v2470, %v2466
        %v2553 = vpack.c.bf16 %v2472, %v2468
        %v2554 = vpack.c.bf16 %v2480, %v2476
        %v2555 = vpack.c.bf16 %v2482, %v2478
        %v2556 = vpack.c.bf16 %v2490, %v2486
        %v2557 = vpack.c.bf16 %v2492, %v2488
        %v2590 = vunpack.c.l.b16 %v2494
        %v2591 = vunpack.c.h.b16 %v2494
        %v2592 = vunpack.c.l.b16 %v2496
        %v2593 = vunpack.c.h.b16 %v2496
        %v2594 = vunpack.c.l.b16 %v2498
        %v2595 = vunpack.c.h.b16 %v2498
        %v2596 = vunpack.c.l.b16 %v2500
        %v2597 = vunpack.c.h.b16 %v2500
        %v2598 = vunpack.c.l.b16 %v2502
        %v2599 = vunpack.c.h.b16 %v2502
        %v2600 = vunpack.c.l.b16 %v2504
        %v2601 = vunpack.c.h.b16 %v2504
        %v2602 = vunpack.c.l.b16 %v2506
        %v2603 = vunpack.c.h.b16 %v2506
        %v2604 = vunpack.c.l.b16 %v2508
        %v2605 = vunpack.c.h.b16 %v2508
        %v2606 = vunpack.c.l.b16 %v2510
        %v2607 = vunpack.c.h.b16 %v2510
        %v2608 = vunpack.c.l.b16 %v2512
        %v2609 = vunpack.c.h.b16 %v2512
        %v2610 = vunpack.c.l.b16 %v2514
        %v2611 = vunpack.c.h.b16 %v2514
        %v2612 = vunpack.c.l.b16 %v2516
        %v2613 = vunpack.c.h.b16 %v2516
        %v2614 = vunpack.c.l.b16 %v2518
        %v2615 = vunpack.c.h.b16 %v2518
        %v2616 = vunpack.c.l.b16 %v2520
        %v2617 = vunpack.c.h.b16 %v2520
        %v2618 = vunpack.c.l.b16 %v2522
        %v2619 = vunpack.c.h.b16 %v2522
        %v2620 = vunpack.c.l.b16 %v2524
        %v2621 = vunpack.c.h.b16 %v2524
        %v2622 = vunpack.c.l.b16 %v2526
        %v2623 = vunpack.c.h.b16 %v2526
        %v2624 = vunpack.c.l.b16 %v2528
        %v2625 = vunpack.c.h.b16 %v2528
        %v2626 = vunpack.c.l.b16 %v2530
        %v2627 = vunpack.c.h.b16 %v2530
        %v2628 = vunpack.c.l.b16 %v2532
        %v2629 = vunpack.c.h.b16 %v2532
        %v2630 = vunpack.c.l.b16 %v2534
        %v2631 = vunpack.c.h.b16 %v2534
        %v2632 = vunpack.c.l.b16 %v2536
        %v2633 = vunpack.c.h.b16 %v2536
        %v2634 = vunpack.c.l.b16 %v2538
        %v2635 = vunpack.c.h.b16 %v2538
        %v2636 = vunpack.c.l.b16 %v2540
        %v2637 = vunpack.c.h.b16 %v2540
        %v2638 = vunpack.c.l.b16 %v2542
        %v2639 = vunpack.c.h.b16 %v2542
        %v2640 = vunpack.c.l.b16 %v2544
        %v2641 = vunpack.c.h.b16 %v2544
        %v2642 = vunpack.c.l.b16 %v2546
        %v2643 = vunpack.c.h.b16 %v2546
        %v2644 = vunpack.c.l.b16 %v2548
        %v2645 = vunpack.c.h.b16 %v2548
        %v2646 = vunpack.c.l.b16 %v2550
        %v2647 = vunpack.c.h.b16 %v2550
        %v2648 = vunpack.c.l.b16 %v2552
        %v2649 = vunpack.c.h.b16 %v2552
        %v2650 = vunpack.c.l.b16 %v2554
        %v2651 = vunpack.c.h.b16 %v2554
        %v2652 = vunpack.c.l.b16 %v2556
        %v2653 = vunpack.c.h.b16 %v2556
        %v2654 = vpack.c.b16 %v2590, %v2590
        %v2655 = vpack.c.b16 %v2591, %v2591
        %v2656 = vpack.c.b16 %v2592, %v2592
        %v2657 = vpack.c.b16 %v2593, %v2593
        %v2658 = vpack.c.b16 %v2594, %v2594
        %v2659 = vpack.c.b16 %v2595, %v2595
        %v2660 = vpack.c.b16 %v2596, %v2596
        %v2661 = vpack.c.b16 %v2597, %v2597
        %v2662 = vpack.c.b16 %v2598, %v2598
        %v2663 = vpack.c.b16 %v2599, %v2599
        %v2664 = vpack.c.b16 %v2600, %v2600
        %v2665 = vpack.c.b16 %v2601, %v2601
        %v2666 = vpack.c.b16 %v2602, %v2602
        %v2667 = vpack.c.b16 %v2603, %v2603
        %v2668 = vpack.c.b16 %v2604, %v2604
        %v2669 = vpack.c.b16 %v2605, %v2605
        %v2670 = vpack.c.b16 %v2606, %v2606
        %v2671 = vpack.c.b16 %v2607, %v2607
        %v2672 = vpack.c.b16 %v2608, %v2608
        %v2673 = vpack.c.b16 %v2609, %v2609
        %v2674 = vpack.c.b16 %v2610, %v2610
        %v2675 = vpack.c.b16 %v2611, %v2611
        %v2676 = vpack.c.b16 %v2612, %v2612
        %v2677 = vpack.c.b16 %v2613, %v2613
        %v2678 = vpack.c.b16 %v2614, %v2614
        %v2679 = vpack.c.b16 %v2615, %v2615
        %v2680 = vpack.c.b16 %v2616, %v2616
        %v2681 = vpack.c.b16 %v2617, %v2617
        %v2682 = vpack.c.b16 %v2618, %v2618
        %v2683 = vpack.c.b16 %v2619, %v2619
        %v2684 = vpack.c.b16 %v2620, %v2620
        %v2685 = vpack.c.b16 %v2621, %v2621
        %v2686 = vpack.c.b16 %v2622, %v2622
        %v2687 = vpack.c.b16 %v2623, %v2623
        %v2688 = vpack.c.b16 %v2624, %v2624
        %v2689 = vpack.c.b16 %v2625, %v2625
        %v2690 = vpack.c.b16 %v2626, %v2626
        %v2691 = vpack.c.b16 %v2627, %v2627
        %v2692 = vpack.c.b16 %v2628, %v2628
        %v2693 = vpack.c.b16 %v2629, %v2629
        %v2694 = vpack.c.b16 %v2630, %v2630
        %v2695 = vpack.c.b16 %v2631, %v2631
        %v2696 = vpack.c.b16 %v2632, %v2632
        %v2697 = vpack.c.b16 %v2633, %v2633
        %v2698 = vpack.c.b16 %v2634, %v2634
        %v2699 = vpack.c.b16 %v2635, %v2635
        %v2700 = vpack.c.b16 %v2636, %v2636
        %v2701 = vpack.c.b16 %v2637, %v2637
        %v2702 = vpack.c.b16 %v2638, %v2638
        %v2703 = vpack.c.b16 %v2639, %v2639
        %v2704 = vpack.c.b16 %v2640, %v2640
        %v2705 = vpack.c.b16 %v2641, %v2641
        %v2706 = vpack.c.b16 %v2642, %v2642
        %v2707 = vpack.c.b16 %v2643, %v2643
        %v2708 = vpack.c.b16 %v2644, %v2644
        %v2709 = vpack.c.b16 %v2645, %v2645
        %v2710 = vpack.c.b16 %v2646, %v2646
        %v2711 = vpack.c.b16 %v2647, %v2647
        %v2712 = vpack.c.b16 %v2648, %v2648
        %v2713 = vpack.c.b16 %v2649, %v2649
        %v2714 = vpack.c.b16 %v2650, %v2650
        %v2715 = vpack.c.b16 %v2651, %v2651
        %v2716 = vpack.c.b16 %v2652, %v2652
        %v2717 = vpack.c.b16 %v2653, %v2653
        %vm2782 = vcmask 257024
        %2783 = vst.msk [vmem:[%s437] sm:$0xf] %vm2782, %v2654
        %2784 = vst.msk [vmem:[%s437 + $0x4] sm:$0xf] %vm2782, %v2655
        %2785 = vst.msk [vmem:[%s437 + $0x8] sm:$0xf] %vm2782, %v2656
        %2786 = vst.msk [vmem:[%s437 + $0xc] sm:$0xf] %vm2782, %v2657
        %2787 = vst.msk [vmem:[%s437 + $0x10] sm:$0xf] %vm2782, %v2658
        %2788 = vst.msk [vmem:[%s437 + $0x14] sm:$0xf] %vm2782, %v2659
        %2789 = vst.msk [vmem:[%s437 + $0x18] sm:$0xf] %vm2782, %v2660
        %2790 = vst.msk [vmem:[%s437 + $0x1c] sm:$0xf] %vm2782, %v2661
        %2791 = vst.msk [vmem:[%s437 + $0x20] sm:$0xf] %vm2782, %v2662
        %2792 = vst.msk [vmem:[%s437 + $0x24] sm:$0xf] %vm2782, %v2663
        %2793 = vst.msk [vmem:[%s437 + $0x28] sm:$0xf] %vm2782, %v2664
        %2794 = vst.msk [vmem:[%s437 + $0x2c] sm:$0xf] %vm2782, %v2665
        %2795 = vst.msk [vmem:[%s437 + $0x30] sm:$0xf] %vm2782, %v2666
        %2796 = vst.msk [vmem:[%s437 + $0x34] sm:$0xf] %vm2782, %v2667
        %2797 = vst.msk [vmem:[%s437 + $0x38] sm:$0xf] %vm2782, %v2668
        %2798 = vst.msk [vmem:[%s437 + $0x3c] sm:$0xf] %vm2782, %v2669
        %2799 = vst.msk [vmem:[%s437 + $0x40] sm:$0xf] %vm2782, %v2670
        %2800 = vst.msk [vmem:[%s437 + $0x44] sm:$0xf] %vm2782, %v2671
        %2801 = vst.msk [vmem:[%s437 + $0x48] sm:$0xf] %vm2782, %v2672
        %2802 = vst.msk [vmem:[%s437 + $0x4c] sm:$0xf] %vm2782, %v2673
        %2803 = vst.msk [vmem:[%s437 + $0x50] sm:$0xf] %vm2782, %v2674
        %2804 = vst.msk [vmem:[%s437 + $0x54] sm:$0xf] %vm2782, %v2675
        %2805 = vst.msk [vmem:[%s437 + $0x58] sm:$0xf] %vm2782, %v2676
        %2806 = vst.msk [vmem:[%s437 + $0x5c] sm:$0xf] %vm2782, %v2677
        %2807 = vst.msk [vmem:[%s437 + $0x60] sm:$0xf] %vm2782, %v2678
        %2808 = vst.msk [vmem:[%s437 + $0x64] sm:$0xf] %vm2782, %v2679
        %2809 = vst.msk [vmem:[%s437 + $0x68] sm:$0xf] %vm2782, %v2680
        %2810 = vst.msk [vmem:[%s437 + $0x6c] sm:$0xf] %vm2782, %v2681
        %2811 = vst.msk [vmem:[%s437 + $0x70] sm:$0xf] %vm2782, %v2682
        %2812 = vst.msk [vmem:[%s437 + $0x74] sm:$0xf] %vm2782, %v2683
        %2813 = vst.msk [vmem:[%s437 + $0x78] sm:$0xf] %vm2782, %v2684
        %2814 = vst.msk [vmem:[%s437 + $0x7c] sm:$0xf] %vm2782, %v2685
        %2815 = vst.msk [vmem:[%s437 + $0x80] sm:$0xf] %vm2782, %v2686
        %2816 = vst.msk [vmem:[%s437 + $0x84] sm:$0xf] %vm2782, %v2687
        %2817 = vst.msk [vmem:[%s437 + $0x88] sm:$0xf] %vm2782, %v2688
        %2818 = vst.msk [vmem:[%s437 + $0x8c] sm:$0xf] %vm2782, %v2689
        %2819 = vst.msk [vmem:[%s437 + $0x90] sm:$0xf] %vm2782, %v2690
        %2820 = vst.msk [vmem:[%s437 + $0x94] sm:$0xf] %vm2782, %v2691
        %2821 = vst.msk [vmem:[%s437 + $0x98] sm:$0xf] %vm2782, %v2692
        %2822 = vst.msk [vmem:[%s437 + $0x9c] sm:$0xf] %vm2782, %v2693
        %2823 = vst.msk [vmem:[%s437 + $0xa0] sm:$0xf] %vm2782, %v2694
        %2824 = vst.msk [vmem:[%s437 + $0xa4] sm:$0xf] %vm2782, %v2695
        %2825 = vst.msk [vmem:[%s437 + $0xa8] sm:$0xf] %vm2782, %v2696
        %2826 = vst.msk [vmem:[%s437 + $0xac] sm:$0xf] %vm2782, %v2697
        %2827 = vst.msk [vmem:[%s437 + $0xb0] sm:$0xf] %vm2782, %v2698
        %2828 = vst.msk [vmem:[%s437 + $0xb4] sm:$0xf] %vm2782, %v2699
        %2829 = vst.msk [vmem:[%s437 + $0xb8] sm:$0xf] %vm2782, %v2700
        %2830 = vst.msk [vmem:[%s437 + $0xbc] sm:$0xf] %vm2782, %v2701
        %2831 = vst.msk [vmem:[%s437 + $0xc0] sm:$0xf] %vm2782, %v2702
        %2832 = vst.msk [vmem:[%s437 + $0xc4] sm:$0xf] %vm2782, %v2703
        %2833 = vst.msk [vmem:[%s437 + $0xc8] sm:$0xf] %vm2782, %v2704
        %2834 = vst.msk [vmem:[%s437 + $0xcc] sm:$0xf] %vm2782, %v2705
        %2835 = vst.msk [vmem:[%s437 + $0xd0] sm:$0xf] %vm2782, %v2706
        %2836 = vst.msk [vmem:[%s437 + $0xd4] sm:$0xf] %vm2782, %v2707
        %2837 = vst.msk [vmem:[%s437 + $0xd8] sm:$0xf] %vm2782, %v2708
        %2838 = vst.msk [vmem:[%s437 + $0xdc] sm:$0xf] %vm2782, %v2709
        %2839 = vst.msk [vmem:[%s437 + $0xe0] sm:$0xf] %vm2782, %v2710
        %2840 = vst.msk [vmem:[%s437 + $0xe4] sm:$0xf] %vm2782, %v2711
        %2841 = vst.msk [vmem:[%s437 + $0xe8] sm:$0xf] %vm2782, %v2712
        %2842 = vst.msk [vmem:[%s437 + $0xec] sm:$0xf] %vm2782, %v2713
        %2843 = vst.msk [vmem:[%s437 + $0xf0] sm:$0xf] %vm2782, %v2714
        %2844 = vst.msk [vmem:[%s437 + $0xf4] sm:$0xf] %vm2782, %v2715
        %2845 = vst.msk [vmem:[%s437 + $0xf8] sm:$0xf] %vm2782, %v2716
        %2846 = vst.msk [vmem:[%s437 + $0xfc] sm:$0xf] %vm2782, %v2717
        %2847 = vrot.lane.b32.xlu0 %v2654, 96
        %v2848 = vpop.permute.xlu0 %2847
        %2849 = vrot.lane.b32.xlu0 %v2655, 96
        %v2850 = vpop.permute.xlu0 %2849
        %2851 = vrot.lane.b32.xlu0 %v2656, 96
        %v2852 = vpop.permute.xlu0 %2851
        %2853 = vrot.lane.b32.xlu0 %v2657, 96
        %v2854 = vpop.permute.xlu0 %2853
        %2855 = vrot.lane.b32.xlu0 %v2658, 96
        %v2856 = vpop.permute.xlu0 %2855
        %2857 = vrot.lane.b32.xlu0 %v2659, 96
        %v2858 = vpop.permute.xlu0 %2857
        %2859 = vrot.lane.b32.xlu0 %v2660, 96
        %v2860 = vpop.permute.xlu0 %2859
        %2861 = vrot.lane.b32.xlu0 %v2661, 96
        %v2862 = vpop.permute.xlu0 %2861
        %2863 = vrot.lane.b32.xlu0 %v2662, 96
        %v2864 = vpop.permute.xlu0 %2863
        %2865 = vrot.lane.b32.xlu0 %v2663, 96
        %v2866 = vpop.permute.xlu0 %2865
        %2867 = vrot.lane.b32.xlu0 %v2664, 96
        %v2868 = vpop.permute.xlu0 %2867
        %2869 = vrot.lane.b32.xlu0 %v2665, 96
        %v2870 = vpop.permute.xlu0 %2869
        %2871 = vrot.lane.b32.xlu0 %v2666, 96
        %v2872 = vpop.permute.xlu0 %2871
        %2873 = vrot.lane.b32.xlu0 %v2667, 96
        %v2874 = vpop.permute.xlu0 %2873
        %2875 = vrot.lane.b32.xlu0 %v2668, 96
        %v2876 = vpop.permute.xlu0 %2875
        %2877 = vrot.lane.b32.xlu0 %v2669, 96
        %v2878 = vpop.permute.xlu0 %2877
        %2879 = vrot.lane.b32.xlu0 %v2670, 96
        %v2880 = vpop.permute.xlu0 %2879
        %2881 = vrot.lane.b32.xlu0 %v2671, 96
        %v2882 = vpop.permute.xlu0 %2881
        %2883 = vrot.lane.b32.xlu0 %v2672, 96
        %v2884 = vpop.permute.xlu0 %2883
        %2885 = vrot.lane.b32.xlu0 %v2673, 96
        %v2886 = vpop.permute.xlu0 %2885
        %2887 = vrot.lane.b32.xlu0 %v2674, 96
        %v2888 = vpop.permute.xlu0 %2887
        %2889 = vrot.lane.b32.xlu0 %v2675, 96
        %v2890 = vpop.permute.xlu0 %2889
        %2891 = vrot.lane.b32.xlu0 %v2676, 96
        %v2892 = vpop.permute.xlu0 %2891
        %2893 = vrot.lane.b32.xlu0 %v2677, 96
        %v2894 = vpop.permute.xlu0 %2893
        %2895 = vrot.lane.b32.xlu0 %v2678, 96
        %v2896 = vpop.permute.xlu0 %2895
        %2897 = vrot.lane.b32.xlu0 %v2679, 96
        %v2898 = vpop.permute.xlu0 %2897
        %2899 = vrot.lane.b32.xlu0 %v2680, 96
        %v2900 = vpop.permute.xlu0 %2899
        %2901 = vrot.lane.b32.xlu0 %v2681, 96
        %v2902 = vpop.permute.xlu0 %2901
        %2903 = vrot.lane.b32.xlu0 %v2682, 96
        %v2904 = vpop.permute.xlu0 %2903
        %2905 = vrot.lane.b32.xlu0 %v2683, 96
        %v2906 = vpop.permute.xlu0 %2905
        %2907 = vrot.lane.b32.xlu0 %v2684, 96
        %v2908 = vpop.permute.xlu0 %2907
        %2909 = vrot.lane.b32.xlu0 %v2685, 96
        %v2910 = vpop.permute.xlu0 %2909
        %2911 = vrot.lane.b32.xlu0 %v2686, 96
        %v2912 = vpop.permute.xlu0 %2911
        %2913 = vrot.lane.b32.xlu0 %v2687, 96
        %v2914 = vpop.permute.xlu0 %2913
        %2915 = vrot.lane.b32.xlu0 %v2688, 96
        %v2916 = vpop.permute.xlu0 %2915
        %2917 = vrot.lane.b32.xlu0 %v2689, 96
        %v2918 = vpop.permute.xlu0 %2917
        %2919 = vrot.lane.b32.xlu0 %v2690, 96
        %v2920 = vpop.permute.xlu0 %2919
        %2921 = vrot.lane.b32.xlu0 %v2691, 96
        %v2922 = vpop.permute.xlu0 %2921
        %2923 = vrot.lane.b32.xlu0 %v2692, 96
        %v2924 = vpop.permute.xlu0 %2923
        %2925 = vrot.lane.b32.xlu0 %v2693, 96
        %v2926 = vpop.permute.xlu0 %2925
        %2927 = vrot.lane.b32.xlu0 %v2694, 96
        %v2928 = vpop.permute.xlu0 %2927
        %2929 = vrot.lane.b32.xlu0 %v2695, 96
        %v2930 = vpop.permute.xlu0 %2929
        %2931 = vrot.lane.b32.xlu0 %v2696, 96
        %v2932 = vpop.permute.xlu0 %2931
        %2933 = vrot.lane.b32.xlu0 %v2697, 96
        %v2934 = vpop.permute.xlu0 %2933
        %2935 = vrot.lane.b32.xlu0 %v2698, 96
        %v2936 = vpop.permute.xlu0 %2935
        %2937 = vrot.lane.b32.xlu0 %v2699, 96
        %v2938 = vpop.permute.xlu0 %2937
        %2939 = vrot.lane.b32.xlu0 %v2700, 96
        %v2940 = vpop.permute.xlu0 %2939
        %2941 = vrot.lane.b32.xlu0 %v2701, 96
        %v2942 = vpop.permute.xlu0 %2941
        %2943 = vrot.lane.b32.xlu0 %v2702, 96
        %v2944 = vpop.permute.xlu0 %2943
        %2945 = vrot.lane.b32.xlu0 %v2703, 96
        %v2946 = vpop.permute.xlu0 %2945
        %2947 = vrot.lane.b32.xlu0 %v2704, 96
        %v2948 = vpop.permute.xlu0 %2947
        %2949 = vrot.lane.b32.xlu0 %v2705, 96
        %v2950 = vpop.permute.xlu0 %2949
        %2951 = vrot.lane.b32.xlu0 %v2706, 96
        %v2952 = vpop.permute.xlu0 %2951
        %2953 = vrot.lane.b32.xlu0 %v2707, 96
        %v2954 = vpop.permute.xlu0 %2953
        %2955 = vrot.lane.b32.xlu0 %v2708, 96
        %v2956 = vpop.permute.xlu0 %2955
        %2957 = vrot.lane.b32.xlu0 %v2709, 96
        %v2958 = vpop.permute.xlu0 %2957
        %2959 = vrot.lane.b32.xlu0 %v2710, 96
        %v2960 = vpop.permute.xlu0 %2959
        %2961 = vrot.lane.b32.xlu0 %v2711, 96
        %v2962 = vpop.permute.xlu0 %2961
        %2963 = vrot.lane.b32.xlu0 %v2712, 96
        %v2964 = vpop.permute.xlu0 %2963
        %2965 = vrot.lane.b32.xlu0 %v2713, 96
        %v2966 = vpop.permute.xlu0 %2965
        %2967 = vrot.lane.b32.xlu0 %v2714, 96
        %v2968 = vpop.permute.xlu0 %2967
        %2969 = vrot.lane.b32.xlu0 %v2715, 96
        %v2970 = vpop.permute.xlu0 %2969
        %2971 = vrot.lane.b32.xlu0 %v2716, 96
        %v2972 = vpop.permute.xlu0 %2971
        %2973 = vrot.lane.b32.xlu0 %v2717, 96
        %v2974 = vpop.permute.xlu0 %2973
        %s3039 = scalar_lea.vmem %s437, 256
        %3040 = vst.msk [vmem:[%s3039] sm:$0xf] %vm2782, %v2848
        %3041 = vst.msk [vmem:[%s3039 + $0x4] sm:$0xf] %vm2782, %v2850
        %3042 = vst.msk [vmem:[%s3039 + $0x8] sm:$0xf] %vm2782, %v2852
        %3043 = vst.msk [vmem:[%s3039 + $0xc] sm:$0xf] %vm2782, %v2854
        %3044 = vst.msk [vmem:[%s3039 + $0x10] sm:$0xf] %vm2782, %v2856
        %3045 = vst.msk [vmem:[%s3039 + $0x14] sm:$0xf] %vm2782, %v2858
        %3046 = vst.msk [vmem:[%s3039 + $0x18] sm:$0xf] %vm2782, %v2860
        %3047 = vst.msk [vmem:[%s3039 + $0x1c] sm:$0xf] %vm2782, %v2862
        %3048 = vst.msk [vmem:[%s3039 + $0x20] sm:$0xf] %vm2782, %v2864
        %3049 = vst.msk [vmem:[%s3039 + $0x24] sm:$0xf] %vm2782, %v2866
        %3050 = vst.msk [vmem:[%s3039 + $0x28] sm:$0xf] %vm2782, %v2868
        %3051 = vst.msk [vmem:[%s3039 + $0x2c] sm:$0xf] %vm2782, %v2870
        %3052 = vst.msk [vmem:[%s3039 + $0x30] sm:$0xf] %vm2782, %v2872
        %3053 = vst.msk [vmem:[%s3039 + $0x34] sm:$0xf] %vm2782, %v2874
        %3054 = vst.msk [vmem:[%s3039 + $0x38] sm:$0xf] %vm2782, %v2876
        %3055 = vst.msk [vmem:[%s3039 + $0x3c] sm:$0xf] %vm2782, %v2878
        %3056 = vst.msk [vmem:[%s3039 + $0x40] sm:$0xf] %vm2782, %v2880
        %3057 = vst.msk [vmem:[%s3039 + $0x44] sm:$0xf] %vm2782, %v2882
        %3058 = vst.msk [vmem:[%s3039 + $0x48] sm:$0xf] %vm2782, %v2884
        %3059 = vst.msk [vmem:[%s3039 + $0x4c] sm:$0xf] %vm2782, %v2886
        %3060 = vst.msk [vmem:[%s3039 + $0x50] sm:$0xf] %vm2782, %v2888
        %3061 = vst.msk [vmem:[%s3039 + $0x54] sm:$0xf] %vm2782, %v2890
        %3062 = vst.msk [vmem:[%s3039 + $0x58] sm:$0xf] %vm2782, %v2892
        %3063 = vst.msk [vmem:[%s3039 + $0x5c] sm:$0xf] %vm2782, %v2894
        %3064 = vst.msk [vmem:[%s3039 + $0x60] sm:$0xf] %vm2782, %v2896
        %3065 = vst.msk [vmem:[%s3039 + $0x64] sm:$0xf] %vm2782, %v2898
        %3066 = vst.msk [vmem:[%s3039 + $0x68] sm:$0xf] %vm2782, %v2900
        %3067 = vst.msk [vmem:[%s3039 + $0x6c] sm:$0xf] %vm2782, %v2902
        %3068 = vst.msk [vmem:[%s3039 + $0x70] sm:$0xf] %vm2782, %v2904
        %3069 = vst.msk [vmem:[%s3039 + $0x74] sm:$0xf] %vm2782, %v2906
        %3070 = vst.msk [vmem:[%s3039 + $0x78] sm:$0xf] %vm2782, %v2908
        %3071 = vst.msk [vmem:[%s3039 + $0x7c] sm:$0xf] %vm2782, %v2910
        %3072 = vst.msk [vmem:[%s3039 + $0x80] sm:$0xf] %vm2782, %v2912
        %3073 = vst.msk [vmem:[%s3039 + $0x84] sm:$0xf] %vm2782, %v2914
        %3074 = vst.msk [vmem:[%s3039 + $0x88] sm:$0xf] %vm2782, %v2916
        %3075 = vst.msk [vmem:[%s3039 + $0x8c] sm:$0xf] %vm2782, %v2918
        %3076 = vst.msk [vmem:[%s3039 + $0x90] sm:$0xf] %vm2782, %v2920
        %3077 = vst.msk [vmem:[%s3039 + $0x94] sm:$0xf] %vm2782, %v2922
        %3078 = vst.msk [vmem:[%s3039 + $0x98] sm:$0xf] %vm2782, %v2924
        %3079 = vst.msk [vmem:[%s3039 + $0x9c] sm:$0xf] %vm2782, %v2926
        %3080 = vst.msk [vmem:[%s3039 + $0xa0] sm:$0xf] %vm2782, %v2928
        %3081 = vst.msk [vmem:[%s3039 + $0xa4] sm:$0xf] %vm2782, %v2930
        %3082 = vst.msk [vmem:[%s3039 + $0xa8] sm:$0xf] %vm2782, %v2932
        %3083 = vst.msk [vmem:[%s3039 + $0xac] sm:$0xf] %vm2782, %v2934
        %3084 = vst.msk [vmem:[%s3039 + $0xb0] sm:$0xf] %vm2782, %v2936
        %3085 = vst.msk [vmem:[%s3039 + $0xb4] sm:$0xf] %vm2782, %v2938
        %3086 = vst.msk [vmem:[%s3039 + $0xb8] sm:$0xf] %vm2782, %v2940
        %3087 = vst.msk [vmem:[%s3039 + $0xbc] sm:$0xf] %vm2782, %v2942
        %3088 = vst.msk [vmem:[%s3039 + $0xc0] sm:$0xf] %vm2782, %v2944
        %3089 = vst.msk [vmem:[%s3039 + $0xc4] sm:$0xf] %vm2782, %v2946
        %3090 = vst.msk [vmem:[%s3039 + $0xc8] sm:$0xf] %vm2782, %v2948
        %3091 = vst.msk [vmem:[%s3039 + $0xcc] sm:$0xf] %vm2782, %v2950
        %3092 = vst.msk [vmem:[%s3039 + $0xd0] sm:$0xf] %vm2782, %v2952
        %3093 = vst.msk [vmem:[%s3039 + $0xd4] sm:$0xf] %vm2782, %v2954
        %3094 = vst.msk [vmem:[%s3039 + $0xd8] sm:$0xf] %vm2782, %v2956
        %3095 = vst.msk [vmem:[%s3039 + $0xdc] sm:$0xf] %vm2782, %v2958
        %3096 = vst.msk [vmem:[%s3039 + $0xe0] sm:$0xf] %vm2782, %v2960
        %3097 = vst.msk [vmem:[%s3039 + $0xe4] sm:$0xf] %vm2782, %v2962
        %3098 = vst.msk [vmem:[%s3039 + $0xe8] sm:$0xf] %vm2782, %v2964
        %3099 = vst.msk [vmem:[%s3039 + $0xec] sm:$0xf] %vm2782, %v2966
        %3100 = vst.msk [vmem:[%s3039 + $0xf0] sm:$0xf] %vm2782, %v2968
        %3101 = vst.msk [vmem:[%s3039 + $0xf4] sm:$0xf] %vm2782, %v2970
        %3102 = vst.msk [vmem:[%s3039 + $0xf8] sm:$0xf] %vm2782, %v2972
        %3103 = vst.msk [vmem:[%s3039 + $0xfc] sm:$0xf] %vm2782, %v2974
        %3104 = vrot.lane.b32.xlu0 %v2654, 64
        %v3105 = vpop.permute.xlu0 %3104
        %3106 = vrot.lane.b32.xlu0 %v2655, 64
        %v3107 = vpop.permute.xlu0 %3106
        %3108 = vrot.lane.b32.xlu0 %v2656, 64
        %v3109 = vpop.permute.xlu0 %3108
        %3110 = vrot.lane.b32.xlu0 %v2657, 64
        %v3111 = vpop.permute.xlu0 %3110
        %3112 = vrot.lane.b32.xlu0 %v2658, 64
        %v3113 = vpop.permute.xlu0 %3112
        %3114 = vrot.lane.b32.xlu0 %v2659, 64
        %v3115 = vpop.permute.xlu0 %3114
        %3116 = vrot.lane.b32.xlu0 %v2660, 64
        %v3117 = vpop.permute.xlu0 %3116
        %3118 = vrot.lane.b32.xlu0 %v2661, 64
        %v3119 = vpop.permute.xlu0 %3118
        %3120 = vrot.lane.b32.xlu0 %v2662, 64
        %v3121 = vpop.permute.xlu0 %3120
        %3122 = vrot.lane.b32.xlu0 %v2663, 64
        %v3123 = vpop.permute.xlu0 %3122
        %3124 = vrot.lane.b32.xlu0 %v2664, 64
        %v3125 = vpop.permute.xlu0 %3124
        %3126 = vrot.lane.b32.xlu0 %v2665, 64
        %v3127 = vpop.permute.xlu0 %3126
        %3128 = vrot.lane.b32.xlu0 %v2666, 64
        %v3129 = vpop.permute.xlu0 %3128
        %3130 = vrot.lane.b32.xlu0 %v2667, 64
        %v3131 = vpop.permute.xlu0 %3130
        %3132 = vrot.lane.b32.xlu0 %v2668, 64
        %v3133 = vpop.permute.xlu0 %3132
        %3134 = vrot.lane.b32.xlu0 %v2669, 64
        %v3135 = vpop.permute.xlu0 %3134
        %3136 = vrot.lane.b32.xlu0 %v2670, 64
        %v3137 = vpop.permute.xlu0 %3136
        %3138 = vrot.lane.b32.xlu0 %v2671, 64
        %v3139 = vpop.permute.xlu0 %3138
        %3140 = vrot.lane.b32.xlu0 %v2672, 64
        %v3141 = vpop.permute.xlu0 %3140
        %3142 = vrot.lane.b32.xlu0 %v2673, 64
        %v3143 = vpop.permute.xlu0 %3142
        %3144 = vrot.lane.b32.xlu0 %v2674, 64
        %v3145 = vpop.permute.xlu0 %3144
        %3146 = vrot.lane.b32.xlu0 %v2675, 64
        %v3147 = vpop.permute.xlu0 %3146
        %3148 = vrot.lane.b32.xlu0 %v2676, 64
        %v3149 = vpop.permute.xlu0 %3148
        %3150 = vrot.lane.b32.xlu0 %v2677, 64
        %v3151 = vpop.permute.xlu0 %3150
        %3152 = vrot.lane.b32.xlu0 %v2678, 64
        %v3153 = vpop.permute.xlu0 %3152
        %3154 = vrot.lane.b32.xlu0 %v2679, 64
        %v3155 = vpop.permute.xlu0 %3154
        %3156 = vrot.lane.b32.xlu0 %v2680, 64
        %v3157 = vpop.permute.xlu0 %3156
        %3158 = vrot.lane.b32.xlu0 %v2681, 64
        %v3159 = vpop.permute.xlu0 %3158
        %3160 = vrot.lane.b32.xlu0 %v2682, 64
        %v3161 = vpop.permute.xlu0 %3160
        %3162 = vrot.lane.b32.xlu0 %v2683, 64
        %v3163 = vpop.permute.xlu0 %3162
        %3164 = vrot.lane.b32.xlu0 %v2684, 64
        %v3165 = vpop.permute.xlu0 %3164
        %3166 = vrot.lane.b32.xlu0 %v2685, 64
        %v3167 = vpop.permute.xlu0 %3166
        %3168 = vrot.lane.b32.xlu0 %v2686, 64
        %v3169 = vpop.permute.xlu0 %3168
        %3170 = vrot.lane.b32.xlu0 %v2687, 64
        %v3171 = vpop.permute.xlu0 %3170
        %3172 = vrot.lane.b32.xlu0 %v2688, 64
        %v3173 = vpop.permute.xlu0 %3172
        %3174 = vrot.lane.b32.xlu0 %v2689, 64
        %v3175 = vpop.permute.xlu0 %3174
        %3176 = vrot.lane.b32.xlu0 %v2690, 64
        %v3177 = vpop.permute.xlu0 %3176
        %3178 = vrot.lane.b32.xlu0 %v2691, 64
        %v3179 = vpop.permute.xlu0 %3178
        %3180 = vrot.lane.b32.xlu0 %v2692, 64
        %v3181 = vpop.permute.xlu0 %3180
        %3182 = vrot.lane.b32.xlu0 %v2693, 64
        %v3183 = vpop.permute.xlu0 %3182
        %3184 = vrot.lane.b32.xlu0 %v2694, 64
        %v3185 = vpop.permute.xlu0 %3184
        %3186 = vrot.lane.b32.xlu0 %v2695, 64
        %v3187 = vpop.permute.xlu0 %3186
        %3188 = vrot.lane.b32.xlu0 %v2696, 64
        %v3189 = vpop.permute.xlu0 %3188
        %3190 = vrot.lane.b32.xlu0 %v2697, 64
        %v3191 = vpop.permute.xlu0 %3190
        %3192 = vrot.lane.b32.xlu0 %v2698, 64
        %v3193 = vpop.permute.xlu0 %3192
        %3194 = vrot.lane.b32.xlu0 %v2699, 64
        %v3195 = vpop.permute.xlu0 %3194
        %3196 = vrot.lane.b32.xlu0 %v2700, 64
        %v3197 = vpop.permute.xlu0 %3196
        %3198 = vrot.lane.b32.xlu0 %v2701, 64
        %v3199 = vpop.permute.xlu0 %3198
        %3200 = vrot.lane.b32.xlu0 %v2702, 64
        %v3201 = vpop.permute.xlu0 %3200
        %3202 = vrot.lane.b32.xlu0 %v2703, 64
        %v3203 = vpop.permute.xlu0 %3202
        %3204 = vrot.lane.b32.xlu0 %v2704, 64
        %v3205 = vpop.permute.xlu0 %3204
        %3206 = vrot.lane.b32.xlu0 %v2705, 64
        %v3207 = vpop.permute.xlu0 %3206
        %3208 = vrot.lane.b32.xlu0 %v2706, 64
        %v3209 = vpop.permute.xlu0 %3208
        %3210 = vrot.lane.b32.xlu0 %v2707, 64
        %v3211 = vpop.permute.xlu0 %3210
        %3212 = vrot.lane.b32.xlu0 %v2708, 64
        %v3213 = vpop.permute.xlu0 %3212
        %3214 = vrot.lane.b32.xlu0 %v2709, 64
        %v3215 = vpop.permute.xlu0 %3214
        %3216 = vrot.lane.b32.xlu0 %v2710, 64
        %v3217 = vpop.permute.xlu0 %3216
        %3218 = vrot.lane.b32.xlu0 %v2711, 64
        %v3219 = vpop.permute.xlu0 %3218
        %3220 = vrot.lane.b32.xlu0 %v2712, 64
        %v3221 = vpop.permute.xlu0 %3220
        %3222 = vrot.lane.b32.xlu0 %v2713, 64
        %v3223 = vpop.permute.xlu0 %3222
        %3224 = vrot.lane.b32.xlu0 %v2714, 64
        %v3225 = vpop.permute.xlu0 %3224
        %3226 = vrot.lane.b32.xlu0 %v2715, 64
        %v3227 = vpop.permute.xlu0 %3226
        %3228 = vrot.lane.b32.xlu0 %v2716, 64
        %v3229 = vpop.permute.xlu0 %3228
        %3230 = vrot.lane.b32.xlu0 %v2717, 64
        %v3231 = vpop.permute.xlu0 %3230
        %s3296 = scalar_lea.vmem %s437, 512
        %3297 = vst.msk [vmem:[%s3296] sm:$0xf] %vm2782, %v3105
        %3298 = vst.msk [vmem:[%s3296 + $0x4] sm:$0xf] %vm2782, %v3107
        %3299 = vst.msk [vmem:[%s3296 + $0x8] sm:$0xf] %vm2782, %v3109
        %3300 = vst.msk [vmem:[%s3296 + $0xc] sm:$0xf] %vm2782, %v3111
        %3301 = vst.msk [vmem:[%s3296 + $0x10] sm:$0xf] %vm2782, %v3113
        %3302 = vst.msk [vmem:[%s3296 + $0x14] sm:$0xf] %vm2782, %v3115
        %3303 = vst.msk [vmem:[%s3296 + $0x18] sm:$0xf] %vm2782, %v3117
        %3304 = vst.msk [vmem:[%s3296 + $0x1c] sm:$0xf] %vm2782, %v3119
        %3305 = vst.msk [vmem:[%s3296 + $0x20] sm:$0xf] %vm2782, %v3121
        %3306 = vst.msk [vmem:[%s3296 + $0x24] sm:$0xf] %vm2782, %v3123
        %3307 = vst.msk [vmem:[%s3296 + $0x28] sm:$0xf] %vm2782, %v3125
        %3308 = vst.msk [vmem:[%s3296 + $0x2c] sm:$0xf] %vm2782, %v3127
        %3309 = vst.msk [vmem:[%s3296 + $0x30] sm:$0xf] %vm2782, %v3129
        %3310 = vst.msk [vmem:[%s3296 + $0x34] sm:$0xf] %vm2782, %v3131
        %3311 = vst.msk [vmem:[%s3296 + $0x38] sm:$0xf] %vm2782, %v3133
        %3312 = vst.msk [vmem:[%s3296 + $0x3c] sm:$0xf] %vm2782, %v3135
        %3313 = vst.msk [vmem:[%s3296 + $0x40] sm:$0xf] %vm2782, %v3137
        %3314 = vst.msk [vmem:[%s3296 + $0x44] sm:$0xf] %vm2782, %v3139
        %3315 = vst.msk [vmem:[%s3296 + $0x48] sm:$0xf] %vm2782, %v3141
        %3316 = vst.msk [vmem:[%s3296 + $0x4c] sm:$0xf] %vm2782, %v3143
        %3317 = vst.msk [vmem:[%s3296 + $0x50] sm:$0xf] %vm2782, %v3145
        %3318 = vst.msk [vmem:[%s3296 + $0x54] sm:$0xf] %vm2782, %v3147
        %3319 = vst.msk [vmem:[%s3296 + $0x58] sm:$0xf] %vm2782, %v3149
        %3320 = vst.msk [vmem:[%s3296 + $0x5c] sm:$0xf] %vm2782, %v3151
        %3321 = vst.msk [vmem:[%s3296 + $0x60] sm:$0xf] %vm2782, %v3153
        %3322 = vst.msk [vmem:[%s3296 + $0x64] sm:$0xf] %vm2782, %v3155
        %3323 = vst.msk [vmem:[%s3296 + $0x68] sm:$0xf] %vm2782, %v3157
        %3324 = vst.msk [vmem:[%s3296 + $0x6c] sm:$0xf] %vm2782, %v3159
        %3325 = vst.msk [vmem:[%s3296 + $0x70] sm:$0xf] %vm2782, %v3161
        %3326 = vst.msk [vmem:[%s3296 + $0x74] sm:$0xf] %vm2782, %v3163
        %3327 = vst.msk [vmem:[%s3296 + $0x78] sm:$0xf] %vm2782, %v3165
        %3328 = vst.msk [vmem:[%s3296 + $0x7c] sm:$0xf] %vm2782, %v3167
        %3329 = vst.msk [vmem:[%s3296 + $0x80] sm:$0xf] %vm2782, %v3169
        %3330 = vst.msk [vmem:[%s3296 + $0x84] sm:$0xf] %vm2782, %v3171
        %3331 = vst.msk [vmem:[%s3296 + $0x88] sm:$0xf] %vm2782, %v3173
        %3332 = vst.msk [vmem:[%s3296 + $0x8c] sm:$0xf] %vm2782, %v3175
        %3333 = vst.msk [vmem:[%s3296 + $0x90] sm:$0xf] %vm2782, %v3177
        %3334 = vst.msk [vmem:[%s3296 + $0x94] sm:$0xf] %vm2782, %v3179
        %3335 = vst.msk [vmem:[%s3296 + $0x98] sm:$0xf] %vm2782, %v3181
        %3336 = vst.msk [vmem:[%s3296 + $0x9c] sm:$0xf] %vm2782, %v3183
        %3337 = vst.msk [vmem:[%s3296 + $0xa0] sm:$0xf] %vm2782, %v3185
        %3338 = vst.msk [vmem:[%s3296 + $0xa4] sm:$0xf] %vm2782, %v3187
        %3339 = vst.msk [vmem:[%s3296 + $0xa8] sm:$0xf] %vm2782, %v3189
        %3340 = vst.msk [vmem:[%s3296 + $0xac] sm:$0xf] %vm2782, %v3191
        %3341 = vst.msk [vmem:[%s3296 + $0xb0] sm:$0xf] %vm2782, %v3193
        %3342 = vst.msk [vmem:[%s3296 + $0xb4] sm:$0xf] %vm2782, %v3195
        %3343 = vst.msk [vmem:[%s3296 + $0xb8] sm:$0xf] %vm2782, %v3197
        %3344 = vst.msk [vmem:[%s3296 + $0xbc] sm:$0xf] %vm2782, %v3199
        %3345 = vst.msk [vmem:[%s3296 + $0xc0] sm:$0xf] %vm2782, %v3201
        %3346 = vst.msk [vmem:[%s3296 + $0xc4] sm:$0xf] %vm2782, %v3203
        %3347 = vst.msk [vmem:[%s3296 + $0xc8] sm:$0xf] %vm2782, %v3205
        %3348 = vst.msk [vmem:[%s3296 + $0xcc] sm:$0xf] %vm2782, %v3207
        %3349 = vst.msk [vmem:[%s3296 + $0xd0] sm:$0xf] %vm2782, %v3209
        %3350 = vst.msk [vmem:[%s3296 + $0xd4] sm:$0xf] %vm2782, %v3211
        %3351 = vst.msk [vmem:[%s3296 + $0xd8] sm:$0xf] %vm2782, %v3213
        %3352 = vst.msk [vmem:[%s3296 + $0xdc] sm:$0xf] %vm2782, %v3215
        %3353 = vst.msk [vmem:[%s3296 + $0xe0] sm:$0xf] %vm2782, %v3217
        %3354 = vst.msk [vmem:[%s3296 + $0xe4] sm:$0xf] %vm2782, %v3219
        %3355 = vst.msk [vmem:[%s3296 + $0xe8] sm:$0xf] %vm2782, %v3221
        %3356 = vst.msk [vmem:[%s3296 + $0xec] sm:$0xf] %vm2782, %v3223
        %3357 = vst.msk [vmem:[%s3296 + $0xf0] sm:$0xf] %vm2782, %v3225
        %3358 = vst.msk [vmem:[%s3296 + $0xf4] sm:$0xf] %vm2782, %v3227
        %3359 = vst.msk [vmem:[%s3296 + $0xf8] sm:$0xf] %vm2782, %v3229
        %3360 = vst.msk [vmem:[%s3296 + $0xfc] sm:$0xf] %vm2782, %v3231
        %3361 = vrot.lane.b32.xlu0 %v2654, 32
        %v3362 = vpop.permute.xlu0 %3361
        %3363 = vrot.lane.b32.xlu0 %v2655, 32
        %v3364 = vpop.permute.xlu0 %3363
        %3365 = vrot.lane.b32.xlu0 %v2656, 32
        %v3366 = vpop.permute.xlu0 %3365
        %3367 = vrot.lane.b32.xlu0 %v2657, 32
        %v3368 = vpop.permute.xlu0 %3367
        %3369 = vrot.lane.b32.xlu0 %v2658, 32
        %v3370 = vpop.permute.xlu0 %3369
        %3371 = vrot.lane.b32.xlu0 %v2659, 32
        %v3372 = vpop.permute.xlu0 %3371
        %3373 = vrot.lane.b32.xlu0 %v2660, 32
        %v3374 = vpop.permute.xlu0 %3373
        %3375 = vrot.lane.b32.xlu0 %v2661, 32
        %v3376 = vpop.permute.xlu0 %3375
        %3377 = vrot.lane.b32.xlu0 %v2662, 32
        %v3378 = vpop.permute.xlu0 %3377
        %3379 = vrot.lane.b32.xlu0 %v2663, 32
        %v3380 = vpop.permute.xlu0 %3379
        %3381 = vrot.lane.b32.xlu0 %v2664, 32
        %v3382 = vpop.permute.xlu0 %3381
        %3383 = vrot.lane.b32.xlu0 %v2665, 32
        %v3384 = vpop.permute.xlu0 %3383
        %3385 = vrot.lane.b32.xlu0 %v2666, 32
        %v3386 = vpop.permute.xlu0 %3385
        %3387 = vrot.lane.b32.xlu0 %v2667, 32
        %v3388 = vpop.permute.xlu0 %3387
        %3389 = vrot.lane.b32.xlu0 %v2668, 32
        %v3390 = vpop.permute.xlu0 %3389
        %3391 = vrot.lane.b32.xlu0 %v2669, 32
        %v3392 = vpop.permute.xlu0 %3391
        %3393 = vrot.lane.b32.xlu0 %v2670, 32
        %v3394 = vpop.permute.xlu0 %3393
        %3395 = vrot.lane.b32.xlu0 %v2671, 32
        %v3396 = vpop.permute.xlu0 %3395
        %3397 = vrot.lane.b32.xlu0 %v2672, 32
        %v3398 = vpop.permute.xlu0 %3397
        %3399 = vrot.lane.b32.xlu0 %v2673, 32
        %v3400 = vpop.permute.xlu0 %3399
        %3401 = vrot.lane.b32.xlu0 %v2674, 32
        %v3402 = vpop.permute.xlu0 %3401
        %3403 = vrot.lane.b32.xlu0 %v2675, 32
        %v3404 = vpop.permute.xlu0 %3403
        %3405 = vrot.lane.b32.xlu0 %v2676, 32
        %v3406 = vpop.permute.xlu0 %3405
        %3407 = vrot.lane.b32.xlu0 %v2677, 32
        %v3408 = vpop.permute.xlu0 %3407
        %3409 = vrot.lane.b32.xlu0 %v2678, 32
        %v3410 = vpop.permute.xlu0 %3409
        %3411 = vrot.lane.b32.xlu0 %v2679, 32
        %v3412 = vpop.permute.xlu0 %3411
        %3413 = vrot.lane.b32.xlu0 %v2680, 32
        %v3414 = vpop.permute.xlu0 %3413
        %3415 = vrot.lane.b32.xlu0 %v2681, 32
        %v3416 = vpop.permute.xlu0 %3415
        %3417 = vrot.lane.b32.xlu0 %v2682, 32
        %v3418 = vpop.permute.xlu0 %3417
        %3419 = vrot.lane.b32.xlu0 %v2683, 32
        %v3420 = vpop.permute.xlu0 %3419
        %3421 = vrot.lane.b32.xlu0 %v2684, 32
        %v3422 = vpop.permute.xlu0 %3421
        %3423 = vrot.lane.b32.xlu0 %v2685, 32
        %v3424 = vpop.permute.xlu0 %3423
        %3425 = vrot.lane.b32.xlu0 %v2686, 32
        %v3426 = vpop.permute.xlu0 %3425
        %3427 = vrot.lane.b32.xlu0 %v2687, 32
        %v3428 = vpop.permute.xlu0 %3427
        %3429 = vrot.lane.b32.xlu0 %v2688, 32
        %v3430 = vpop.permute.xlu0 %3429
        %3431 = vrot.lane.b32.xlu0 %v2689, 32
        %v3432 = vpop.permute.xlu0 %3431
        %3433 = vrot.lane.b32.xlu0 %v2690, 32
        %v3434 = vpop.permute.xlu0 %3433
        %3435 = vrot.lane.b32.xlu0 %v2691, 32
        %v3436 = vpop.permute.xlu0 %3435
        %3437 = vrot.lane.b32.xlu0 %v2692, 32
        %v3438 = vpop.permute.xlu0 %3437
        %3439 = vrot.lane.b32.xlu0 %v2693, 32
        %v3440 = vpop.permute.xlu0 %3439
        %3441 = vrot.lane.b32.xlu0 %v2694, 32
        %v3442 = vpop.permute.xlu0 %3441
        %3443 = vrot.lane.b32.xlu0 %v2695, 32
        %v3444 = vpop.permute.xlu0 %3443
        %3445 = vrot.lane.b32.xlu0 %v2696, 32
        %v3446 = vpop.permute.xlu0 %3445
        %3447 = vrot.lane.b32.xlu0 %v2697, 32
        %v3448 = vpop.permute.xlu0 %3447
        %3449 = vrot.lane.b32.xlu0 %v2698, 32
        %v3450 = vpop.permute.xlu0 %3449
        %3451 = vrot.lane.b32.xlu0 %v2699, 32
        %v3452 = vpop.permute.xlu0 %3451
        %3453 = vrot.lane.b32.xlu0 %v2700, 32
        %v3454 = vpop.permute.xlu0 %3453
        %3455 = vrot.lane.b32.xlu0 %v2701, 32
        %v3456 = vpop.permute.xlu0 %3455
        %3457 = vrot.lane.b32.xlu0 %v2702, 32
        %v3458 = vpop.permute.xlu0 %3457
        %3459 = vrot.lane.b32.xlu0 %v2703, 32
        %v3460 = vpop.permute.xlu0 %3459
        %3461 = vrot.lane.b32.xlu0 %v2704, 32
        %v3462 = vpop.permute.xlu0 %3461
        %3463 = vrot.lane.b32.xlu0 %v2705, 32
        %v3464 = vpop.permute.xlu0 %3463
        %3465 = vrot.lane.b32.xlu0 %v2706, 32
        %v3466 = vpop.permute.xlu0 %3465
        %3467 = vrot.lane.b32.xlu0 %v2707, 32
        %v3468 = vpop.permute.xlu0 %3467
        %3469 = vrot.lane.b32.xlu0 %v2708, 32
        %v3470 = vpop.permute.xlu0 %3469
        %3471 = vrot.lane.b32.xlu0 %v2709, 32
        %v3472 = vpop.permute.xlu0 %3471
        %3473 = vrot.lane.b32.xlu0 %v2710, 32
        %v3474 = vpop.permute.xlu0 %3473
        %3475 = vrot.lane.b32.xlu0 %v2711, 32
        %v3476 = vpop.permute.xlu0 %3475
        %3477 = vrot.lane.b32.xlu0 %v2712, 32
        %v3478 = vpop.permute.xlu0 %3477
        %3479 = vrot.lane.b32.xlu0 %v2713, 32
        %v3480 = vpop.permute.xlu0 %3479
        %3481 = vrot.lane.b32.xlu0 %v2714, 32
        %v3482 = vpop.permute.xlu0 %3481
        %3483 = vrot.lane.b32.xlu0 %v2715, 32
        %v3484 = vpop.permute.xlu0 %3483
        %3485 = vrot.lane.b32.xlu0 %v2716, 32
        %v3486 = vpop.permute.xlu0 %3485
        %3487 = vrot.lane.b32.xlu0 %v2717, 32
        %v3488 = vpop.permute.xlu0 %3487
        %s3553 = scalar_lea.vmem %s437, 768
        %3554 = vst.msk [vmem:[%s3553] sm:$0xf] %vm2782, %v3362
        %3555 = vst.msk [vmem:[%s3553 + $0x4] sm:$0xf] %vm2782, %v3364
        %3556 = vst.msk [vmem:[%s3553 + $0x8] sm:$0xf] %vm2782, %v3366
        %3557 = vst.msk [vmem:[%s3553 + $0xc] sm:$0xf] %vm2782, %v3368
        %3558 = vst.msk [vmem:[%s3553 + $0x10] sm:$0xf] %vm2782, %v3370
        %3559 = vst.msk [vmem:[%s3553 + $0x14] sm:$0xf] %vm2782, %v3372
        %3560 = vst.msk [vmem:[%s3553 + $0x18] sm:$0xf] %vm2782, %v3374
        %3561 = vst.msk [vmem:[%s3553 + $0x1c] sm:$0xf] %vm2782, %v3376
        %3562 = vst.msk [vmem:[%s3553 + $0x20] sm:$0xf] %vm2782, %v3378
        %3563 = vst.msk [vmem:[%s3553 + $0x24] sm:$0xf] %vm2782, %v3380
        %3564 = vst.msk [vmem:[%s3553 + $0x28] sm:$0xf] %vm2782, %v3382
        %3565 = vst.msk [vmem:[%s3553 + $0x2c] sm:$0xf] %vm2782, %v3384
        %3566 = vst.msk [vmem:[%s3553 + $0x30] sm:$0xf] %vm2782, %v3386
        %3567 = vst.msk [vmem:[%s3553 + $0x34] sm:$0xf] %vm2782, %v3388
        %3568 = vst.msk [vmem:[%s3553 + $0x38] sm:$0xf] %vm2782, %v3390
        %3569 = vst.msk [vmem:[%s3553 + $0x3c] sm:$0xf] %vm2782, %v3392
        %3570 = vst.msk [vmem:[%s3553 + $0x40] sm:$0xf] %vm2782, %v3394
        %3571 = vst.msk [vmem:[%s3553 + $0x44] sm:$0xf] %vm2782, %v3396
        %3572 = vst.msk [vmem:[%s3553 + $0x48] sm:$0xf] %vm2782, %v3398
        %3573 = vst.msk [vmem:[%s3553 + $0x4c] sm:$0xf] %vm2782, %v3400
        %3574 = vst.msk [vmem:[%s3553 + $0x50] sm:$0xf] %vm2782, %v3402
        %3575 = vst.msk [vmem:[%s3553 + $0x54] sm:$0xf] %vm2782, %v3404
        %3576 = vst.msk [vmem:[%s3553 + $0x58] sm:$0xf] %vm2782, %v3406
        %3577 = vst.msk [vmem:[%s3553 + $0x5c] sm:$0xf] %vm2782, %v3408
        %3578 = vst.msk [vmem:[%s3553 + $0x60] sm:$0xf] %vm2782, %v3410
        %3579 = vst.msk [vmem:[%s3553 + $0x64] sm:$0xf] %vm2782, %v3412
        %3580 = vst.msk [vmem:[%s3553 + $0x68] sm:$0xf] %vm2782, %v3414
        %3581 = vst.msk [vmem:[%s3553 + $0x6c] sm:$0xf] %vm2782, %v3416
        %3582 = vst.msk [vmem:[%s3553 + $0x70] sm:$0xf] %vm2782, %v3418
        %3583 = vst.msk [vmem:[%s3553 + $0x74] sm:$0xf] %vm2782, %v3420
        %3584 = vst.msk [vmem:[%s3553 + $0x78] sm:$0xf] %vm2782, %v3422
        %3585 = vst.msk [vmem:[%s3553 + $0x7c] sm:$0xf] %vm2782, %v3424
        %3586 = vst.msk [vmem:[%s3553 + $0x80] sm:$0xf] %vm2782, %v3426
        %3587 = vst.msk [vmem:[%s3553 + $0x84] sm:$0xf] %vm2782, %v3428
        %3588 = vst.msk [vmem:[%s3553 + $0x88] sm:$0xf] %vm2782, %v3430
        %3589 = vst.msk [vmem:[%s3553 + $0x8c] sm:$0xf] %vm2782, %v3432
        %3590 = vst.msk [vmem:[%s3553 + $0x90] sm:$0xf] %vm2782, %v3434
        %3591 = vst.msk [vmem:[%s3553 + $0x94] sm:$0xf] %vm2782, %v3436
        %3592 = vst.msk [vmem:[%s3553 + $0x98] sm:$0xf] %vm2782, %v3438
        %3593 = vst.msk [vmem:[%s3553 + $0x9c] sm:$0xf] %vm2782, %v3440
        %3594 = vst.msk [vmem:[%s3553 + $0xa0] sm:$0xf] %vm2782, %v3442
        %3595 = vst.msk [vmem:[%s3553 + $0xa4] sm:$0xf] %vm2782, %v3444
        %3596 = vst.msk [vmem:[%s3553 + $0xa8] sm:$0xf] %vm2782, %v3446
        %3597 = vst.msk [vmem:[%s3553 + $0xac] sm:$0xf] %vm2782, %v3448
        %3598 = vst.msk [vmem:[%s3553 + $0xb0] sm:$0xf] %vm2782, %v3450
        %3599 = vst.msk [vmem:[%s3553 + $0xb4] sm:$0xf] %vm2782, %v3452
        %3600 = vst.msk [vmem:[%s3553 + $0xb8] sm:$0xf] %vm2782, %v3454
        %3601 = vst.msk [vmem:[%s3553 + $0xbc] sm:$0xf] %vm2782, %v3456
        %3602 = vst.msk [vmem:[%s3553 + $0xc0] sm:$0xf] %vm2782, %v3458
        %3603 = vst.msk [vmem:[%s3553 + $0xc4] sm:$0xf] %vm2782, %v3460
        %3604 = vst.msk [vmem:[%s3553 + $0xc8] sm:$0xf] %vm2782, %v3462
        %3605 = vst.msk [vmem:[%s3553 + $0xcc] sm:$0xf] %vm2782, %v3464
        %3606 = vst.msk [vmem:[%s3553 + $0xd0] sm:$0xf] %vm2782, %v3466
        %3607 = vst.msk [vmem:[%s3553 + $0xd4] sm:$0xf] %vm2782, %v3468
        %3608 = vst.msk [vmem:[%s3553 + $0xd8] sm:$0xf] %vm2782, %v3470
        %3609 = vst.msk [vmem:[%s3553 + $0xdc] sm:$0xf] %vm2782, %v3472
        %3610 = vst.msk [vmem:[%s3553 + $0xe0] sm:$0xf] %vm2782, %v3474
        %3611 = vst.msk [vmem:[%s3553 + $0xe4] sm:$0xf] %vm2782, %v3476
        %3612 = vst.msk [vmem:[%s3553 + $0xe8] sm:$0xf] %vm2782, %v3478
        %3613 = vst.msk [vmem:[%s3553 + $0xec] sm:$0xf] %vm2782, %v3480
        %3614 = vst.msk [vmem:[%s3553 + $0xf0] sm:$0xf] %vm2782, %v3482
        %3615 = vst.msk [vmem:[%s3553 + $0xf4] sm:$0xf] %vm2782, %v3484
        %3616 = vst.msk [vmem:[%s3553 + $0xf8] sm:$0xf] %vm2782, %v3486
        %3617 = vst.msk [vmem:[%s3553 + $0xfc] sm:$0xf] %vm2782, %v3488
        %v3650 = vunpack.c.l.b16 %v2495
        %v3651 = vunpack.c.h.b16 %v2495
        %v3652 = vunpack.c.l.b16 %v2497
        %v3653 = vunpack.c.h.b16 %v2497
        %v3654 = vunpack.c.l.b16 %v2499
        %v3655 = vunpack.c.h.b16 %v2499
        %v3656 = vunpack.c.l.b16 %v2501
        %v3657 = vunpack.c.h.b16 %v2501
        %v3658 = vunpack.c.l.b16 %v2503
        %v3659 = vunpack.c.h.b16 %v2503
        %v3660 = vunpack.c.l.b16 %v2505
        %v3661 = vunpack.c.h.b16 %v2505
        %v3662 = vunpack.c.l.b16 %v2507
        %v3663 = vunpack.c.h.b16 %v2507
        %v3664 = vunpack.c.l.b16 %v2509
        %v3665 = vunpack.c.h.b16 %v2509
        %v3666 = vunpack.c.l.b16 %v2511
        %v3667 = vunpack.c.h.b16 %v2511
        %v3668 = vunpack.c.l.b16 %v2513
        %v3669 = vunpack.c.h.b16 %v2513
        %v3670 = vunpack.c.l.b16 %v2515
        %v3671 = vunpack.c.h.b16 %v2515
        %v3672 = vunpack.c.l.b16 %v2517
        %v3673 = vunpack.c.h.b16 %v2517
        %v3674 = vunpack.c.l.b16 %v2519
        %v3675 = vunpack.c.h.b16 %v2519
        %v3676 = vunpack.c.l.b16 %v2521
        %v3677 = vunpack.c.h.b16 %v2521
        %v3678 = vunpack.c.l.b16 %v2523
        %v3679 = vunpack.c.h.b16 %v2523
        %v3680 = vunpack.c.l.b16 %v2525
        %v3681 = vunpack.c.h.b16 %v2525
        %v3682 = vunpack.c.l.b16 %v2527
        %v3683 = vunpack.c.h.b16 %v2527
        %v3684 = vunpack.c.l.b16 %v2529
        %v3685 = vunpack.c.h.b16 %v2529
        %v3686 = vunpack.c.l.b16 %v2531
        %v3687 = vunpack.c.h.b16 %v2531
        %v3688 = vunpack.c.l.b16 %v2533
        %v3689 = vunpack.c.h.b16 %v2533
        %v3690 = vunpack.c.l.b16 %v2535
        %v3691 = vunpack.c.h.b16 %v2535
        %v3692 = vunpack.c.l.b16 %v2537
        %v3693 = vunpack.c.h.b16 %v2537
        %v3694 = vunpack.c.l.b16 %v2539
        %v3695 = vunpack.c.h.b16 %v2539
        %v3696 = vunpack.c.l.b16 %v2541
        %v3697 = vunpack.c.h.b16 %v2541
        %v3698 = vunpack.c.l.b16 %v2543
        %v3699 = vunpack.c.h.b16 %v2543
        %v3700 = vunpack.c.l.b16 %v2545
        %v3701 = vunpack.c.h.b16 %v2545
        %v3702 = vunpack.c.l.b16 %v2547
        %v3703 = vunpack.c.h.b16 %v2547
        %v3704 = vunpack.c.l.b16 %v2549
        %v3705 = vunpack.c.h.b16 %v2549
        %v3706 = vunpack.c.l.b16 %v2551
        %v3707 = vunpack.c.h.b16 %v2551
        %v3708 = vunpack.c.l.b16 %v2553
        %v3709 = vunpack.c.h.b16 %v2553
        %v3710 = vunpack.c.l.b16 %v2555
        %v3711 = vunpack.c.h.b16 %v2555
        %v3712 = vunpack.c.l.b16 %v2557
        %v3713 = vunpack.c.h.b16 %v2557
        %v3714 = vpack.c.b16 %v3650, %v3650
        %v3715 = vpack.c.b16 %v3651, %v3651
        %v3716 = vpack.c.b16 %v3652, %v3652
        %v3717 = vpack.c.b16 %v3653, %v3653
        %v3718 = vpack.c.b16 %v3654, %v3654
        %v3719 = vpack.c.b16 %v3655, %v3655
        %v3720 = vpack.c.b16 %v3656, %v3656
        %v3721 = vpack.c.b16 %v3657, %v3657
        %v3722 = vpack.c.b16 %v3658, %v3658
        %v3723 = vpack.c.b16 %v3659, %v3659
        %v3724 = vpack.c.b16 %v3660, %v3660
        %v3725 = vpack.c.b16 %v3661, %v3661
        %v3726 = vpack.c.b16 %v3662, %v3662
        %v3727 = vpack.c.b16 %v3663, %v3663
        %v3728 = vpack.c.b16 %v3664, %v3664
        %v3729 = vpack.c.b16 %v3665, %v3665
        %v3730 = vpack.c.b16 %v3666, %v3666
        %v3731 = vpack.c.b16 %v3667, %v3667
        %v3732 = vpack.c.b16 %v3668, %v3668
        %v3733 = vpack.c.b16 %v3669, %v3669
        %v3734 = vpack.c.b16 %v3670, %v3670
        %v3735 = vpack.c.b16 %v3671, %v3671
        %v3736 = vpack.c.b16 %v3672, %v3672
        %v3737 = vpack.c.b16 %v3673, %v3673
        %v3738 = vpack.c.b16 %v3674, %v3674
        %v3739 = vpack.c.b16 %v3675, %v3675
        %v3740 = vpack.c.b16 %v3676, %v3676
        %v3741 = vpack.c.b16 %v3677, %v3677
        %v3742 = vpack.c.b16 %v3678, %v3678
        %v3743 = vpack.c.b16 %v3679, %v3679
        %v3744 = vpack.c.b16 %v3680, %v3680
        %v3745 = vpack.c.b16 %v3681, %v3681
        %v3746 = vpack.c.b16 %v3682, %v3682
        %v3747 = vpack.c.b16 %v3683, %v3683
        %v3748 = vpack.c.b16 %v3684, %v3684
        %v3749 = vpack.c.b16 %v3685, %v3685
        %v3750 = vpack.c.b16 %v3686, %v3686
        %v3751 = vpack.c.b16 %v3687, %v3687
        %v3752 = vpack.c.b16 %v3688, %v3688
        %v3753 = vpack.c.b16 %v3689, %v3689
        %v3754 = vpack.c.b16 %v3690, %v3690
        %v3755 = vpack.c.b16 %v3691, %v3691
        %v3756 = vpack.c.b16 %v3692, %v3692
        %v3757 = vpack.c.b16 %v3693, %v3693
        %v3758 = vpack.c.b16 %v3694, %v3694
        %v3759 = vpack.c.b16 %v3695, %v3695
        %v3760 = vpack.c.b16 %v3696, %v3696
        %v3761 = vpack.c.b16 %v3697, %v3697
        %v3762 = vpack.c.b16 %v3698, %v3698
        %v3763 = vpack.c.b16 %v3699, %v3699
        %v3764 = vpack.c.b16 %v3700, %v3700
        %v3765 = vpack.c.b16 %v3701, %v3701
        %v3766 = vpack.c.b16 %v3702, %v3702
        %v3767 = vpack.c.b16 %v3703, %v3703
        %v3768 = vpack.c.b16 %v3704, %v3704
        %v3769 = vpack.c.b16 %v3705, %v3705
        %v3770 = vpack.c.b16 %v3706, %v3706
        %v3771 = vpack.c.b16 %v3707, %v3707
        %v3772 = vpack.c.b16 %v3708, %v3708
        %v3773 = vpack.c.b16 %v3709, %v3709
        %v3774 = vpack.c.b16 %v3710, %v3710
        %v3775 = vpack.c.b16 %v3711, %v3711
        %v3776 = vpack.c.b16 %v3712, %v3712
        %v3777 = vpack.c.b16 %v3713, %v3713
        %s3842 = scalar_lea.vmem %s437, 1024
        %3843 = vst.msk [vmem:[%s3842] sm:$0xf] %vm2782, %v3714
        %3844 = vst.msk [vmem:[%s3842 + $0x4] sm:$0xf] %vm2782, %v3715
        %3845 = vst.msk [vmem:[%s3842 + $0x8] sm:$0xf] %vm2782, %v3716
        %3846 = vst.msk [vmem:[%s3842 + $0xc] sm:$0xf] %vm2782, %v3717
        %3847 = vst.msk [vmem:[%s3842 + $0x10] sm:$0xf] %vm2782, %v3718
        %3848 = vst.msk [vmem:[%s3842 + $0x14] sm:$0xf] %vm2782, %v3719
        %3849 = vst.msk [vmem:[%s3842 + $0x18] sm:$0xf] %vm2782, %v3720
        %3850 = vst.msk [vmem:[%s3842 + $0x1c] sm:$0xf] %vm2782, %v3721
        %3851 = vst.msk [vmem:[%s3842 + $0x20] sm:$0xf] %vm2782, %v3722
        %3852 = vst.msk [vmem:[%s3842 + $0x24] sm:$0xf] %vm2782, %v3723
        %3853 = vst.msk [vmem:[%s3842 + $0x28] sm:$0xf] %vm2782, %v3724
        %3854 = vst.msk [vmem:[%s3842 + $0x2c] sm:$0xf] %vm2782, %v3725
        %3855 = vst.msk [vmem:[%s3842 + $0x30] sm:$0xf] %vm2782, %v3726
        %3856 = vst.msk [vmem:[%s3842 + $0x34] sm:$0xf] %vm2782, %v3727
        %3857 = vst.msk [vmem:[%s3842 + $0x38] sm:$0xf] %vm2782, %v3728
        %3858 = vst.msk [vmem:[%s3842 + $0x3c] sm:$0xf] %vm2782, %v3729
        %3859 = vst.msk [vmem:[%s3842 + $0x40] sm:$0xf] %vm2782, %v3730
        %3860 = vst.msk [vmem:[%s3842 + $0x44] sm:$0xf] %vm2782, %v3731
        %3861 = vst.msk [vmem:[%s3842 + $0x48] sm:$0xf] %vm2782, %v3732
        %3862 = vst.msk [vmem:[%s3842 + $0x4c] sm:$0xf] %vm2782, %v3733
        %3863 = vst.msk [vmem:[%s3842 + $0x50] sm:$0xf] %vm2782, %v3734
        %3864 = vst.msk [vmem:[%s3842 + $0x54] sm:$0xf] %vm2782, %v3735
        %3865 = vst.msk [vmem:[%s3842 + $0x58] sm:$0xf] %vm2782, %v3736
        %3866 = vst.msk [vmem:[%s3842 + $0x5c] sm:$0xf] %vm2782, %v3737
        %3867 = vst.msk [vmem:[%s3842 + $0x60] sm:$0xf] %vm2782, %v3738
        %3868 = vst.msk [vmem:[%s3842 + $0x64] sm:$0xf] %vm2782, %v3739
        %3869 = vst.msk [vmem:[%s3842 + $0x68] sm:$0xf] %vm2782, %v3740
        %3870 = vst.msk [vmem:[%s3842 + $0x6c] sm:$0xf] %vm2782, %v3741
        %3871 = vst.msk [vmem:[%s3842 + $0x70] sm:$0xf] %vm2782, %v3742
        %3872 = vst.msk [vmem:[%s3842 + $0x74] sm:$0xf] %vm2782, %v3743
        %3873 = vst.msk [vmem:[%s3842 + $0x78] sm:$0xf] %vm2782, %v3744
        %3874 = vst.msk [vmem:[%s3842 + $0x7c] sm:$0xf] %vm2782, %v3745
        %3875 = vst.msk [vmem:[%s3842 + $0x80] sm:$0xf] %vm2782, %v3746
        %3876 = vst.msk [vmem:[%s3842 + $0x84] sm:$0xf] %vm2782, %v3747
        %3877 = vst.msk [vmem:[%s3842 + $0x88] sm:$0xf] %vm2782, %v3748
        %3878 = vst.msk [vmem:[%s3842 + $0x8c] sm:$0xf] %vm2782, %v3749
        %3879 = vst.msk [vmem:[%s3842 + $0x90] sm:$0xf] %vm2782, %v3750
        %3880 = vst.msk [vmem:[%s3842 + $0x94] sm:$0xf] %vm2782, %v3751
        %3881 = vst.msk [vmem:[%s3842 + $0x98] sm:$0xf] %vm2782, %v3752
        %3882 = vst.msk [vmem:[%s3842 + $0x9c] sm:$0xf] %vm2782, %v3753
        %3883 = vst.msk [vmem:[%s3842 + $0xa0] sm:$0xf] %vm2782, %v3754
        %3884 = vst.msk [vmem:[%s3842 + $0xa4] sm:$0xf] %vm2782, %v3755
        %3885 = vst.msk [vmem:[%s3842 + $0xa8] sm:$0xf] %vm2782, %v3756
        %3886 = vst.msk [vmem:[%s3842 + $0xac] sm:$0xf] %vm2782, %v3757
        %3887 = vst.msk [vmem:[%s3842 + $0xb0] sm:$0xf] %vm2782, %v3758
        %3888 = vst.msk [vmem:[%s3842 + $0xb4] sm:$0xf] %vm2782, %v3759
        %3889 = vst.msk [vmem:[%s3842 + $0xb8] sm:$0xf] %vm2782, %v3760
        %3890 = vst.msk [vmem:[%s3842 + $0xbc] sm:$0xf] %vm2782, %v3761
        %3891 = vst.msk [vmem:[%s3842 + $0xc0] sm:$0xf] %vm2782, %v3762
        %3892 = vst.msk [vmem:[%s3842 + $0xc4] sm:$0xf] %vm2782, %v3763
        %3893 = vst.msk [vmem:[%s3842 + $0xc8] sm:$0xf] %vm2782, %v3764
        %3894 = vst.msk [vmem:[%s3842 + $0xcc] sm:$0xf] %vm2782, %v3765
        %3895 = vst.msk [vmem:[%s3842 + $0xd0] sm:$0xf] %vm2782, %v3766
        %3896 = vst.msk [vmem:[%s3842 + $0xd4] sm:$0xf] %vm2782, %v3767
        %3897 = vst.msk [vmem:[%s3842 + $0xd8] sm:$0xf] %vm2782, %v3768
        %3898 = vst.msk [vmem:[%s3842 + $0xdc] sm:$0xf] %vm2782, %v3769
        %3899 = vst.msk [vmem:[%s3842 + $0xe0] sm:$0xf] %vm2782, %v3770
        %3900 = vst.msk [vmem:[%s3842 + $0xe4] sm:$0xf] %vm2782, %v3771
        %3901 = vst.msk [vmem:[%s3842 + $0xe8] sm:$0xf] %vm2782, %v3772
        %3902 = vst.msk [vmem:[%s3842 + $0xec] sm:$0xf] %vm2782, %v3773
        %3903 = vst.msk [vmem:[%s3842 + $0xf0] sm:$0xf] %vm2782, %v3774
        %3904 = vst.msk [vmem:[%s3842 + $0xf4] sm:$0xf] %vm2782, %v3775
        %3905 = vst.msk [vmem:[%s3842 + $0xf8] sm:$0xf] %vm2782, %v3776
        %3906 = vst.msk [vmem:[%s3842 + $0xfc] sm:$0xf] %vm2782, %v3777
        %3907 = vrot.lane.b32.xlu0 %v3714, 96
        %v3908 = vpop.permute.xlu0 %3907
        %3909 = vrot.lane.b32.xlu0 %v3715, 96
        %v3910 = vpop.permute.xlu0 %3909
        %3911 = vrot.lane.b32.xlu0 %v3716, 96
        %v3912 = vpop.permute.xlu0 %3911
        %3913 = vrot.lane.b32.xlu0 %v3717, 96
        %v3914 = vpop.permute.xlu0 %3913
        %3915 = vrot.lane.b32.xlu0 %v3718, 96
        %v3916 = vpop.permute.xlu0 %3915
        %3917 = vrot.lane.b32.xlu0 %v3719, 96
        %v3918 = vpop.permute.xlu0 %3917
        %3919 = vrot.lane.b32.xlu0 %v3720, 96
        %v3920 = vpop.permute.xlu0 %3919
        %3921 = vrot.lane.b32.xlu0 %v3721, 96
        %v3922 = vpop.permute.xlu0 %3921
        %3923 = vrot.lane.b32.xlu0 %v3722, 96
        %v3924 = vpop.permute.xlu0 %3923
        %3925 = vrot.lane.b32.xlu0 %v3723, 96
        %v3926 = vpop.permute.xlu0 %3925
        %3927 = vrot.lane.b32.xlu0 %v3724, 96
        %v3928 = vpop.permute.xlu0 %3927
        %3929 = vrot.lane.b32.xlu0 %v3725, 96
        %v3930 = vpop.permute.xlu0 %3929
        %3931 = vrot.lane.b32.xlu0 %v3726, 96
        %v3932 = vpop.permute.xlu0 %3931
        %3933 = vrot.lane.b32.xlu0 %v3727, 96
        %v3934 = vpop.permute.xlu0 %3933
        %3935 = vrot.lane.b32.xlu0 %v3728, 96
        %v3936 = vpop.permute.xlu0 %3935
        %3937 = vrot.lane.b32.xlu0 %v3729, 96
        %v3938 = vpop.permute.xlu0 %3937
        %3939 = vrot.lane.b32.xlu0 %v3730, 96
        %v3940 = vpop.permute.xlu0 %3939
        %3941 = vrot.lane.b32.xlu0 %v3731, 96
        %v3942 = vpop.permute.xlu0 %3941
        %3943 = vrot.lane.b32.xlu0 %v3732, 96
        %v3944 = vpop.permute.xlu0 %3943
        %3945 = vrot.lane.b32.xlu0 %v3733, 96
        %v3946 = vpop.permute.xlu0 %3945
        %3947 = vrot.lane.b32.xlu0 %v3734, 96
        %v3948 = vpop.permute.xlu0 %3947
        %3949 = vrot.lane.b32.xlu0 %v3735, 96
        %v3950 = vpop.permute.xlu0 %3949
        %3951 = vrot.lane.b32.xlu0 %v3736, 96
        %v3952 = vpop.permute.xlu0 %3951
        %3953 = vrot.lane.b32.xlu0 %v3737, 96
        %v3954 = vpop.permute.xlu0 %3953
        %3955 = vrot.lane.b32.xlu0 %v3738, 96
        %v3956 = vpop.permute.xlu0 %3955
        %3957 = vrot.lane.b32.xlu0 %v3739, 96
        %v3958 = vpop.permute.xlu0 %3957
        %3959 = vrot.lane.b32.xlu0 %v3740, 96
        %v3960 = vpop.permute.xlu0 %3959
        %3961 = vrot.lane.b32.xlu0 %v3741, 96
        %v3962 = vpop.permute.xlu0 %3961
        %3963 = vrot.lane.b32.xlu0 %v3742, 96
        %v3964 = vpop.permute.xlu0 %3963
        %3965 = vrot.lane.b32.xlu0 %v3743, 96
        %v3966 = vpop.permute.xlu0 %3965
        %3967 = vrot.lane.b32.xlu0 %v3744, 96
        %v3968 = vpop.permute.xlu0 %3967
        %3969 = vrot.lane.b32.xlu0 %v3745, 96
        %v3970 = vpop.permute.xlu0 %3969
        %3971 = vrot.lane.b32.xlu0 %v3746, 96
        %v3972 = vpop.permute.xlu0 %3971
        %3973 = vrot.lane.b32.xlu0 %v3747, 96
        %v3974 = vpop.permute.xlu0 %3973
        %3975 = vrot.lane.b32.xlu0 %v3748, 96
        %v3976 = vpop.permute.xlu0 %3975
        %3977 = vrot.lane.b32.xlu0 %v3749, 96
        %v3978 = vpop.permute.xlu0 %3977
        %3979 = vrot.lane.b32.xlu0 %v3750, 96
        %v3980 = vpop.permute.xlu0 %3979
        %3981 = vrot.lane.b32.xlu0 %v3751, 96
        %v3982 = vpop.permute.xlu0 %3981
        %3983 = vrot.lane.b32.xlu0 %v3752, 96
        %v3984 = vpop.permute.xlu0 %3983
        %3985 = vrot.lane.b32.xlu0 %v3753, 96
        %v3986 = vpop.permute.xlu0 %3985
        %3987 = vrot.lane.b32.xlu0 %v3754, 96
        %v3988 = vpop.permute.xlu0 %3987
        %3989 = vrot.lane.b32.xlu0 %v3755, 96
        %v3990 = vpop.permute.xlu0 %3989
        %3991 = vrot.lane.b32.xlu0 %v3756, 96
        %v3992 = vpop.permute.xlu0 %3991
        %3993 = vrot.lane.b32.xlu0 %v3757, 96
        %v3994 = vpop.permute.xlu0 %3993
        %3995 = vrot.lane.b32.xlu0 %v3758, 96
        %v3996 = vpop.permute.xlu0 %3995
        %3997 = vrot.lane.b32.xlu0 %v3759, 96
        %v3998 = vpop.permute.xlu0 %3997
        %3999 = vrot.lane.b32.xlu0 %v3760, 96
        %v4000 = vpop.permute.xlu0 %3999
        %4001 = vrot.lane.b32.xlu0 %v3761, 96
        %v4002 = vpop.permute.xlu0 %4001
        %4003 = vrot.lane.b32.xlu0 %v3762, 96
        %v4004 = vpop.permute.xlu0 %4003
        %4005 = vrot.lane.b32.xlu0 %v3763, 96
        %v4006 = vpop.permute.xlu0 %4005
        %4007 = vrot.lane.b32.xlu0 %v3764, 96
        %v4008 = vpop.permute.xlu0 %4007
        %4009 = vrot.lane.b32.xlu0 %v3765, 96
        %v4010 = vpop.permute.xlu0 %4009
        %4011 = vrot.lane.b32.xlu0 %v3766, 96
        %v4012 = vpop.permute.xlu0 %4011
        %4013 = vrot.lane.b32.xlu0 %v3767, 96
        %v4014 = vpop.permute.xlu0 %4013
        %4015 = vrot.lane.b32.xlu0 %v3768, 96
        %v4016 = vpop.permute.xlu0 %4015
        %4017 = vrot.lane.b32.xlu0 %v3769, 96
        %v4018 = vpop.permute.xlu0 %4017
        %4019 = vrot.lane.b32.xlu0 %v3770, 96
        %v4020 = vpop.permute.xlu0 %4019
        %4021 = vrot.lane.b32.xlu0 %v3771, 96
        %v4022 = vpop.permute.xlu0 %4021
        %4023 = vrot.lane.b32.xlu0 %v3772, 96
        %v4024 = vpop.permute.xlu0 %4023
        %4025 = vrot.lane.b32.xlu0 %v3773, 96
        %v4026 = vpop.permute.xlu0 %4025
        %4027 = vrot.lane.b32.xlu0 %v3774, 96
        %v4028 = vpop.permute.xlu0 %4027
        %4029 = vrot.lane.b32.xlu0 %v3775, 96
        %v4030 = vpop.permute.xlu0 %4029
        %4031 = vrot.lane.b32.xlu0 %v3776, 96
        %v4032 = vpop.permute.xlu0 %4031
        %4033 = vrot.lane.b32.xlu0 %v3777, 96
        %v4034 = vpop.permute.xlu0 %4033
        %s4099 = scalar_lea.vmem %s437, 1280
        %4100 = vst.msk [vmem:[%s4099] sm:$0xf] %vm2782, %v3908
        %4101 = vst.msk [vmem:[%s4099 + $0x4] sm:$0xf] %vm2782, %v3910
        %4102 = vst.msk [vmem:[%s4099 + $0x8] sm:$0xf] %vm2782, %v3912
        %4103 = vst.msk [vmem:[%s4099 + $0xc] sm:$0xf] %vm2782, %v3914
        %4104 = vst.msk [vmem:[%s4099 + $0x10] sm:$0xf] %vm2782, %v3916
        %4105 = vst.msk [vmem:[%s4099 + $0x14] sm:$0xf] %vm2782, %v3918
        %4106 = vst.msk [vmem:[%s4099 + $0x18] sm:$0xf] %vm2782, %v3920
        %4107 = vst.msk [vmem:[%s4099 + $0x1c] sm:$0xf] %vm2782, %v3922
        %4108 = vst.msk [vmem:[%s4099 + $0x20] sm:$0xf] %vm2782, %v3924
        %4109 = vst.msk [vmem:[%s4099 + $0x24] sm:$0xf] %vm2782, %v3926
        %4110 = vst.msk [vmem:[%s4099 + $0x28] sm:$0xf] %vm2782, %v3928
        %4111 = vst.msk [vmem:[%s4099 + $0x2c] sm:$0xf] %vm2782, %v3930
        %4112 = vst.msk [vmem:[%s4099 + $0x30] sm:$0xf] %vm2782, %v3932
        %4113 = vst.msk [vmem:[%s4099 + $0x34] sm:$0xf] %vm2782, %v3934
        %4114 = vst.msk [vmem:[%s4099 + $0x38] sm:$0xf] %vm2782, %v3936
        %4115 = vst.msk [vmem:[%s4099 + $0x3c] sm:$0xf] %vm2782, %v3938
        %4116 = vst.msk [vmem:[%s4099 + $0x40] sm:$0xf] %vm2782, %v3940
        %4117 = vst.msk [vmem:[%s4099 + $0x44] sm:$0xf] %vm2782, %v3942
        %4118 = vst.msk [vmem:[%s4099 + $0x48] sm:$0xf] %vm2782, %v3944
        %4119 = vst.msk [vmem:[%s4099 + $0x4c] sm:$0xf] %vm2782, %v3946
        %4120 = vst.msk [vmem:[%s4099 + $0x50] sm:$0xf] %vm2782, %v3948
        %4121 = vst.msk [vmem:[%s4099 + $0x54] sm:$0xf] %vm2782, %v3950
        %4122 = vst.msk [vmem:[%s4099 + $0x58] sm:$0xf] %vm2782, %v3952
        %4123 = vst.msk [vmem:[%s4099 + $0x5c] sm:$0xf] %vm2782, %v3954
        %4124 = vst.msk [vmem:[%s4099 + $0x60] sm:$0xf] %vm2782, %v3956
        %4125 = vst.msk [vmem:[%s4099 + $0x64] sm:$0xf] %vm2782, %v3958
        %4126 = vst.msk [vmem:[%s4099 + $0x68] sm:$0xf] %vm2782, %v3960
        %4127 = vst.msk [vmem:[%s4099 + $0x6c] sm:$0xf] %vm2782, %v3962
        %4128 = vst.msk [vmem:[%s4099 + $0x70] sm:$0xf] %vm2782, %v3964
        %4129 = vst.msk [vmem:[%s4099 + $0x74] sm:$0xf] %vm2782, %v3966
        %4130 = vst.msk [vmem:[%s4099 + $0x78] sm:$0xf] %vm2782, %v3968
        %4131 = vst.msk [vmem:[%s4099 + $0x7c] sm:$0xf] %vm2782, %v3970
        %4132 = vst.msk [vmem:[%s4099 + $0x80] sm:$0xf] %vm2782, %v3972
        %4133 = vst.msk [vmem:[%s4099 + $0x84] sm:$0xf] %vm2782, %v3974
        %4134 = vst.msk [vmem:[%s4099 + $0x88] sm:$0xf] %vm2782, %v3976
        %4135 = vst.msk [vmem:[%s4099 + $0x8c] sm:$0xf] %vm2782, %v3978
        %4136 = vst.msk [vmem:[%s4099 + $0x90] sm:$0xf] %vm2782, %v3980
        %4137 = vst.msk [vmem:[%s4099 + $0x94] sm:$0xf] %vm2782, %v3982
        %4138 = vst.msk [vmem:[%s4099 + $0x98] sm:$0xf] %vm2782, %v3984
        %4139 = vst.msk [vmem:[%s4099 + $0x9c] sm:$0xf] %vm2782, %v3986
        %4140 = vst.msk [vmem:[%s4099 + $0xa0] sm:$0xf] %vm2782, %v3988
        %4141 = vst.msk [vmem:[%s4099 + $0xa4] sm:$0xf] %vm2782, %v3990
        %4142 = vst.msk [vmem:[%s4099 + $0xa8] sm:$0xf] %vm2782, %v3992
        %4143 = vst.msk [vmem:[%s4099 + $0xac] sm:$0xf] %vm2782, %v3994
        %4144 = vst.msk [vmem:[%s4099 + $0xb0] sm:$0xf] %vm2782, %v3996
        %4145 = vst.msk [vmem:[%s4099 + $0xb4] sm:$0xf] %vm2782, %v3998
        %4146 = vst.msk [vmem:[%s4099 + $0xb8] sm:$0xf] %vm2782, %v4000
        %4147 = vst.msk [vmem:[%s4099 + $0xbc] sm:$0xf] %vm2782, %v4002
        %4148 = vst.msk [vmem:[%s4099 + $0xc0] sm:$0xf] %vm2782, %v4004
        %4149 = vst.msk [vmem:[%s4099 + $0xc4] sm:$0xf] %vm2782, %v4006
        %4150 = vst.msk [vmem:[%s4099 + $0xc8] sm:$0xf] %vm2782, %v4008
        %4151 = vst.msk [vmem:[%s4099 + $0xcc] sm:$0xf] %vm2782, %v4010
        %4152 = vst.msk [vmem:[%s4099 + $0xd0] sm:$0xf] %vm2782, %v4012
        %4153 = vst.msk [vmem:[%s4099 + $0xd4] sm:$0xf] %vm2782, %v4014
        %4154 = vst.msk [vmem:[%s4099 + $0xd8] sm:$0xf] %vm2782, %v4016
        %4155 = vst.msk [vmem:[%s4099 + $0xdc] sm:$0xf] %vm2782, %v4018
        %4156 = vst.msk [vmem:[%s4099 + $0xe0] sm:$0xf] %vm2782, %v4020
        %4157 = vst.msk [vmem:[%s4099 + $0xe4] sm:$0xf] %vm2782, %v4022
        %4158 = vst.msk [vmem:[%s4099 + $0xe8] sm:$0xf] %vm2782, %v4024
        %4159 = vst.msk [vmem:[%s4099 + $0xec] sm:$0xf] %vm2782, %v4026
        %4160 = vst.msk [vmem:[%s4099 + $0xf0] sm:$0xf] %vm2782, %v4028
        %4161 = vst.msk [vmem:[%s4099 + $0xf4] sm:$0xf] %vm2782, %v4030
        %4162 = vst.msk [vmem:[%s4099 + $0xf8] sm:$0xf] %vm2782, %v4032
        %4163 = vst.msk [vmem:[%s4099 + $0xfc] sm:$0xf] %vm2782, %v4034
        %4164 = vrot.lane.b32.xlu0 %v3714, 64
        %v4165 = vpop.permute.xlu0 %4164
        %4166 = vrot.lane.b32.xlu0 %v3715, 64
        %v4167 = vpop.permute.xlu0 %4166
        %4168 = vrot.lane.b32.xlu0 %v3716, 64
        %v4169 = vpop.permute.xlu0 %4168
        %4170 = vrot.lane.b32.xlu0 %v3717, 64
        %v4171 = vpop.permute.xlu0 %4170
        %4172 = vrot.lane.b32.xlu0 %v3718, 64
        %v4173 = vpop.permute.xlu0 %4172
        %4174 = vrot.lane.b32.xlu0 %v3719, 64
        %v4175 = vpop.permute.xlu0 %4174
        %4176 = vrot.lane.b32.xlu0 %v3720, 64
        %v4177 = vpop.permute.xlu0 %4176
        %4178 = vrot.lane.b32.xlu0 %v3721, 64
        %v4179 = vpop.permute.xlu0 %4178
        %4180 = vrot.lane.b32.xlu0 %v3722, 64
        %v4181 = vpop.permute.xlu0 %4180
        %4182 = vrot.lane.b32.xlu0 %v3723, 64
        %v4183 = vpop.permute.xlu0 %4182
        %4184 = vrot.lane.b32.xlu0 %v3724, 64
        %v4185 = vpop.permute.xlu0 %4184
        %4186 = vrot.lane.b32.xlu0 %v3725, 64
        %v4187 = vpop.permute.xlu0 %4186
        %4188 = vrot.lane.b32.xlu0 %v3726, 64
        %v4189 = vpop.permute.xlu0 %4188
        %4190 = vrot.lane.b32.xlu0 %v3727, 64
        %v4191 = vpop.permute.xlu0 %4190
        %4192 = vrot.lane.b32.xlu0 %v3728, 64
        %v4193 = vpop.permute.xlu0 %4192
        %4194 = vrot.lane.b32.xlu0 %v3729, 64
        %v4195 = vpop.permute.xlu0 %4194
        %4196 = vrot.lane.b32.xlu0 %v3730, 64
        %v4197 = vpop.permute.xlu0 %4196
        %4198 = vrot.lane.b32.xlu0 %v3731, 64
        %v4199 = vpop.permute.xlu0 %4198
        %4200 = vrot.lane.b32.xlu0 %v3732, 64
        %v4201 = vpop.permute.xlu0 %4200
        %4202 = vrot.lane.b32.xlu0 %v3733, 64
        %v4203 = vpop.permute.xlu0 %4202
        %4204 = vrot.lane.b32.xlu0 %v3734, 64
        %v4205 = vpop.permute.xlu0 %4204
        %4206 = vrot.lane.b32.xlu0 %v3735, 64
        %v4207 = vpop.permute.xlu0 %4206
        %4208 = vrot.lane.b32.xlu0 %v3736, 64
        %v4209 = vpop.permute.xlu0 %4208
        %4210 = vrot.lane.b32.xlu0 %v3737, 64
        %v4211 = vpop.permute.xlu0 %4210
        %4212 = vrot.lane.b32.xlu0 %v3738, 64
        %v4213 = vpop.permute.xlu0 %4212
        %4214 = vrot.lane.b32.xlu0 %v3739, 64
        %v4215 = vpop.permute.xlu0 %4214
        %4216 = vrot.lane.b32.xlu0 %v3740, 64
        %v4217 = vpop.permute.xlu0 %4216
        %4218 = vrot.lane.b32.xlu0 %v3741, 64
        %v4219 = vpop.permute.xlu0 %4218
        %4220 = vrot.lane.b32.xlu0 %v3742, 64
        %v4221 = vpop.permute.xlu0 %4220
        %4222 = vrot.lane.b32.xlu0 %v3743, 64
        %v4223 = vpop.permute.xlu0 %4222
        %4224 = vrot.lane.b32.xlu0 %v3744, 64
        %v4225 = vpop.permute.xlu0 %4224
        %4226 = vrot.lane.b32.xlu0 %v3745, 64
        %v4227 = vpop.permute.xlu0 %4226
        %4228 = vrot.lane.b32.xlu0 %v3746, 64
        %v4229 = vpop.permute.xlu0 %4228
        %4230 = vrot.lane.b32.xlu0 %v3747, 64
        %v4231 = vpop.permute.xlu0 %4230
        %4232 = vrot.lane.b32.xlu0 %v3748, 64
        %v4233 = vpop.permute.xlu0 %4232
        %4234 = vrot.lane.b32.xlu0 %v3749, 64
        %v4235 = vpop.permute.xlu0 %4234
        %4236 = vrot.lane.b32.xlu0 %v3750, 64
        %v4237 = vpop.permute.xlu0 %4236
        %4238 = vrot.lane.b32.xlu0 %v3751, 64
        %v4239 = vpop.permute.xlu0 %4238
        %4240 = vrot.lane.b32.xlu0 %v3752, 64
        %v4241 = vpop.permute.xlu0 %4240
        %4242 = vrot.lane.b32.xlu0 %v3753, 64
        %v4243 = vpop.permute.xlu0 %4242
        %4244 = vrot.lane.b32.xlu0 %v3754, 64
        %v4245 = vpop.permute.xlu0 %4244
        %4246 = vrot.lane.b32.xlu0 %v3755, 64
        %v4247 = vpop.permute.xlu0 %4246
        %4248 = vrot.lane.b32.xlu0 %v3756, 64
        %v4249 = vpop.permute.xlu0 %4248
        %4250 = vrot.lane.b32.xlu0 %v3757, 64
        %v4251 = vpop.permute.xlu0 %4250
        %4252 = vrot.lane.b32.xlu0 %v3758, 64
        %v4253 = vpop.permute.xlu0 %4252
        %4254 = vrot.lane.b32.xlu0 %v3759, 64
        %v4255 = vpop.permute.xlu0 %4254
        %4256 = vrot.lane.b32.xlu0 %v3760, 64
        %v4257 = vpop.permute.xlu0 %4256
        %4258 = vrot.lane.b32.xlu0 %v3761, 64
        %v4259 = vpop.permute.xlu0 %4258
        %4260 = vrot.lane.b32.xlu0 %v3762, 64
        %v4261 = vpop.permute.xlu0 %4260
        %4262 = vrot.lane.b32.xlu0 %v3763, 64
        %v4263 = vpop.permute.xlu0 %4262
        %4264 = vrot.lane.b32.xlu0 %v3764, 64
        %v4265 = vpop.permute.xlu0 %4264
        %4266 = vrot.lane.b32.xlu0 %v3765, 64
        %v4267 = vpop.permute.xlu0 %4266
        %4268 = vrot.lane.b32.xlu0 %v3766, 64
        %v4269 = vpop.permute.xlu0 %4268
        %4270 = vrot.lane.b32.xlu0 %v3767, 64
        %v4271 = vpop.permute.xlu0 %4270
        %4272 = vrot.lane.b32.xlu0 %v3768, 64
        %v4273 = vpop.permute.xlu0 %4272
        %4274 = vrot.lane.b32.xlu0 %v3769, 64
        %v4275 = vpop.permute.xlu0 %4274
        %4276 = vrot.lane.b32.xlu0 %v3770, 64
        %v4277 = vpop.permute.xlu0 %4276
        %4278 = vrot.lane.b32.xlu0 %v3771, 64
        %v4279 = vpop.permute.xlu0 %4278
        %4280 = vrot.lane.b32.xlu0 %v3772, 64
        %v4281 = vpop.permute.xlu0 %4280
        %4282 = vrot.lane.b32.xlu0 %v3773, 64
        %v4283 = vpop.permute.xlu0 %4282
        %4284 = vrot.lane.b32.xlu0 %v3774, 64
        %v4285 = vpop.permute.xlu0 %4284
        %4286 = vrot.lane.b32.xlu0 %v3775, 64
        %v4287 = vpop.permute.xlu0 %4286
        %4288 = vrot.lane.b32.xlu0 %v3776, 64
        %v4289 = vpop.permute.xlu0 %4288
        %4290 = vrot.lane.b32.xlu0 %v3777, 64
        %v4291 = vpop.permute.xlu0 %4290
        %s4356 = scalar_lea.vmem %s437, 1536
        %4357 = vst.msk [vmem:[%s4356] sm:$0xf] %vm2782, %v4165
        %4358 = vst.msk [vmem:[%s4356 + $0x4] sm:$0xf] %vm2782, %v4167
        %4359 = vst.msk [vmem:[%s4356 + $0x8] sm:$0xf] %vm2782, %v4169
        %4360 = vst.msk [vmem:[%s4356 + $0xc] sm:$0xf] %vm2782, %v4171
        %4361 = vst.msk [vmem:[%s4356 + $0x10] sm:$0xf] %vm2782, %v4173
        %4362 = vst.msk [vmem:[%s4356 + $0x14] sm:$0xf] %vm2782, %v4175
        %4363 = vst.msk [vmem:[%s4356 + $0x18] sm:$0xf] %vm2782, %v4177
        %4364 = vst.msk [vmem:[%s4356 + $0x1c] sm:$0xf] %vm2782, %v4179
        %4365 = vst.msk [vmem:[%s4356 + $0x20] sm:$0xf] %vm2782, %v4181
        %4366 = vst.msk [vmem:[%s4356 + $0x24] sm:$0xf] %vm2782, %v4183
        %4367 = vst.msk [vmem:[%s4356 + $0x28] sm:$0xf] %vm2782, %v4185
        %4368 = vst.msk [vmem:[%s4356 + $0x2c] sm:$0xf] %vm2782, %v4187
        %4369 = vst.msk [vmem:[%s4356 + $0x30] sm:$0xf] %vm2782, %v4189
        %4370 = vst.msk [vmem:[%s4356 + $0x34] sm:$0xf] %vm2782, %v4191
        %4371 = vst.msk [vmem:[%s4356 + $0x38] sm:$0xf] %vm2782, %v4193
        %4372 = vst.msk [vmem:[%s4356 + $0x3c] sm:$0xf] %vm2782, %v4195
        %4373 = vst.msk [vmem:[%s4356 + $0x40] sm:$0xf] %vm2782, %v4197
        %4374 = vst.msk [vmem:[%s4356 + $0x44] sm:$0xf] %vm2782, %v4199
        %4375 = vst.msk [vmem:[%s4356 + $0x48] sm:$0xf] %vm2782, %v4201
        %4376 = vst.msk [vmem:[%s4356 + $0x4c] sm:$0xf] %vm2782, %v4203
        %4377 = vst.msk [vmem:[%s4356 + $0x50] sm:$0xf] %vm2782, %v4205
        %4378 = vst.msk [vmem:[%s4356 + $0x54] sm:$0xf] %vm2782, %v4207
        %4379 = vst.msk [vmem:[%s4356 + $0x58] sm:$0xf] %vm2782, %v4209
        %4380 = vst.msk [vmem:[%s4356 + $0x5c] sm:$0xf] %vm2782, %v4211
        %4381 = vst.msk [vmem:[%s4356 + $0x60] sm:$0xf] %vm2782, %v4213
        %4382 = vst.msk [vmem:[%s4356 + $0x64] sm:$0xf] %vm2782, %v4215
        %4383 = vst.msk [vmem:[%s4356 + $0x68] sm:$0xf] %vm2782, %v4217
        %4384 = vst.msk [vmem:[%s4356 + $0x6c] sm:$0xf] %vm2782, %v4219
        %4385 = vst.msk [vmem:[%s4356 + $0x70] sm:$0xf] %vm2782, %v4221
        %4386 = vst.msk [vmem:[%s4356 + $0x74] sm:$0xf] %vm2782, %v4223
        %4387 = vst.msk [vmem:[%s4356 + $0x78] sm:$0xf] %vm2782, %v4225
        %4388 = vst.msk [vmem:[%s4356 + $0x7c] sm:$0xf] %vm2782, %v4227
        %4389 = vst.msk [vmem:[%s4356 + $0x80] sm:$0xf] %vm2782, %v4229
        %4390 = vst.msk [vmem:[%s4356 + $0x84] sm:$0xf] %vm2782, %v4231
        %4391 = vst.msk [vmem:[%s4356 + $0x88] sm:$0xf] %vm2782, %v4233
        %4392 = vst.msk [vmem:[%s4356 + $0x8c] sm:$0xf] %vm2782, %v4235
        %4393 = vst.msk [vmem:[%s4356 + $0x90] sm:$0xf] %vm2782, %v4237
        %4394 = vst.msk [vmem:[%s4356 + $0x94] sm:$0xf] %vm2782, %v4239
        %4395 = vst.msk [vmem:[%s4356 + $0x98] sm:$0xf] %vm2782, %v4241
        %4396 = vst.msk [vmem:[%s4356 + $0x9c] sm:$0xf] %vm2782, %v4243
        %4397 = vst.msk [vmem:[%s4356 + $0xa0] sm:$0xf] %vm2782, %v4245
        %4398 = vst.msk [vmem:[%s4356 + $0xa4] sm:$0xf] %vm2782, %v4247
        %4399 = vst.msk [vmem:[%s4356 + $0xa8] sm:$0xf] %vm2782, %v4249
        %4400 = vst.msk [vmem:[%s4356 + $0xac] sm:$0xf] %vm2782, %v4251
        %4401 = vst.msk [vmem:[%s4356 + $0xb0] sm:$0xf] %vm2782, %v4253
        %4402 = vst.msk [vmem:[%s4356 + $0xb4] sm:$0xf] %vm2782, %v4255
        %4403 = vst.msk [vmem:[%s4356 + $0xb8] sm:$0xf] %vm2782, %v4257
        %4404 = vst.msk [vmem:[%s4356 + $0xbc] sm:$0xf] %vm2782, %v4259
        %4405 = vst.msk [vmem:[%s4356 + $0xc0] sm:$0xf] %vm2782, %v4261
        %4406 = vst.msk [vmem:[%s4356 + $0xc4] sm:$0xf] %vm2782, %v4263
        %4407 = vst.msk [vmem:[%s4356 + $0xc8] sm:$0xf] %vm2782, %v4265
        %4408 = vst.msk [vmem:[%s4356 + $0xcc] sm:$0xf] %vm2782, %v4267
        %4409 = vst.msk [vmem:[%s4356 + $0xd0] sm:$0xf] %vm2782, %v4269
        %4410 = vst.msk [vmem:[%s4356 + $0xd4] sm:$0xf] %vm2782, %v4271
        %4411 = vst.msk [vmem:[%s4356 + $0xd8] sm:$0xf] %vm2782, %v4273
        %4412 = vst.msk [vmem:[%s4356 + $0xdc] sm:$0xf] %vm2782, %v4275
        %4413 = vst.msk [vmem:[%s4356 + $0xe0] sm:$0xf] %vm2782, %v4277
        %4414 = vst.msk [vmem:[%s4356 + $0xe4] sm:$0xf] %vm2782, %v4279
        %4415 = vst.msk [vmem:[%s4356 + $0xe8] sm:$0xf] %vm2782, %v4281
        %4416 = vst.msk [vmem:[%s4356 + $0xec] sm:$0xf] %vm2782, %v4283
        %4417 = vst.msk [vmem:[%s4356 + $0xf0] sm:$0xf] %vm2782, %v4285
        %4418 = vst.msk [vmem:[%s4356 + $0xf4] sm:$0xf] %vm2782, %v4287
        %4419 = vst.msk [vmem:[%s4356 + $0xf8] sm:$0xf] %vm2782, %v4289
        %4420 = vst.msk [vmem:[%s4356 + $0xfc] sm:$0xf] %vm2782, %v4291
        %4421 = vrot.lane.b32.xlu0 %v3714, 32
        %v4422 = vpop.permute.xlu0 %4421
        %4423 = vrot.lane.b32.xlu0 %v3715, 32
        %v4424 = vpop.permute.xlu0 %4423
        %4425 = vrot.lane.b32.xlu0 %v3716, 32
        %v4426 = vpop.permute.xlu0 %4425
        %4427 = vrot.lane.b32.xlu0 %v3717, 32
        %v4428 = vpop.permute.xlu0 %4427
        %4429 = vrot.lane.b32.xlu0 %v3718, 32
        %v4430 = vpop.permute.xlu0 %4429
        %4431 = vrot.lane.b32.xlu0 %v3719, 32
        %v4432 = vpop.permute.xlu0 %4431
        %4433 = vrot.lane.b32.xlu0 %v3720, 32
        %v4434 = vpop.permute.xlu0 %4433
        %4435 = vrot.lane.b32.xlu0 %v3721, 32
        %v4436 = vpop.permute.xlu0 %4435
        %4437 = vrot.lane.b32.xlu0 %v3722, 32
        %v4438 = vpop.permute.xlu0 %4437
        %4439 = vrot.lane.b32.xlu0 %v3723, 32
        %v4440 = vpop.permute.xlu0 %4439
        %4441 = vrot.lane.b32.xlu0 %v3724, 32
        %v4442 = vpop.permute.xlu0 %4441
        %4443 = vrot.lane.b32.xlu0 %v3725, 32
        %v4444 = vpop.permute.xlu0 %4443
        %4445 = vrot.lane.b32.xlu0 %v3726, 32
        %v4446 = vpop.permute.xlu0 %4445
        %4447 = vrot.lane.b32.xlu0 %v3727, 32
        %v4448 = vpop.permute.xlu0 %4447
        %4449 = vrot.lane.b32.xlu0 %v3728, 32
        %v4450 = vpop.permute.xlu0 %4449
        %4451 = vrot.lane.b32.xlu0 %v3729, 32
        %v4452 = vpop.permute.xlu0 %4451
        %4453 = vrot.lane.b32.xlu0 %v3730, 32
        %v4454 = vpop.permute.xlu0 %4453
        %4455 = vrot.lane.b32.xlu0 %v3731, 32
        %v4456 = vpop.permute.xlu0 %4455
        %4457 = vrot.lane.b32.xlu0 %v3732, 32
        %v4458 = vpop.permute.xlu0 %4457
        %4459 = vrot.lane.b32.xlu0 %v3733, 32
        %v4460 = vpop.permute.xlu0 %4459
        %4461 = vrot.lane.b32.xlu0 %v3734, 32
        %v4462 = vpop.permute.xlu0 %4461
        %4463 = vrot.lane.b32.xlu0 %v3735, 32
        %v4464 = vpop.permute.xlu0 %4463
        %4465 = vrot.lane.b32.xlu0 %v3736, 32
        %v4466 = vpop.permute.xlu0 %4465
        %4467 = vrot.lane.b32.xlu0 %v3737, 32
        %v4468 = vpop.permute.xlu0 %4467
        %4469 = vrot.lane.b32.xlu0 %v3738, 32
        %v4470 = vpop.permute.xlu0 %4469
        %4471 = vrot.lane.b32.xlu0 %v3739, 32
        %v4472 = vpop.permute.xlu0 %4471
        %4473 = vrot.lane.b32.xlu0 %v3740, 32
        %v4474 = vpop.permute.xlu0 %4473
        %4475 = vrot.lane.b32.xlu0 %v3741, 32
        %v4476 = vpop.permute.xlu0 %4475
        %4477 = vrot.lane.b32.xlu0 %v3742, 32
        %v4478 = vpop.permute.xlu0 %4477
        %4479 = vrot.lane.b32.xlu0 %v3743, 32
        %v4480 = vpop.permute.xlu0 %4479
        %4481 = vrot.lane.b32.xlu0 %v3744, 32
        %v4482 = vpop.permute.xlu0 %4481
        %4483 = vrot.lane.b32.xlu0 %v3745, 32
        %v4484 = vpop.permute.xlu0 %4483
        %4485 = vrot.lane.b32.xlu0 %v3746, 32
        %v4486 = vpop.permute.xlu0 %4485
        %4487 = vrot.lane.b32.xlu0 %v3747, 32
        %v4488 = vpop.permute.xlu0 %4487
        %4489 = vrot.lane.b32.xlu0 %v3748, 32
        %v4490 = vpop.permute.xlu0 %4489
        %4491 = vrot.lane.b32.xlu0 %v3749, 32
        %v4492 = vpop.permute.xlu0 %4491
        %4493 = vrot.lane.b32.xlu0 %v3750, 32
        %v4494 = vpop.permute.xlu0 %4493
        %4495 = vrot.lane.b32.xlu0 %v3751, 32
        %v4496 = vpop.permute.xlu0 %4495
        %4497 = vrot.lane.b32.xlu0 %v3752, 32
        %v4498 = vpop.permute.xlu0 %4497
        %4499 = vrot.lane.b32.xlu0 %v3753, 32
        %v4500 = vpop.permute.xlu0 %4499
        %4501 = vrot.lane.b32.xlu0 %v3754, 32
        %v4502 = vpop.permute.xlu0 %4501
        %4503 = vrot.lane.b32.xlu0 %v3755, 32
        %v4504 = vpop.permute.xlu0 %4503
        %4505 = vrot.lane.b32.xlu0 %v3756, 32
        %v4506 = vpop.permute.xlu0 %4505
        %4507 = vrot.lane.b32.xlu0 %v3757, 32
        %v4508 = vpop.permute.xlu0 %4507
        %4509 = vrot.lane.b32.xlu0 %v3758, 32
        %v4510 = vpop.permute.xlu0 %4509
        %4511 = vrot.lane.b32.xlu0 %v3759, 32
        %v4512 = vpop.permute.xlu0 %4511
        %4513 = vrot.lane.b32.xlu0 %v3760, 32
        %v4514 = vpop.permute.xlu0 %4513
        %4515 = vrot.lane.b32.xlu0 %v3761, 32
        %v4516 = vpop.permute.xlu0 %4515
        %4517 = vrot.lane.b32.xlu0 %v3762, 32
        %v4518 = vpop.permute.xlu0 %4517
        %4519 = vrot.lane.b32.xlu0 %v3763, 32
        %v4520 = vpop.permute.xlu0 %4519
        %4521 = vrot.lane.b32.xlu0 %v3764, 32
        %v4522 = vpop.permute.xlu0 %4521
        %4523 = vrot.lane.b32.xlu0 %v3765, 32
        %v4524 = vpop.permute.xlu0 %4523
        %4525 = vrot.lane.b32.xlu0 %v3766, 32
        %v4526 = vpop.permute.xlu0 %4525
        %4527 = vrot.lane.b32.xlu0 %v3767, 32
        %v4528 = vpop.permute.xlu0 %4527
        %4529 = vrot.lane.b32.xlu0 %v3768, 32
        %v4530 = vpop.permute.xlu0 %4529
        %4531 = vrot.lane.b32.xlu0 %v3769, 32
        %v4532 = vpop.permute.xlu0 %4531
        %4533 = vrot.lane.b32.xlu0 %v3770, 32
        %v4534 = vpop.permute.xlu0 %4533
        %4535 = vrot.lane.b32.xlu0 %v3771, 32
        %v4536 = vpop.permute.xlu0 %4535
        %4537 = vrot.lane.b32.xlu0 %v3772, 32
        %v4538 = vpop.permute.xlu0 %4537
        %4539 = vrot.lane.b32.xlu0 %v3773, 32
        %v4540 = vpop.permute.xlu0 %4539
        %4541 = vrot.lane.b32.xlu0 %v3774, 32
        %v4542 = vpop.permute.xlu0 %4541
        %4543 = vrot.lane.b32.xlu0 %v3775, 32
        %v4544 = vpop.permute.xlu0 %4543
        %4545 = vrot.lane.b32.xlu0 %v3776, 32
        %v4546 = vpop.permute.xlu0 %4545
        %4547 = vrot.lane.b32.xlu0 %v3777, 32
        %v4548 = vpop.permute.xlu0 %4547
        %s4613 = scalar_lea.vmem %s437, 1792
        %4614 = vst.msk [vmem:[%s4613] sm:$0xf] %vm2782, %v4422
        %4615 = vst.msk [vmem:[%s4613 + $0x4] sm:$0xf] %vm2782, %v4424
        %4616 = vst.msk [vmem:[%s4613 + $0x8] sm:$0xf] %vm2782, %v4426
        %4617 = vst.msk [vmem:[%s4613 + $0xc] sm:$0xf] %vm2782, %v4428
        %4618 = vst.msk [vmem:[%s4613 + $0x10] sm:$0xf] %vm2782, %v4430
        %4619 = vst.msk [vmem:[%s4613 + $0x14] sm:$0xf] %vm2782, %v4432
        %4620 = vst.msk [vmem:[%s4613 + $0x18] sm:$0xf] %vm2782, %v4434
        %4621 = vst.msk [vmem:[%s4613 + $0x1c] sm:$0xf] %vm2782, %v4436
        %4622 = vst.msk [vmem:[%s4613 + $0x20] sm:$0xf] %vm2782, %v4438
        %4623 = vst.msk [vmem:[%s4613 + $0x24] sm:$0xf] %vm2782, %v4440
        %4624 = vst.msk [vmem:[%s4613 + $0x28] sm:$0xf] %vm2782, %v4442
        %4625 = vst.msk [vmem:[%s4613 + $0x2c] sm:$0xf] %vm2782, %v4444
        %4626 = vst.msk [vmem:[%s4613 + $0x30] sm:$0xf] %vm2782, %v4446
        %4627 = vst.msk [vmem:[%s4613 + $0x34] sm:$0xf] %vm2782, %v4448
        %4628 = vst.msk [vmem:[%s4613 + $0x38] sm:$0xf] %vm2782, %v4450
        %4629 = vst.msk [vmem:[%s4613 + $0x3c] sm:$0xf] %vm2782, %v4452
        %4630 = vst.msk [vmem:[%s4613 + $0x40] sm:$0xf] %vm2782, %v4454
        %4631 = vst.msk [vmem:[%s4613 + $0x44] sm:$0xf] %vm2782, %v4456
        %4632 = vst.msk [vmem:[%s4613 + $0x48] sm:$0xf] %vm2782, %v4458
        %4633 = vst.msk [vmem:[%s4613 + $0x4c] sm:$0xf] %vm2782, %v4460
        %4634 = vst.msk [vmem:[%s4613 + $0x50] sm:$0xf] %vm2782, %v4462
        %4635 = vst.msk [vmem:[%s4613 + $0x54] sm:$0xf] %vm2782, %v4464
        %4636 = vst.msk [vmem:[%s4613 + $0x58] sm:$0xf] %vm2782, %v4466
        %4637 = vst.msk [vmem:[%s4613 + $0x5c] sm:$0xf] %vm2782, %v4468
        %4638 = vst.msk [vmem:[%s4613 + $0x60] sm:$0xf] %vm2782, %v4470
        %4639 = vst.msk [vmem:[%s4613 + $0x64] sm:$0xf] %vm2782, %v4472
        %4640 = vst.msk [vmem:[%s4613 + $0x68] sm:$0xf] %vm2782, %v4474
        %4641 = vst.msk [vmem:[%s4613 + $0x6c] sm:$0xf] %vm2782, %v4476
        %4642 = vst.msk [vmem:[%s4613 + $0x70] sm:$0xf] %vm2782, %v4478
        %4643 = vst.msk [vmem:[%s4613 + $0x74] sm:$0xf] %vm2782, %v4480
        %4644 = vst.msk [vmem:[%s4613 + $0x78] sm:$0xf] %vm2782, %v4482
        %4645 = vst.msk [vmem:[%s4613 + $0x7c] sm:$0xf] %vm2782, %v4484
        %4646 = vst.msk [vmem:[%s4613 + $0x80] sm:$0xf] %vm2782, %v4486
        %4647 = vst.msk [vmem:[%s4613 + $0x84] sm:$0xf] %vm2782, %v4488
        %4648 = vst.msk [vmem:[%s4613 + $0x88] sm:$0xf] %vm2782, %v4490
        %4649 = vst.msk [vmem:[%s4613 + $0x8c] sm:$0xf] %vm2782, %v4492
        %4650 = vst.msk [vmem:[%s4613 + $0x90] sm:$0xf] %vm2782, %v4494
        %4651 = vst.msk [vmem:[%s4613 + $0x94] sm:$0xf] %vm2782, %v4496
        %4652 = vst.msk [vmem:[%s4613 + $0x98] sm:$0xf] %vm2782, %v4498
        %4653 = vst.msk [vmem:[%s4613 + $0x9c] sm:$0xf] %vm2782, %v4500
        %4654 = vst.msk [vmem:[%s4613 + $0xa0] sm:$0xf] %vm2782, %v4502
        %4655 = vst.msk [vmem:[%s4613 + $0xa4] sm:$0xf] %vm2782, %v4504
        %4656 = vst.msk [vmem:[%s4613 + $0xa8] sm:$0xf] %vm2782, %v4506
        %4657 = vst.msk [vmem:[%s4613 + $0xac] sm:$0xf] %vm2782, %v4508
        %4658 = vst.msk [vmem:[%s4613 + $0xb0] sm:$0xf] %vm2782, %v4510
        %4659 = vst.msk [vmem:[%s4613 + $0xb4] sm:$0xf] %vm2782, %v4512
        %4660 = vst.msk [vmem:[%s4613 + $0xb8] sm:$0xf] %vm2782, %v4514
        %4661 = vst.msk [vmem:[%s4613 + $0xbc] sm:$0xf] %vm2782, %v4516
        %4662 = vst.msk [vmem:[%s4613 + $0xc0] sm:$0xf] %vm2782, %v4518
        %4663 = vst.msk [vmem:[%s4613 + $0xc4] sm:$0xf] %vm2782, %v4520
        %4664 = vst.msk [vmem:[%s4613 + $0xc8] sm:$0xf] %vm2782, %v4522
        %4665 = vst.msk [vmem:[%s4613 + $0xcc] sm:$0xf] %vm2782, %v4524
        %4666 = vst.msk [vmem:[%s4613 + $0xd0] sm:$0xf] %vm2782, %v4526
        %4667 = vst.msk [vmem:[%s4613 + $0xd4] sm:$0xf] %vm2782, %v4528
        %4668 = vst.msk [vmem:[%s4613 + $0xd8] sm:$0xf] %vm2782, %v4530
        %4669 = vst.msk [vmem:[%s4613 + $0xdc] sm:$0xf] %vm2782, %v4532
        %4670 = vst.msk [vmem:[%s4613 + $0xe0] sm:$0xf] %vm2782, %v4534
        %4671 = vst.msk [vmem:[%s4613 + $0xe4] sm:$0xf] %vm2782, %v4536
        %4672 = vst.msk [vmem:[%s4613 + $0xe8] sm:$0xf] %vm2782, %v4538
        %4673 = vst.msk [vmem:[%s4613 + $0xec] sm:$0xf] %vm2782, %v4540
        %4674 = vst.msk [vmem:[%s4613 + $0xf0] sm:$0xf] %vm2782, %v4542
        %4675 = vst.msk [vmem:[%s4613 + $0xf4] sm:$0xf] %vm2782, %v4544
        %4676 = vst.msk [vmem:[%s4613 + $0xf8] sm:$0xf] %vm2782, %v4546
        %4677 = vst.msk [vmem:[%s4613 + $0xfc] sm:$0xf] %vm2782, %v4548
        %s4678 = sand.u32 %s249, 1
        %s4679 = scalar_lea.sflag [#allocation5], %s4678
        %s4680 = sand.u32 %s249, 1
        %s4681 = smul.addr %s4680, 2
        %s4682 = scalar_lea.vmem [#allocation8], %s4681
        %s4683 = smul.u32 8, %s36
        %p4684 = scmp.lt.s32.totalorder %s35, 1
        %s4685 = scalar_select %p4684, %s35, 1
        %p4686 = scmp.lt.s32.totalorder %s4683, 7
        %s4687 = scalar_select %p4686, %s4683, 7
        %s4688 = smul.addr %s4687, 64
        %s4689 = smul.addr %s4685, 512
        %s4690 = sadd.s32 %s4688, %s4689
        %s4691 = smul.addr %s4690, 4
        %s4692 = scalar_lea.vmem %s10, %s4691
        // Predicated region
        $region65: #{tpu_custom_call.1} parent=55 // pred_check
          %p4693 = pneg %p259
        $region66: #{tpu_custom_call.1} parent=55 // pred_check_branch
          %4695 = sbr.rel (%p4693) target = $region68
        $region67: #{tpu_custom_call.1} parent=55 // pred_region
          %s4696 = smul.u32 2, %s36
          %s4698 = ssub.s32 32, 32
          %4699 = vsyncadd %s4679, %s4698
          %s4700 = smul.addr %s35, 2
          %s4701 = sadd.s32 %s4696, %s4700
          %s4702 = smul.addr %s4701, 16
          %s4703 = scalar_lea.hbm %s9, %s4702
          %s4705 = sshll.u32 %s4682, 4
          %s4706 = int_to_ptr.vmem [resolvable:$true] %s4705
          %4708 = dma.vmem_to_hbm [thread:$0]  %s4706, 32, %s4703, %s4679
        $region68: #{tpu_custom_call.1} parent=55 // pred_fallthru
          _
        // Predicated region
        $region69: #{tpu_custom_call.1} parent=55 // pred_check
          %p4709 = pneg %p287
        $region70: #{tpu_custom_call.1} parent=55 // pred_check_branch
          %4711 = sbr.rel (%p4709) target = $region72
        $region71: #{tpu_custom_call.1} parent=55 // pred_region
          %s4712 = smul.u32 8, %s36
        $region72: #{tpu_custom_call.1} parent=55 // pred_fallthru
          _
      $region56: #{tpu_custom_call.1} parent=5 // pred_fallthru
        _
      %p4713 = scmp.le.s32.totalorder 2, %s26
      // Predicated region
      $region73: #{tpu_custom_call.1} parent=5 // pred_check
        %p4714 = pneg %p4713
      $region74: #{tpu_custom_call.1} parent=5 // pred_check_branch
        %4716 = sbr.rel (%p4714) target = $region76
      $region75: #{tpu_custom_call.1} parent=5 // pred_region
        %s4717 = ssub.s32 %s26, 2
        // Predicated region
        $region77: #{tpu_custom_call.1} parent=75 // pred_check
          %p4718 = pneg %p265
        $region78: #{tpu_custom_call.1} parent=75 // pred_check_branch
          %4720 = sbr.rel (%p4718) target = $region80
        $region79: #{tpu_custom_call.1} parent=75 // pred_region
          %s4721 = sand.u32 %s250, 1
          %s4722 = scalar_lea.sflag [#allocation5], %s4721
          %s4723 = sand.u32 %s250, 1
          %s4724 = smul.addr %s4723, 2
          %s4725 = scalar_lea.vmem [#allocation8], %s4724
          %4726 = dma.done %s4722, 32
        $region80: #{tpu_custom_call.1} parent=75 // pred_fallthru
          _
        // Predicated region
        $region81: #{tpu_custom_call.1} parent=75 // pred_check
          %p4727 = pneg %p293
        $region82: #{tpu_custom_call.1} parent=75 // pred_check_branch
          %4729 = sbr.rel (%p4727) target = $region84
        $region83: #{tpu_custom_call.1} parent=75 // pred_region
          %s4730 = smul.u32 8, %s38
          %p4731 = scmp.lt.s32.totalorder %s37, 1
          %s4732 = scalar_select %p4731, %s37, 1
          %p4733 = scmp.lt.s32.totalorder %s4730, 7
          %s4734 = scalar_select %p4733, %s4730, 7
          %s4735 = smul.addr %s4734, 64
          %s4736 = smul.addr %s4732, 512
          %s4737 = sadd.s32 %s4735, %s4736
          %s4738 = smul.addr %s4737, 4
          %s4739 = scalar_lea.vmem %s10, %s4738
        $region84: #{tpu_custom_call.1} parent=75 // pred_fallthru
          _
      $region76: #{tpu_custom_call.1} parent=5 // pred_fallthru
        _
    $region6: #{tpu_custom_call.1} parent=1 // loop_footer
      %s30 = sadd.s32 1, %s26
    $region7: #{tpu_custom_call.1} parent=1 // loop_footer_branch
      %25 = sbr.rel target = $region3
    $region8: #{tpu_custom_call.1} parent=1 // loop_exit
      _
    %4740 = vsyncpa [#allocation4], 1
    %s4741 = scalar_lea.sflag [#allocation4], 1
    %4742 = vsyncpa %s4741, 1
    %4743 = vsyncpa [#allocation7], 1
    %4744 = vsyncpa [#allocation5], 1
    %s4745 = scalar_lea.sflag [#allocation5], 1
    %4746 = vsyncpa %s4745, 1

</llo_original>
